<compile_context>
chip_gen: v7x
topology: tpu7x:2x2x1
jax: 0.10.0
libtpu: 0.0.40
codegen_flags: <defaults>
</compile_context>

<pallas_src>
import functools

import jax
import jax.numpy as jnp
from jax.experimental import pallas as pl
from jax.experimental.pallas import tpu as pltpu


# ---------------------------------------------------------------------------
# Kernel
# ---------------------------------------------------------------------------
def _disc_kernel(num_layers, num_nodes, tb,
                 inp_ref, a_ref,
                 win_ref, bin_ref,
                 wc_ref, bc_ref,
                 h1w_ref, h1b_ref, h2w_ref, h2b_ref,
                 out_ref):
    J = num_nodes
    R = J * tb                      # rows per grid step (node-major: row = j*tb + t)
    H2 = win_ref.shape[1]           # 2*H lanes: [joint(H) | bone(H)]

    # fused joint|bone input features (bf16), flattened to (R, 2D) -- leading-dim merge only.
    x_in = inp_ref[...].reshape(R, inp_ref.shape[-1])
    a = a_ref[...]                                            # (R, R) bf16 = kron(A_norm, I_tb)

    # fused joint/bone input Linear layers (block-diagonal weight).
    x = jnp.dot(x_in, win_ref[...],
                preferred_element_type=jnp.float32) + bin_ref[...]        # (R, 2H) f32

    def conv(v, l):
        # fused GraphSAGE conv for both branches: [v | A@v] @ W_fused + b
        agg = jnp.dot(a, v.astype(jnp.bfloat16),
                      preferred_element_type=jnp.float32)                 # (R, 2H)
        va = jnp.concatenate([v, agg], axis=-1).astype(jnp.bfloat16)      # (R, 4H)
        return jnp.dot(va, wc_ref[l],
                       preferred_element_type=jnp.float32) + bc_ref[l:l + 1, :]

    # residual GCN stack (joint + bone branches run fused).
    for l in range(num_layers):
        h = jax.nn.relu(conv(x, 2 * l))
        h = conv(h, 2 * l + 1)
        x = jax.nn.relu(x + h)
    x = conv(x, 2 * num_layers)                                           # (R, 2O) f32

    # FFNHeader layer 1 (J*2*O -> 512) as ONE batched contraction over nodes:
    #   out1[t, f] = sum_{j,c} x[j*tb + t, c] * h1w[j, c, f]
    xr = x.astype(jnp.bfloat16).reshape(J, tb, H2)            # leading-dim split (tb = sublane tile)
    p = jax.lax.dot_general(
        xr, h1w_ref[...],
        dimension_numbers=(((2,), (1,)), ((0,), (0,))),
        preferred_element_type=jnp.float32)                   # (J, tb, 512)
    h1 = jnp.sum(p, axis=0) + h1b_ref[...]                    # (tb, 512)
    h1 = jax.nn.relu(h1)                                      # Dropout: identity (eval)

    # FFNHeader layer 2 (512 -> 1): elementwise mul + lane reduce (keeps everything 2-D).
    logit = jnp.sum(h1 * h2w_ref[...], axis=-1, keepdims=True) + h2b_ref[...]   # (tb, 1)
    out_ref[0] = logit


# ---------------------------------------------------------------------------
# Wrapper (glue: bone vectors, kron adjacency, fused weights, BlockSpecs)
# ---------------------------------------------------------------------------
def gcn_discriminator_decouple(keypoints, params, parent_ids, child_ids, cfg, tb=8):
    B, J, D = keypoints.shape
    H = cfg['hidden_dim']
    O = cfg['output_dim']
    L = cfg['num_layers']
    C = 2 * L + 1
    FH = 512
    assert tb % 8 == 0, "tb must be a multiple of the 8-row sublane tile"
    assert H == O, "fused lane layout assumes hidden_dim == output_dim"

    # bone vectors: parent - child, zero vector prepended (root "bone")
    bone = keypoints[:, parent_ids, :] - keypoints[:, child_ids, :]
    bone = jnp.concatenate([jnp.zeros((B, 1, D), keypoints.dtype), bone], axis=1)

    # pad batch to a multiple of tb (padded rows computed then discarded)
    G = -(-B // tb)
    Bp = G * tb
    if Bp != B:
        pad = ((0, Bp - B), (0, 0), (0, 0))
        keypoints_p = jnp.pad(keypoints, pad)
        bone_p = jnp.pad(bone, pad)
    else:
        keypoints_p, bone_p = keypoints, bone

    # node-major layout (J, Bp, ...) with joint|bone fused on lanes -> (J, Bp, 2D), bf16.
    inp = jnp.concatenate([jnp.transpose(keypoints_p, (1, 0, 2)),
                           jnp.transpose(bone_p, (1, 0, 2))], axis=-1).astype(jnp.bfloat16)

    # dense adjacency (identical for every batch element), row-normalized (mean aggregation)
    adj = jnp.zeros((J, J), jnp.float32)
    if cfg['use_self_loop']:
        adj = adj + jnp.eye(J, dtype=jnp.float32)
    adj = adj.at[parent_ids, child_ids].set(1.0)
    adj = adj.at[child_ids, parent_ids].set(1.0)
    a_norm = adj / jnp.maximum(jnp.sum(adj, axis=1, keepdims=True), 1.0)
    # node-major aggregation for a tb-batch: kron(A_norm, I_tb)  -> (J*tb, J*tb)
    a_kron = jnp.kron(a_norm, jnp.eye(tb, dtype=jnp.float32)).astype(jnp.bfloat16)

    # fused (block-diagonal) input-layer weight: [kp | bone] -> [joint(H) | bone(H)]
    w_in = jnp.zeros((2 * D, 2 * H), jnp.float32)
    w_in = w_in.at[:D, :H].set(params['jin_w']).at[D:, H:].set(params['bin_w'])
    b_in = jnp.concatenate([params['jin_b'], params['bin_b']], axis=-1)        # (1, 2H)

    # fused SAGE conv weights: rows [x_j | x_b | agg_j | agg_b] -> cols [joint | bone]
    w_conv = jnp.zeros((C, 4 * H, 2 * H), jnp.float32)
    w_conv = w_conv.at[:, 0:H, 0:H].set(params['jws'])
    w_conv = w_conv.at[:, H:2 * H, H:2 * H].set(params['bws'])
    w_conv = w_conv.at[:, 2 * H:3 * H, 0:H].set(params['jwn'])
    w_conv = w_conv.at[:, 3 * H:4 * H, H:2 * H].set(params['bwn'])
    b_conv = jnp.concatenate([params['jb'], params['bb']], axis=-1)            # (C, 2H)

    # header L1 weight per node (torch flatten order: per node joint(O) then bone(O))
    h1w = params['h1_w'].reshape(J, 2 * O, FH).astype(jnp.bfloat16)
    h2w_row = params['h2_w'].reshape(1, FH)                                    # (1, 512) f32

    kernel = functools.partial(_disc_kernel, L, J, tb)
    c2 = lambda g: (0, 0)
    c3 = lambda g: (0, 0, 0)

    out = pl.pallas_call(
        kernel,
        out_shape=jax.ShapeDtypeStruct((G, tb, 1), jnp.float32),
        grid_spec=pltpu.PrefetchScalarGridSpec(
            num_scalar_prefetch=0,
            grid=(G,),
            in_specs=[
                pl.BlockSpec((J, tb, 2 * D), lambda g: (0, g, 0)),   # fused kp|bone features
                pl.BlockSpec((J * tb, J * tb), c2),                  # kron(A_norm, I_tb)
                pl.BlockSpec((2 * D, 2 * H), c2),                    # fused input W
                pl.BlockSpec((1, 2 * H), c2),                        # fused input b
                pl.BlockSpec((C, 4 * H, 2 * H), c3),                 # fused conv W (stacked)
                pl.BlockSpec((C, 2 * H), c2),                        # fused conv b
                pl.BlockSpec((J, 2 * O, FH), c3),                    # header L1 W per node
                pl.BlockSpec((1, FH), c2),                           # header L1 b
                pl.BlockSpec((1, FH), c2),                           # header L2 W (row)
                pl.BlockSpec((1, 1), c2),                            # header L2 b
            ],
            out_specs=pl.BlockSpec((1, tb, 1), lambda g: (g, 0, 0)),
        ),
        compiler_params=pltpu.CompilerParams(
            dimension_semantics=("parallel",)),                      # megacore-shardable on v7x
    )(inp, a_kron,
      w_in.astype(jnp.bfloat16), b_in,
      w_conv.astype(jnp.bfloat16), b_conv,
      h1w, params['h1_b'], h2w_row, params['h2_b'])

    return out.reshape(Bp, 1)[:B]


# ---------------------------------------------------------------------------
# Deterministic synthetic parameters
# ---------------------------------------------------------------------------
def init_params(key, cfg):
    D = cfg['disc_sup_dim']
    H = cfg['hidden_dim']
    O = cfg['output_dim']
    J = cfg['num_node']
    L = cfg['num_layers']
    C = 2 * L + 1
    keys = jax.random.split(key, 14)
    s = 0.1
    n = lambda k, shape: s * jax.random.normal(k, shape, jnp.float32)
    return {
        'jin_w': n(keys[0], (D, H)), 'jin_b': n(keys[1], (1, H)),
        'bin_w': n(keys[2], (D, H)), 'bin_b': n(keys[3], (1, H)),
        'jws': n(keys[4], (C, H, H)), 'jwn': n(keys[5], (C, H, H)), 'jb': n(keys[6], (C, H)),
        'bws': n(keys[7], (C, H, H)), 'bwn': n(keys[8], (C, H, H)), 'bb': n(keys[9], (C, H)),
        'h1_w': n(keys[10], (O * J * 2, 512)), 'h1_b': n(keys[11], (1, 512)),
        'h2_w': n(keys[12], (512, 1)), 'h2_b': n(keys[13], (1, 1)),
    }


# ---------------------------------------------------------------------------
# Pure-JAX f32 reference (unfused math) for validation
# ---------------------------------------------------------------------------
def reference(keypoints, params, parent_ids, child_ids, cfg):
    B, J, D = keypoints.shape
    L = cfg['num_layers']
    bone = keypoints[:, parent_ids, :] - keypoints[:, child_ids, :]
    bone = jnp.concatenate([jnp.zeros((B, 1, D), keypoints.dtype), bone], axis=1)
    adj = jnp.zeros((J, J), jnp.float32)
    if cfg['use_self_loop']:
        adj = adj + jnp.eye(J, dtype=jnp.float32)
    adj = adj.at[parent_ids, child_ids].set(1.0)
    adj = adj.at[child_ids, parent_ids].set(1.0)
    a_norm = adj / jnp.maximum(adj.sum(1, keepdims=True), 1.0)

    def sage(x, w_s, w_n, b):
        return x @ w_s + (a_norm @ x) @ w_n + b

    def branch(x, ws, wn, bs):
        for l in range(L):
            h = jax.nn.relu(sage(x, ws[2 * l], wn[2 * l], bs[2 * l]))
            h = sage(h, ws[2 * l + 1], wn[2 * l + 1], bs[2 * l + 1])
            x = jax.nn.relu(x + h)
        return sage(x, ws[2 * L], wn[2 * L], bs[2 * L])

    xj = keypoints @ params['jin_w'] + params['jin_b']
    xb = bone @ params['bin_w'] + params['bin_b']
    fj = jax.vmap(lambda x: branch(x, params['jws'], params['jwn'], params['jb']))(xj)
    fb = jax.vmap(lambda x: branch(x, params['bws'], params['bwn'], params['bb']))(xb)
    feat = jnp.concatenate([fj, fb], axis=-1).reshape(B, -1)
    h = jax.nn.relu(feat @ params['h1_w'] + params['h1_b'])
    return h @ params['h2_w'] + params['h2_b']


# ---------------------------------------------------------------------------
if __name__ == "__main__":
    cfg = dict(input_dim=32, hidden_dim=32, output_dim=32, disc_sup_dim=3,
               num_node=16, use_self_loop=True, num_layers=2, use_pe=False)
    assert cfg['input_dim'] == cfg['hidden_dim'] == cfg['output_dim']  # stacked conv weights
    J = cfg['num_node']

    # chain skeleton: node i's parent is node i-1 (J-1 bones)
    parent_ids = jnp.arange(0, J - 1, dtype=jnp.int32)
    child_ids = jnp.arange(1, J, dtype=jnp.int32)

    key = jax.random.PRNGKey(0)
    k_in, k_par = jax.random.split(key)
    B = 16                                                   # 2 grid steps with tb=8
    keypoints = jax.random.normal(k_in, (B, J, cfg['disc_sup_dim']), jnp.float32)
    params = init_params(k_par, cfg)

    out = gcn_discriminator_decouple(keypoints, params, parent_ids, child_ids, cfg, tb=8)
    out = jax.block_until_ready(out)

    ref = reference(keypoints, params, parent_ids, child_ids, cfg)
    assert out.shape == (B, 1)
    # bf16 matmul operands (f32 accumulation) vs pure-f32 reference -> loose-ish tolerance
    assert jnp.allclose(out, ref, atol=5e-2, rtol=5e-2), (out, ref)
    print("KERNEL_OK")
</pallas_src>

<mosaic_0001>
module attributes {stable_mosaic.version = 11 : i64} {
  func.func @_disc_kernel(%arg0: i32, %arg1: memref<16x8x6xbf16, #tpu.memory_space<vmem>>, %arg2: memref<128x128xbf16, #tpu.memory_space<vmem>>, %arg3: memref<6x64xbf16, #tpu.memory_space<vmem>>, %arg4: memref<1x64xf32, #tpu.memory_space<vmem>>, %arg5: memref<5x128x64xbf16, #tpu.memory_space<vmem>>, %arg6: memref<5x64xf32, #tpu.memory_space<vmem>>, %arg7: memref<16x64x512xbf16, #tpu.memory_space<vmem>>, %arg8: memref<1x512xf32, #tpu.memory_space<vmem>>, %arg9: memref<1x512xf32, #tpu.memory_space<vmem>>, %arg10: memref<1x1xf32, #tpu.memory_space<vmem>>, %arg11: memref<1x8x1xf32, #tpu.memory_space<vmem>>) attributes {dimension_semantics = [#tpu.dimension_semantics<parallel>], iteration_bounds = array<i64: 2>, scalar_prefetch = 0 : i64, scratch_operands = 0 : i64, tpu.core_type = #tpu.core_type<tc>, window_params = [{transform_indices = @transform_0, window_bounds = array<i64: 16, 8, 6>}, {pipeline_mode = #tpu.pipeline_mode<synchronous>, transform_indices = @transform_1, window_bounds = array<i64: 128, 128>}, {pipeline_mode = #tpu.pipeline_mode<synchronous>, transform_indices = @transform_2, window_bounds = array<i64: 6, 64>}, {pipeline_mode = #tpu.pipeline_mode<synchronous>, transform_indices = @transform_3, window_bounds = array<i64: 1, 64>}, {pipeline_mode = #tpu.pipeline_mode<synchronous>, transform_indices = @transform_4, window_bounds = array<i64: 5, 128, 64>}, {pipeline_mode = #tpu.pipeline_mode<synchronous>, transform_indices = @transform_5, window_bounds = array<i64: 5, 64>}, {pipeline_mode = #tpu.pipeline_mode<synchronous>, transform_indices = @transform_6, window_bounds = array<i64: 16, 64, 512>}, {pipeline_mode = #tpu.pipeline_mode<synchronous>, transform_indices = @transform_7, window_bounds = array<i64: 1, 512>}, {pipeline_mode = #tpu.pipeline_mode<synchronous>, transform_indices = @transform_8, window_bounds = array<i64: 1, 512>}, {pipeline_mode = #tpu.pipeline_mode<synchronous>, transform_indices = @transform_9, window_bounds = array<i64: 1, 1>}, {transform_indices = @transform_10, window_bounds = array<i64: 1, 8, 1>}]} {
    %c0 = arith.constant 0 : index
    %c0_0 = arith.constant 0 : index
    %c0_1 = arith.constant 0 : index
    %0 = vector.load %arg1[%c0, %c0_0, %c0_1] : memref<16x8x6xbf16, #tpu.memory_space<vmem>>, vector<16x8x6xbf16>
    %1 = vector.shape_cast %0 : vector<16x8x6xbf16> to vector<128x6xbf16>
    %c0_2 = arith.constant 0 : index
    %c0_3 = arith.constant 0 : index
    %2 = vector.load %arg2[%c0_2, %c0_3] : memref<128x128xbf16, #tpu.memory_space<vmem>>, vector<128x128xbf16>
    %c0_4 = arith.constant 0 : index
    %c0_5 = arith.constant 0 : index
    %3 = vector.load %arg3[%c0_4, %c0_5] : memref<6x64xbf16, #tpu.memory_space<vmem>>, vector<6x64xbf16>
    %cst = arith.constant dense<0.000000e+00> : vector<128x64xf32>
    %4 = tpu.matmul %1, %3, %cst {dimension_numbers = #tpu.dot_dimension_numbers<[1], [0], [0], [1], [0, 0, 1, 1], [], []>} : vector<128x6xbf16>, vector<6x64xbf16>, vector<128x64xf32> -> vector<128x64xf32>
    %c0_6 = arith.constant 0 : index
    %c0_7 = arith.constant 0 : index
    %5 = vector.load %arg4[%c0_6, %c0_7] : memref<1x64xf32, #tpu.memory_space<vmem>>, vector<1x64xf32>
    %6 = vector.broadcast %5 : vector<1x64xf32> to vector<128x64xf32>
    %7 = arith.addf %4, %6 : vector<128x64xf32>
    %8 = arith.truncf %7 : vector<128x64xf32> to vector<128x64xbf16>
    %cst_8 = arith.constant dense<0.000000e+00> : vector<128x64xf32>
    %9 = tpu.matmul %2, %8, %cst_8 {dimension_numbers = #tpu.dot_dimension_numbers<[1], [0], [0], [1], [0, 0, 1, 1], [], []>} : vector<128x128xbf16>, vector<128x64xbf16>, vector<128x64xf32> -> vector<128x64xf32>
    %10 = tpu.concatenate %7, %9 in 1 : vector<128x64xf32>, vector<128x64xf32> -> vector<128x128xf32>
    %11 = arith.truncf %10 : vector<128x128xf32> to vector<128x128xbf16>
    %c0_9 = arith.constant 0 : index
    %c0_10 = arith.constant 0 : index
    %c0_11 = arith.constant 0 : index
    %12 = vector.load %arg5[%c0_9, %c0_10, %c0_11] : memref<5x128x64xbf16, #tpu.memory_space<vmem>>, vector<1x128x64xbf16>
    %13 = vector.shape_cast %12 : vector<1x128x64xbf16> to vector<128x64xbf16>
    %cst_12 = arith.constant dense<0.000000e+00> : vector<128x64xf32>
    %14 = tpu.matmul %11, %13, %cst_12 {dimension_numbers = #tpu.dot_dimension_numbers<[1], [0], [0], [1], [0, 0, 1, 1], [], []>} : vector<128x128xbf16>, vector<128x64xbf16>, vector<128x64xf32> -> vector<128x64xf32>
    %c0_13 = arith.constant 0 : index
    %c0_14 = arith.constant 0 : index
    %15 = vector.load %arg6[%c0_13, %c0_14] : memref<5x64xf32, #tpu.memory_space<vmem>>, vector<1x64xf32>
    %16 = vector.broadcast %15 : vector<1x64xf32> to vector<128x64xf32>
    %17 = arith.addf %14, %16 : vector<128x64xf32>
    %cst_15 = arith.constant 0.000000e+00 : f32
    %18 = vector.broadcast %cst_15 : f32 to vector<128x64xf32>
    %19 = arith.maximumf %17, %18 : vector<128x64xf32>
    %20 = arith.truncf %19 : vector<128x64xf32> to vector<128x64xbf16>
    %cst_16 = arith.constant dense<0.000000e+00> : vector<128x64xf32>
    %21 = tpu.matmul %2, %20, %cst_16 {dimension_numbers = #tpu.dot_dimension_numbers<[1], [0], [0], [1], [0, 0, 1, 1], [], []>} : vector<128x128xbf16>, vector<128x64xbf16>, vector<128x64xf32> -> vector<128x64xf32>
    %22 = tpu.concatenate %19, %21 in 1 : vector<128x64xf32>, vector<128x64xf32> -> vector<128x128xf32>
    %23 = arith.truncf %22 : vector<128x128xf32> to vector<128x128xbf16>
    %c1 = arith.constant 1 : index
    %c0_17 = arith.constant 0 : index
    %c0_18 = arith.constant 0 : index
    %24 = vector.load %arg5[%c1, %c0_17, %c0_18] : memref<5x128x64xbf16, #tpu.memory_space<vmem>>, vector<1x128x64xbf16>
    %25 = vector.shape_cast %24 : vector<1x128x64xbf16> to vector<128x64xbf16>
    %cst_19 = arith.constant dense<0.000000e+00> : vector<128x64xf32>
    %26 = tpu.matmul %23, %25, %cst_19 {dimension_numbers = #tpu.dot_dimension_numbers<[1], [0], [0], [1], [0, 0, 1, 1], [], []>} : vector<128x128xbf16>, vector<128x64xbf16>, vector<128x64xf32> -> vector<128x64xf32>
    %c1_20 = arith.constant 1 : index
    %c0_21 = arith.constant 0 : index
    %27 = vector.load %arg6[%c1_20, %c0_21] : memref<5x64xf32, #tpu.memory_space<vmem>>, vector<1x64xf32>
    %28 = vector.broadcast %27 : vector<1x64xf32> to vector<128x64xf32>
    %29 = arith.addf %26, %28 : vector<128x64xf32>
    %30 = arith.addf %7, %29 : vector<128x64xf32>
    %cst_22 = arith.constant 0.000000e+00 : f32
    %31 = vector.broadcast %cst_22 : f32 to vector<128x64xf32>
    %32 = arith.maximumf %30, %31 : vector<128x64xf32>
    %33 = arith.truncf %32 : vector<128x64xf32> to vector<128x64xbf16>
    %cst_23 = arith.constant dense<0.000000e+00> : vector<128x64xf32>
    %34 = tpu.matmul %2, %33, %cst_23 {dimension_numbers = #tpu.dot_dimension_numbers<[1], [0], [0], [1], [0, 0, 1, 1], [], []>} : vector<128x128xbf16>, vector<128x64xbf16>, vector<128x64xf32> -> vector<128x64xf32>
    %35 = tpu.concatenate %32, %34 in 1 : vector<128x64xf32>, vector<128x64xf32> -> vector<128x128xf32>
    %36 = arith.truncf %35 : vector<128x128xf32> to vector<128x128xbf16>
    %c2 = arith.constant 2 : index
    %c0_24 = arith.constant 0 : index
    %c0_25 = arith.constant 0 : index
    %37 = vector.load %arg5[%c2, %c0_24, %c0_25] : memref<5x128x64xbf16, #tpu.memory_space<vmem>>, vector<1x128x64xbf16>
    %38 = vector.shape_cast %37 : vector<1x128x64xbf16> to vector<128x64xbf16>
    %cst_26 = arith.constant dense<0.000000e+00> : vector<128x64xf32>
    %39 = tpu.matmul %36, %38, %cst_26 {dimension_numbers = #tpu.dot_dimension_numbers<[1], [0], [0], [1], [0, 0, 1, 1], [], []>} : vector<128x128xbf16>, vector<128x64xbf16>, vector<128x64xf32> -> vector<128x64xf32>
    %c2_27 = arith.constant 2 : index
    %c0_28 = arith.constant 0 : index
    %40 = vector.load %arg6[%c2_27, %c0_28] : memref<5x64xf32, #tpu.memory_space<vmem>>, vector<1x64xf32>
    %41 = vector.broadcast %40 : vector<1x64xf32> to vector<128x64xf32>
    %42 = arith.addf %39, %41 : vector<128x64xf32>
    %cst_29 = arith.constant 0.000000e+00 : f32
    %43 = vector.broadcast %cst_29 : f32 to vector<128x64xf32>
    %44 = arith.maximumf %42, %43 : vector<128x64xf32>
    %45 = arith.truncf %44 : vector<128x64xf32> to vector<128x64xbf16>
    %cst_30 = arith.constant dense<0.000000e+00> : vector<128x64xf32>
    %46 = tpu.matmul %2, %45, %cst_30 {dimension_numbers = #tpu.dot_dimension_numbers<[1], [0], [0], [1], [0, 0, 1, 1], [], []>} : vector<128x128xbf16>, vector<128x64xbf16>, vector<128x64xf32> -> vector<128x64xf32>
    %47 = tpu.concatenate %44, %46 in 1 : vector<128x64xf32>, vector<128x64xf32> -> vector<128x128xf32>
    %48 = arith.truncf %47 : vector<128x128xf32> to vector<128x128xbf16>
    %c3 = arith.constant 3 : index
    %c0_31 = arith.constant 0 : index
    %c0_32 = arith.constant 0 : index
    %49 = vector.load %arg5[%c3, %c0_31, %c0_32] : memref<5x128x64xbf16, #tpu.memory_space<vmem>>, vector<1x128x64xbf16>
    %50 = vector.shape_cast %49 : vector<1x128x64xbf16> to vector<128x64xbf16>
    %cst_33 = arith.constant dense<0.000000e+00> : vector<128x64xf32>
    %51 = tpu.matmul %48, %50, %cst_33 {dimension_numbers = #tpu.dot_dimension_numbers<[1], [0], [0], [1], [0, 0, 1, 1], [], []>} : vector<128x128xbf16>, vector<128x64xbf16>, vector<128x64xf32> -> vector<128x64xf32>
    %c3_34 = arith.constant 3 : index
    %c0_35 = arith.constant 0 : index
    %52 = vector.load %arg6[%c3_34, %c0_35] : memref<5x64xf32, #tpu.memory_space<vmem>>, vector<1x64xf32>
    %53 = vector.broadcast %52 : vector<1x64xf32> to vector<128x64xf32>
    %54 = arith.addf %51, %53 : vector<128x64xf32>
    %55 = arith.addf %32, %54 : vector<128x64xf32>
    %cst_36 = arith.constant 0.000000e+00 : f32
    %56 = vector.broadcast %cst_36 : f32 to vector<128x64xf32>
    %57 = arith.maximumf %55, %56 : vector<128x64xf32>
    %58 = arith.truncf %57 : vector<128x64xf32> to vector<128x64xbf16>
    %cst_37 = arith.constant dense<0.000000e+00> : vector<128x64xf32>
    %59 = tpu.matmul %2, %58, %cst_37 {dimension_numbers = #tpu.dot_dimension_numbers<[1], [0], [0], [1], [0, 0, 1, 1], [], []>} : vector<128x128xbf16>, vector<128x64xbf16>, vector<128x64xf32> -> vector<128x64xf32>
    %60 = tpu.concatenate %57, %59 in 1 : vector<128x64xf32>, vector<128x64xf32> -> vector<128x128xf32>
    %61 = arith.truncf %60 : vector<128x128xf32> to vector<128x128xbf16>
    %c4 = arith.constant 4 : index
    %c0_38 = arith.constant 0 : index
    %c0_39 = arith.constant 0 : index
    %62 = vector.load %arg5[%c4, %c0_38, %c0_39] : memref<5x128x64xbf16, #tpu.memory_space<vmem>>, vector<1x128x64xbf16>
    %63 = vector.shape_cast %62 : vector<1x128x64xbf16> to vector<128x64xbf16>
    %cst_40 = arith.constant dense<0.000000e+00> : vector<128x64xf32>
    %64 = tpu.matmul %61, %63, %cst_40 {dimension_numbers = #tpu.dot_dimension_numbers<[1], [0], [0], [1], [0, 0, 1, 1], [], []>} : vector<128x128xbf16>, vector<128x64xbf16>, vector<128x64xf32> -> vector<128x64xf32>
    %c4_41 = arith.constant 4 : index
    %c0_42 = arith.constant 0 : index
    %65 = vector.load %arg6[%c4_41, %c0_42] : memref<5x64xf32, #tpu.memory_space<vmem>>, vector<1x64xf32>
    %66 = vector.broadcast %65 : vector<1x64xf32> to vector<128x64xf32>
    %67 = arith.addf %64, %66 : vector<128x64xf32>
    %68 = arith.truncf %67 : vector<128x64xf32> to vector<128x64xbf16>
    %69 = vector.shape_cast %68 : vector<128x64xbf16> to vector<16x8x64xbf16>
    %c0_43 = arith.constant 0 : index
    %c0_44 = arith.constant 0 : index
    %c0_45 = arith.constant 0 : index
    %70 = vector.load %arg7[%c0_43, %c0_44, %c0_45] : memref<16x64x512xbf16, #tpu.memory_space<vmem>>, vector<16x64x512xbf16>
    %cst_46 = arith.constant dense<0.000000e+00> : vector<16x8x512xf32>
    %71 = tpu.matmul %69, %70, %cst_46 {dimension_numbers = #tpu.dot_dimension_numbers<[2], [1], [1], [2], [0, 0, 0, 1, 1, 2], [0], [0]>} : vector<16x8x64xbf16>, vector<16x64x512xbf16>, vector<16x8x512xf32> -> vector<16x8x512xf32>
    %cst_47 = arith.constant dense<0.000000e+00> : vector<8x512xf32>
    %72 = vector.multi_reduction <add>, %71, %cst_47 [0] : vector<16x8x512xf32> to vector<8x512xf32>
    %c0_48 = arith.constant 0 : index
    %c0_49 = arith.constant 0 : index
    %73 = vector.load %arg8[%c0_48, %c0_49] : memref<1x512xf32, #tpu.memory_space<vmem>>, vector<1x512xf32>
    %74 = vector.broadcast %73 : vector<1x512xf32> to vector<8x512xf32>
    %75 = arith.addf %72, %74 : vector<8x512xf32>
    %cst_50 = arith.constant 0.000000e+00 : f32
    %76 = vector.broadcast %cst_50 : f32 to vector<8x512xf32>
    %77 = arith.maximumf %75, %76 : vector<8x512xf32>
    %c0_51 = arith.constant 0 : index
    %c0_52 = arith.constant 0 : index
    %78 = vector.load %arg9[%c0_51, %c0_52] : memref<1x512xf32, #tpu.memory_space<vmem>>, vector<1x512xf32>
    %79 = vector.broadcast %78 : vector<1x512xf32> to vector<8x512xf32>
    %80 = arith.mulf %77, %79 : vector<8x512xf32>
    %cst_53 = arith.constant dense<0.000000e+00> : vector<8xf32>
    %81 = vector.multi_reduction <add>, %80, %cst_53 [1] : vector<8x512xf32> to vector<8xf32>
    %82 = vector.shape_cast %81 : vector<8xf32> to vector<8x1xf32>
    %c0_54 = arith.constant 0 : index
    %c0_55 = arith.constant 0 : index
    %83 = vector.load %arg10[%c0_54, %c0_55] : memref<1x1xf32, #tpu.memory_space<vmem>>, vector<1x1xf32>
    %84 = vector.broadcast %83 : vector<1x1xf32> to vector<8x1xf32>
    %85 = arith.addf %82, %84 : vector<8x1xf32>
    %c0_56 = arith.constant 0 : index
    %c0_57 = arith.constant 0 : index
    %c0_58 = arith.constant 0 : index
    %86 = vector.load %arg11[%c0_56, %c0_57, %c0_58] : memref<1x8x1xf32, #tpu.memory_space<vmem>>, vector<1x8x1xf32>
    %87 = vector.shape_cast %86 : vector<1x8x1xf32> to vector<8x1xf32>
    %88 = vector.shape_cast %85 : vector<8x1xf32> to vector<1x8x1xf32>
    tpu.vector_store %arg11[%c0_56, %c0_57, %c0_58], %88 {strides = array<i32>} : memref<1x8x1xf32, #tpu.memory_space<vmem>>, vector<1x8x1xf32>,
    return
  }
  func.func @transform_0(%arg0: i32) -> (i32, i32, i32) {
    %c0_i32 = arith.constant 0 : i32
    %c0_i32_0 = arith.constant 0 : i32
    %c0_i32_1 = arith.constant 0 : i32
    return %c0_i32, %arg0, %c0_i32_0 : i32, i32, i32
  }
  func.func @transform_1(%arg0: i32) -> (i32, i32) {
    %c0_i32 = arith.constant 0 : i32
    %c0_i32_0 = arith.constant 0 : i32
    %c0_i32_1 = arith.constant 0 : i32
    return %c0_i32, %c0_i32_0 : i32, i32
  }
  func.func @transform_2(%arg0: i32) -> (i32, i32) {
    %c0_i32 = arith.constant 0 : i32
    %c0_i32_0 = arith.constant 0 : i32
    %c0_i32_1 = arith.constant 0 : i32
    return %c0_i32, %c0_i32_0 : i32, i32
  }
  func.func @transform_3(%arg0: i32) -> (i32, i32) {
    %c0_i32 = arith.constant 0 : i32
    %c0_i32_0 = arith.constant 0 : i32
    %c0_i32_1 = arith.constant 0 : i32
    return %c0_i32, %c0_i32_0 : i32, i32
  }
  func.func @transform_4(%arg0: i32) -> (i32, i32, i32) {
    %c0_i32 = arith.constant 0 : i32
    %c0_i32_0 = arith.constant 0 : i32
    %c0_i32_1 = arith.constant 0 : i32
    %c0_i32_2 = arith.constant 0 : i32
    return %c0_i32, %c0_i32_0, %c0_i32_1 : i32, i32, i32
  }
  func.func @transform_5(%arg0: i32) -> (i32, i32) {
    %c0_i32 = arith.constant 0 : i32
    %c0_i32_0 = arith.constant 0 : i32
    %c0_i32_1 = arith.constant 0 : i32
    return %c0_i32, %c0_i32_0 : i32, i32
  }
  func.func @transform_6(%arg0: i32) -> (i32, i32, i32) {
    %c0_i32 = arith.constant 0 : i32
    %c0_i32_0 = arith.constant 0 : i32
    %c0_i32_1 = arith.constant 0 : i32
    %c0_i32_2 = arith.constant 0 : i32
    return %c0_i32, %c0_i32_0, %c0_i32_1 : i32, i32, i32
  }
  func.func @transform_7(%arg0: i32) -> (i32, i32) {
    %c0_i32 = arith.constant 0 : i32
    %c0_i32_0 = arith.constant 0 : i32
    %c0_i32_1 = arith.constant 0 : i32
    return %c0_i32, %c0_i32_0 : i32, i32
  }
  func.func @transform_8(%arg0: i32) -> (i32, i32) {
    %c0_i32 = arith.constant 0 : i32
    %c0_i32_0 = arith.constant 0 : i32
    %c0_i32_1 = arith.constant 0 : i32
    return %c0_i32, %c0_i32_0 : i32, i32
  }
  func.func @transform_9(%arg0: i32) -> (i32, i32) {
    %c0_i32 = arith.constant 0 : i32
    %c0_i32_0 = arith.constant 0 : i32
    %c0_i32_1 = arith.constant 0 : i32
    return %c0_i32, %c0_i32_0 : i32, i32
  }
  func.func @transform_10(%arg0: i32) -> (i32, i32, i32) {
    %c0_i32 = arith.constant 0 : i32
    %c0_i32_0 = arith.constant 0 : i32
    %c0_i32_1 = arith.constant 0 : i32
    return %arg0, %c0_i32, %c0_i32_0 : i32, i32, i32
  }
}

</mosaic_0001>

<llo_original>
// kernel: tpu_custom_call.1
$region0: #{tpu_custom_call.1}
  #allocation0 [shape = 'u32[]', space=smem, size = 0x4, offset = 0x4, fixed_abs, tag = 'smem constant byte address 0x4 - core index']
  #allocation1 [shape = 'u32[144,128]{1,0:T(1,128)}', space=vmem, size = 0x12000, scoped, tag = 'internal scratch']
  #allocation2 [shape = 'f32[1,1]{1,0:T(1,128)S(1)}', space=vmem, size = 0x200, scoped, tag = 'scoped memory for tpu_custom_call.1']
  %s0 = inlined_call_operand.vmem [shape: bf16[16,16,6], index: 0, kind: input, shape index: {}]
  %s1 = inlined_call_operand.vmem [shape: bf16[128,128], index: 1, kind: input, shape index: {}]
  %s2 = inlined_call_operand.vmem [shape: bf16[6,64], index: 2, kind: input, shape index: {}]
  %s3 = inlined_call_operand.vmem [shape: f32[1,64], index: 3, kind: input, shape index: {}]
  %s4 = inlined_call_operand.vmem [shape: bf16[5,128,64], index: 4, kind: input, shape index: {}]
  %s5 = inlined_call_operand.vmem [shape: f32[5,64], index: 5, kind: input, shape index: {}]
  %s6 = inlined_call_operand.hbm [shape: bf16[16,64,512], index: 6, kind: input, shape index: {}]
  %s7 = inlined_call_operand.vmem [shape: f32[1,512], index: 7, kind: input, shape index: {}]
  %s8 = inlined_call_operand.vmem [shape: f32[1,512], index: 8, kind: input, shape index: {}]
  %s9 = inlined_call_operand.<no memory space> [shape: f32[1,1], index: 9, kind: input, shape index: {}]
  %s10 = inlined_call_operand.vmem [shape: f32[2,8,1], index: 10, kind: output, shape index: {}]
  %s11 = sld [smem:[#allocation0]]
  $region118: #{tpu_custom_call.1} parent=0
    _
  %s13 = ssub.s32 1, %s11
  %s14 = scalar_select 0, %s13, %s11
  %v15 = vstv %s9
  %16 = vst [vmem:[#allocation2] sm:$0x1] %v15
  $region1: #{tpu_custom_call.1} parent=0
    #allocation3 [shape = 'u8[65536]{0}', space=vmem, size = 0x10000, scoped, tag = 'input window, operand 0']
    #allocation4 [shape = 'u8[1048576]{0}', space=vmem, size = 0x100000, scoped, tag = 'input window, operand 6, single buffered']
    #allocation5 [shape = 's32[2]{0}', space=sflag, size = 0x8, scoped, tag = 'scoped memory for tpu_custom_call.1']
    %17 = vsyncpa [#allocation5], 0
    loop: start=0, step=1, limit=4
    $region2: #{tpu_custom_call.1} parent=1 // loop_pre_header
      _
    $region3: #{tpu_custom_call.1} parent=1 // loop_header
      %s19 = sphi 0, %s23
      %p20 = scmp.ge.s32.totalorder %s19, 4
      %s29 = sphi 0, %s31
      %s32 = sphi 0, %s29
      %s33 = sphi 0, %s32
      %s49 = sphi 0, %s33
      %s53 = sphi 0, %s53
      %s55 = sphi 0, %s53
      %s56 = sphi 0, %s55
      %s70 = sphi 0, %s56
      %s74 = sphi 0, %s74
      %s76 = sphi 0, %s74
      %s77 = sphi 0, %s76
      %s91 = sphi 0, %s77
      %s95 = sphi 0, %s95
      %s97 = sphi 0, %s95
      %s98 = sphi 0, %s97
      %s112 = sphi 0, %s98
      %s116 = sphi 0, %s116
      %s118 = sphi 0, %s116
      %s119 = sphi 0, %s118
      %s133 = sphi 0, %s119
      %s137 = sphi 0, %s137
      %s139 = sphi 0, %s137
      %s140 = sphi 0, %s139
      %s154 = sphi 0, %s140
      %s158 = sphi 0, %s158
      %s160 = sphi 0, %s158
      %s161 = sphi 0, %s160
      %s175 = sphi 0, %s161
      %s179 = sphi 0, %s179
      %s181 = sphi 0, %s179
      %s182 = sphi 0, %s181
      %s196 = sphi 0, %s182
      %s200 = sphi 0, %s200
      %s202 = sphi 0, %s200
      %s203 = sphi 0, %s202
      %s217 = sphi 0, %s203
      %s221 = sphi 0, %s221
      %s223 = sphi 0, %s221
      %s224 = sphi 0, %s223
      %s238 = sphi 0, %s224
      %s244 = sphi 0, %s246
      %s247 = sphi 0, %s244
      %s248 = sphi 0, %s247
      %s264 = sphi 0, %s248
    $region4: #{tpu_custom_call.1} parent=1 // loop_header_branch
      %22 = sbr.rel (%p20) target = $region8
    $region5: #{tpu_custom_call.1} parent=1 // loop_body
      %s24 = ssub.s32 %s19, 1
      %s25 = ssub.s32 %s19, 2
      %s26 = sadd.s32 %s19, 1
      %s27 = ssub.s32 %s19, %s26
      %p28 = scmp.eq.s32.totalorder %s27, 0
      %s30 = sadd.s32 %s29, 1
      %s31 = scalar_select %p28, %s29, %s30
      %p34 = pneg %p28
      %p35 = scmp.eq.s32.totalorder %s19, 1
      %p36 = por %p34, %p35
      %p37 = scmp.ne.s32.totalorder %s29, %s32
      %p38 = scmp.eq.s32.totalorder %s19, 0
      %p39 = por %p37, %p38
      %p40 = scmp.ne.s32.totalorder %s29, %s32
      %p41 = scmp.eq.s32.totalorder %s24, 1
      %p42 = por %p40, %p41
      %p43 = scmp.ne.s32.totalorder %s32, %s33
      %p44 = scmp.eq.s32.totalorder %s24, 0
      %p45 = por %p43, %p44
      %p46 = scmp.ne.s32.totalorder %s32, %s33
      %p47 = scmp.eq.s32.totalorder %s25, 1
      %p48 = por %p46, %p47
      %p50 = scmp.ne.s32.totalorder %s33, %s49
      %p51 = scmp.eq.s32.totalorder %s25, 0
      %p52 = por %p50, %p51
      %s54 = sadd.s32 %s53, 1
      %p57 = scmp.eq.s32.totalorder %s19, 1
      %p58 = scmp.ne.s32.totalorder %s53, %s55
      %p59 = scmp.eq.s32.totalorder %s19, 0
      %p60 = por %p58, %p59
      %p61 = scmp.ne.s32.totalorder %s53, %s55
      %p62 = scmp.eq.s32.totalorder %s24, 1
      %p63 = por %p61, %p62
      %p64 = scmp.ne.s32.totalorder %s55, %s56
      %p65 = scmp.eq.s32.totalorder %s24, 0
      %p66 = por %p64, %p65
      %p67 = scmp.ne.s32.totalorder %s55, %s56
      %p68 = scmp.eq.s32.totalorder %s25, 1
      %p69 = por %p67, %p68
      %p71 = scmp.ne.s32.totalorder %s56, %s70
      %p72 = scmp.eq.s32.totalorder %s25, 0
      %p73 = por %p71, %p72
      %s75 = sadd.s32 %s74, 1
      %p78 = scmp.eq.s32.totalorder %s19, 1
      %p79 = scmp.ne.s32.totalorder %s74, %s76
      %p80 = scmp.eq.s32.totalorder %s19, 0
      %p81 = por %p79, %p80
      %p82 = scmp.ne.s32.totalorder %s74, %s76
      %p83 = scmp.eq.s32.totalorder %s24, 1
      %p84 = por %p82, %p83
      %p85 = scmp.ne.s32.totalorder %s76, %s77
      %p86 = scmp.eq.s32.totalorder %s24, 0
      %p87 = por %p85, %p86
      %p88 = scmp.ne.s32.totalorder %s76, %s77
      %p89 = scmp.eq.s32.totalorder %s25, 1
      %p90 = por %p88, %p89
      %p92 = scmp.ne.s32.totalorder %s77, %s91
      %p93 = scmp.eq.s32.totalorder %s25, 0
      %p94 = por %p92, %p93
      %s96 = sadd.s32 %s95, 1
      %p99 = scmp.eq.s32.totalorder %s19, 1
      %p100 = scmp.ne.s32.totalorder %s95, %s97
      %p101 = scmp.eq.s32.totalorder %s19, 0
      %p102 = por %p100, %p101
      %p103 = scmp.ne.s32.totalorder %s95, %s97
      %p104 = scmp.eq.s32.totalorder %s24, 1
      %p105 = por %p103, %p104
      %p106 = scmp.ne.s32.totalorder %s97, %s98
      %p107 = scmp.eq.s32.totalorder %s24, 0
      %p108 = por %p106, %p107
      %p109 = scmp.ne.s32.totalorder %s97, %s98
      %p110 = scmp.eq.s32.totalorder %s25, 1
      %p111 = por %p109, %p110
      %p113 = scmp.ne.s32.totalorder %s98, %s112
      %p114 = scmp.eq.s32.totalorder %s25, 0
      %p115 = por %p113, %p114
      %s117 = sadd.s32 %s116, 1
      %p120 = scmp.eq.s32.totalorder %s19, 1
      %p121 = scmp.ne.s32.totalorder %s116, %s118
      %p122 = scmp.eq.s32.totalorder %s19, 0
      %p123 = por %p121, %p122
      %p124 = scmp.ne.s32.totalorder %s116, %s118
      %p125 = scmp.eq.s32.totalorder %s24, 1
      %p126 = por %p124, %p125
      %p127 = scmp.ne.s32.totalorder %s118, %s119
      %p128 = scmp.eq.s32.totalorder %s24, 0
      %p129 = por %p127, %p128
      %p130 = scmp.ne.s32.totalorder %s118, %s119
      %p131 = scmp.eq.s32.totalorder %s25, 1
      %p132 = por %p130, %p131
      %p134 = scmp.ne.s32.totalorder %s119, %s133
      %p135 = scmp.eq.s32.totalorder %s25, 0
      %p136 = por %p134, %p135
      %s138 = sadd.s32 %s137, 1
      %p141 = scmp.eq.s32.totalorder %s19, 1
      %p142 = scmp.ne.s32.totalorder %s137, %s139
      %p143 = scmp.eq.s32.totalorder %s19, 0
      %p144 = por %p142, %p143
      %p145 = scmp.ne.s32.totalorder %s137, %s139
      %p146 = scmp.eq.s32.totalorder %s24, 1
      %p147 = por %p145, %p146
      %p148 = scmp.ne.s32.totalorder %s139, %s140
      %p149 = scmp.eq.s32.totalorder %s24, 0
      %p150 = por %p148, %p149
      %p151 = scmp.ne.s32.totalorder %s139, %s140
      %p152 = scmp.eq.s32.totalorder %s25, 1
      %p153 = por %p151, %p152
      %p155 = scmp.ne.s32.totalorder %s140, %s154
      %p156 = scmp.eq.s32.totalorder %s25, 0
      %p157 = por %p155, %p156
      %s159 = sadd.s32 %s158, 1
      %p162 = scmp.eq.s32.totalorder %s19, 1
      %p163 = scmp.ne.s32.totalorder %s158, %s160
      %p164 = scmp.eq.s32.totalorder %s19, 0
      %p165 = por %p163, %p164
      %p166 = scmp.ne.s32.totalorder %s158, %s160
      %p167 = scmp.eq.s32.totalorder %s24, 1
      %p168 = por %p166, %p167
      %p169 = scmp.ne.s32.totalorder %s160, %s161
      %p170 = scmp.eq.s32.totalorder %s24, 0
      %p171 = por %p169, %p170
      %p172 = scmp.ne.s32.totalorder %s160, %s161
      %p173 = scmp.eq.s32.totalorder %s25, 1
      %p174 = por %p172, %p173
      %p176 = scmp.ne.s32.totalorder %s161, %s175
      %p177 = scmp.eq.s32.totalorder %s25, 0
      %p178 = por %p176, %p177
      %s180 = sadd.s32 %s179, 1
      %p183 = scmp.eq.s32.totalorder %s19, 1
      %p184 = scmp.ne.s32.totalorder %s179, %s181
      %p185 = scmp.eq.s32.totalorder %s19, 0
      %p186 = por %p184, %p185
      %p187 = scmp.ne.s32.totalorder %s179, %s181
      %p188 = scmp.eq.s32.totalorder %s24, 1
      %p189 = por %p187, %p188
      %p190 = scmp.ne.s32.totalorder %s181, %s182
      %p191 = scmp.eq.s32.totalorder %s24, 0
      %p192 = por %p190, %p191
      %p193 = scmp.ne.s32.totalorder %s181, %s182
      %p194 = scmp.eq.s32.totalorder %s25, 1
      %p195 = por %p193, %p194
      %p197 = scmp.ne.s32.totalorder %s182, %s196
      %p198 = scmp.eq.s32.totalorder %s25, 0
      %p199 = por %p197, %p198
      %s201 = sadd.s32 %s200, 1
      %p204 = scmp.eq.s32.totalorder %s19, 1
      %p205 = scmp.ne.s32.totalorder %s200, %s202
      %p206 = scmp.eq.s32.totalorder %s19, 0
      %p207 = por %p205, %p206
      %p208 = scmp.ne.s32.totalorder %s200, %s202
      %p209 = scmp.eq.s32.totalorder %s24, 1
      %p210 = por %p208, %p209
      %p211 = scmp.ne.s32.totalorder %s202, %s203
      %p212 = scmp.eq.s32.totalorder %s24, 0
      %p213 = por %p211, %p212
      %p214 = scmp.ne.s32.totalorder %s202, %s203
      %p215 = scmp.eq.s32.totalorder %s25, 1
      %p216 = por %p214, %p215
      %p218 = scmp.ne.s32.totalorder %s203, %s217
      %p219 = scmp.eq.s32.totalorder %s25, 0
      %p220 = por %p218, %p219
      %s222 = sadd.s32 %s221, 1
      %p225 = scmp.eq.s32.totalorder %s19, 1
      %p226 = scmp.ne.s32.totalorder %s221, %s223
      %p227 = scmp.eq.s32.totalorder %s19, 0
      %p228 = por %p226, %p227
      %p229 = scmp.ne.s32.totalorder %s221, %s223
      %p230 = scmp.eq.s32.totalorder %s24, 1
      %p231 = por %p229, %p230
      %p232 = scmp.ne.s32.totalorder %s223, %s224
      %p233 = scmp.eq.s32.totalorder %s24, 0
      %p234 = por %p232, %p233
      %p235 = scmp.ne.s32.totalorder %s223, %s224
      %p236 = scmp.eq.s32.totalorder %s25, 1
      %p237 = por %p235, %p236
      %p239 = scmp.ne.s32.totalorder %s224, %s238
      %p240 = scmp.eq.s32.totalorder %s25, 0
      %p241 = por %p239, %p240
      %s242 = ssub.s32 %s19, %s26
      %p243 = scmp.eq.s32.totalorder %s242, 0
      %s245 = sadd.s32 %s244, 1
      %s246 = scalar_select %p243, %s244, %s245
      %p249 = pneg %p243
      %p250 = scmp.eq.s32.totalorder %s19, 1
      %p251 = por %p249, %p250
      %p252 = scmp.ne.s32.totalorder %s244, %s247
      %p253 = scmp.eq.s32.totalorder %s19, 0
      %p254 = por %p252, %p253
      %p255 = scmp.ne.s32.totalorder %s244, %s247
      %p256 = scmp.eq.s32.totalorder %s24, 1
      %p257 = por %p255, %p256
      %p258 = scmp.ne.s32.totalorder %s247, %s248
      %p259 = scmp.eq.s32.totalorder %s24, 0
      %p260 = por %p258, %p259
      %p261 = scmp.ne.s32.totalorder %s247, %s248
      %p262 = scmp.eq.s32.totalorder %s25, 1
      %p263 = por %p261, %p262
      %p265 = scmp.ne.s32.totalorder %s248, %s264
      %p266 = scmp.eq.s32.totalorder %s25, 0
      %p267 = por %p265, %p266
      %p268 = scmp.le.s32.totalorder 1, %s19
      %p269 = scmp.lt.s32.totalorder %s19, 3
      %p270 = pnand %p268, %p269
      %p271 = pneg %p270
      // Predicated region
      $region9: #{tpu_custom_call.1} parent=5 // pred_check
        _
      $region10: #{tpu_custom_call.1} parent=5 // pred_check_branch
        %273 = sbr.rel (%p270) target = $region12
      $region11: #{tpu_custom_call.1} parent=5 // pred_region
        %s274 = ssub.s32 %s19, 1
        // Predicated region
        $region13: #{tpu_custom_call.1} parent=11 // pred_check
          %p275 = pneg %p66
        $region14: #{tpu_custom_call.1} parent=11 // pred_check_branch
          %277 = sbr.rel (%p275) target = $region16
        $region15: #{tpu_custom_call.1} parent=11 // pred_region
          _
        $region16: #{tpu_custom_call.1} parent=11 // pred_fallthru
          _
        // Predicated region
        $region17: #{tpu_custom_call.1} parent=11 // pred_check
          %p278 = pneg %p87
        $region18: #{tpu_custom_call.1} parent=11 // pred_check_branch
          %280 = sbr.rel (%p278) target = $region20
        $region19: #{tpu_custom_call.1} parent=11 // pred_region
          _
        $region20: #{tpu_custom_call.1} parent=11 // pred_fallthru
          _
        // Predicated region
        $region21: #{tpu_custom_call.1} parent=11 // pred_check
          %p281 = pneg %p108
        $region22: #{tpu_custom_call.1} parent=11 // pred_check_branch
          %283 = sbr.rel (%p281) target = $region24
        $region23: #{tpu_custom_call.1} parent=11 // pred_region
          _
        $region24: #{tpu_custom_call.1} parent=11 // pred_fallthru
          _
        // Predicated region
        $region25: #{tpu_custom_call.1} parent=11 // pred_check
          %p284 = pneg %p129
        $region26: #{tpu_custom_call.1} parent=11 // pred_check_branch
          %286 = sbr.rel (%p284) target = $region28
        $region27: #{tpu_custom_call.1} parent=11 // pred_region
          _
        $region28: #{tpu_custom_call.1} parent=11 // pred_fallthru
          _
        // Predicated region
        $region29: #{tpu_custom_call.1} parent=11 // pred_check
          %p287 = pneg %p150
        $region30: #{tpu_custom_call.1} parent=11 // pred_check_branch
          %289 = sbr.rel (%p287) target = $region32
        $region31: #{tpu_custom_call.1} parent=11 // pred_region
          _
        $region32: #{tpu_custom_call.1} parent=11 // pred_fallthru
          _
        // Predicated region
        $region33: #{tpu_custom_call.1} parent=11 // pred_check
          %p290 = pneg %p171
        $region34: #{tpu_custom_call.1} parent=11 // pred_check_branch
          %292 = sbr.rel (%p290) target = $region36
        $region35: #{tpu_custom_call.1} parent=11 // pred_region
          %s294 = ssub.s32 32768, 32768
          %295 = vsyncadd [#allocation5], %s294
          %s296 = sshll.u32 [#allocation4], 4
          %s297 = int_to_ptr.vmem [resolvable:$true] %s296
          %302 = dma.hbm_to_vmem [thread:$0]  %s6, 32768, %s297, [#allocation5], 256, 256, 16
        $region36: #{tpu_custom_call.1} parent=11 // pred_fallthru
          _
        // Predicated region
        $region37: #{tpu_custom_call.1} parent=11 // pred_check
          %p303 = pneg %p192
        $region38: #{tpu_custom_call.1} parent=11 // pred_check_branch
          %305 = sbr.rel (%p303) target = $region40
        $region39: #{tpu_custom_call.1} parent=11 // pred_region
          _
        $region40: #{tpu_custom_call.1} parent=11 // pred_fallthru
          _
        // Predicated region
        $region41: #{tpu_custom_call.1} parent=11 // pred_check
          %p306 = pneg %p213
        $region42: #{tpu_custom_call.1} parent=11 // pred_check_branch
          %308 = sbr.rel (%p306) target = $region44
        $region43: #{tpu_custom_call.1} parent=11 // pred_region
          _
        $region44: #{tpu_custom_call.1} parent=11 // pred_fallthru
          _
        // Predicated region
        $region45: #{tpu_custom_call.1} parent=11 // pred_check
          %p309 = pneg %p234
        $region46: #{tpu_custom_call.1} parent=11 // pred_check_branch
          %311 = sbr.rel (%p309) target = $region48
        $region47: #{tpu_custom_call.1} parent=11 // pred_region
          _
        $region48: #{tpu_custom_call.1} parent=11 // pred_fallthru
          _
      $region12: #{tpu_custom_call.1} parent=5 // pred_fallthru
        _
      %p312 = scmp.lt.s32.totalorder %s19, 2
      // Predicated region
      $region49: #{tpu_custom_call.1} parent=5 // pred_check
        %p313 = pneg %p312
      $region50: #{tpu_custom_call.1} parent=5 // pred_check_branch
        %315 = sbr.rel (%p313) target = $region52
      $region51: #{tpu_custom_call.1} parent=5 // pred_region
        // Predicated region
        $region53: #{tpu_custom_call.1} parent=51 // pred_check
          %p316 = pneg %p39
        $region54: #{tpu_custom_call.1} parent=51 // pred_check_branch
          %318 = sbr.rel (%p316) target = $region56
        $region55: #{tpu_custom_call.1} parent=51 // pred_region
          %s319 = sand.u32 %s29, 1
          %s320 = sand.u32 %s29, 1
          %s321 = smul.addr %s320, 64
          %s322 = scalar_lea.vmem [#allocation3], %s321
          %s323 = smul.addr %s19, 4
          %s324 = scalar_lea.vmem %s0, %s323
          // Predicated region
          $region57: #{tpu_custom_call.1} parent=55 // pred_check
            _
          $region58: #{tpu_custom_call.1} parent=55 // pred_check_branch
            %326 = sbr.rel (0) target = $region60
          $region59: #{tpu_custom_call.1} parent=55 // pred_region
            // Predicated region
            $region61: #{tpu_custom_call.1} parent=59 // pred_check
              _
            $region62: #{tpu_custom_call.1} parent=59 // pred_check_branch
              %328 = sbr.rel target = $region64
            $region63: #{tpu_custom_call.1} parent=59 // pred_region
              // Predicated region
              $region76: #{tpu_custom_call.1} parent=63 // pred_check
                _
              $region77: #{tpu_custom_call.1} parent=63 // pred_check_branch
                %373 = sbr.rel (0) target = $region79
              $region78: #{tpu_custom_call.1} parent=63 // pred_region
                loop: start=0, step=1, limit=1
                $region80: #{tpu_custom_call.1} parent=78 // loop_pre_header
                  _
                $region81: #{tpu_custom_call.1} parent=78 // loop_header
                  %s375 = sphi 0, %s379
                  %p376 = scmp.ge.s32.totalorder %s375, 1
                  %s380 = sphi %s324, %s324
                  %s381 = sphi %s322, %s322
                $region82: #{tpu_custom_call.1} parent=78 // loop_header_branch
                  %378 = sbr.rel (%p376) target = $region86
                $region83: #{tpu_custom_call.1} parent=78 // loop_body
                  _
                $region84: #{tpu_custom_call.1} parent=78 // loop_footer
                  %s379 = sadd.s32 1, %s375
                $region85: #{tpu_custom_call.1} parent=78 // loop_footer_branch
                  %374 = sbr.rel target = $region81
                $region86: #{tpu_custom_call.1} parent=78 // loop_exit
                  _
                loop: start=0, step=1, limit=1
                $region87: #{tpu_custom_call.1} parent=78 // loop_pre_header
                  _
                $region88: #{tpu_custom_call.1} parent=78 // loop_header
                  %s384 = sphi 0, %s388
                  %p385 = scmp.ge.s32.totalorder %s384, 1
                  %s389 = sphi %s324, %s324
                  %s390 = sphi %s322, %s322
                $region89: #{tpu_custom_call.1} parent=78 // loop_header_branch
                  %387 = sbr.rel (%p385) target = $region93
                $region90: #{tpu_custom_call.1} parent=78 // loop_body
                  %v391 = vld [vmem:[%s389] sm:$0xf]
                  %392 = vst [vmem:[%s390] sm:$0xf] %v391
                  %v393 = vld [vmem:[%s389 + $0x8] sm:$0xf]
                  %394 = vst [vmem:[%s390 + $0x4] sm:$0xf] %v393
                  %v395 = vld [vmem:[%s389 + $0x10] sm:$0xf]
                  %396 = vst [vmem:[%s390 + $0x8] sm:$0xf] %v395
                  %v397 = vld [vmem:[%s389 + $0x18] sm:$0xf]
                  %398 = vst [vmem:[%s390 + $0xc] sm:$0xf] %v397
                  %v399 = vld [vmem:[%s389 + $0x20] sm:$0xf]
                  %400 = vst [vmem:[%s390 + $0x10] sm:$0xf] %v399
                  %v401 = vld [vmem:[%s389 + $0x28] sm:$0xf]
                  %402 = vst [vmem:[%s390 + $0x14] sm:$0xf] %v401
                  %v403 = vld [vmem:[%s389 + $0x30] sm:$0xf]
                  %404 = vst [vmem:[%s390 + $0x18] sm:$0xf] %v403
                  %v405 = vld [vmem:[%s389 + $0x38] sm:$0xf]
                  %406 = vst [vmem:[%s390 + $0x1c] sm:$0xf] %v405
                  %v407 = vld [vmem:[%s389 + $0x40] sm:$0xf]
                  %408 = vst [vmem:[%s390 + $0x20] sm:$0xf] %v407
                  %v409 = vld [vmem:[%s389 + $0x48] sm:$0xf]
                  %410 = vst [vmem:[%s390 + $0x24] sm:$0xf] %v409
                  %v411 = vld [vmem:[%s389 + $0x50] sm:$0xf]
                  %412 = vst [vmem:[%s390 + $0x28] sm:$0xf] %v411
                  %v413 = vld [vmem:[%s389 + $0x58] sm:$0xf]
                  %414 = vst [vmem:[%s390 + $0x2c] sm:$0xf] %v413
                  %v415 = vld [vmem:[%s389 + $0x60] sm:$0xf]
                  %416 = vst [vmem:[%s390 + $0x30] sm:$0xf] %v415
                  %v417 = vld [vmem:[%s389 + $0x68] sm:$0xf]
                  %418 = vst [vmem:[%s390 + $0x34] sm:$0xf] %v417
                  %v419 = vld [vmem:[%s389 + $0x70] sm:$0xf]
                  %420 = vst [vmem:[%s390 + $0x38] sm:$0xf] %v419
                  %v421 = vld [vmem:[%s389 + $0x78] sm:$0xf]
                  %422 = vst [vmem:[%s390 + $0x3c] sm:$0xf] %v421
                $region91: #{tpu_custom_call.1} parent=78 // loop_footer
                  %s388 = sadd.s32 1, %s384
                $region92: #{tpu_custom_call.1} parent=78 // loop_footer_branch
                  %383 = sbr.rel target = $region88
                $region93: #{tpu_custom_call.1} parent=78 // loop_exit
                  _
              $region79: #{tpu_custom_call.1} parent=63 // pred_fallthru
                _
            $region64: #{tpu_custom_call.1} parent=59 // pred_fallthru
              _
            // Predicated region
            $region65: #{tpu_custom_call.1} parent=59 // pred_check
              _
            $region66: #{tpu_custom_call.1} parent=59 // pred_check_branch
              %330 = sbr.rel (0) target = $region68
            $region67: #{tpu_custom_call.1} parent=59 // pred_region
              loop: start=0, step=1, limit=1
              $region69: #{tpu_custom_call.1} parent=67 // loop_pre_header
                _
              $region70: #{tpu_custom_call.1} parent=67 // loop_header
                %s333 = sphi 0, %s337
                %p334 = scmp.ge.s32.totalorder %s333, 1
                %s338 = sphi %s324, %s324
                %s339 = sphi %s322, %s322
              $region71: #{tpu_custom_call.1} parent=67 // loop_header_branch
                %336 = sbr.rel (%p334) target = $region75
              $region72: #{tpu_custom_call.1} parent=67 // loop_body
                %v340 = vld [vmem:[%s338] sm:$0xf]
                %341 = vst [vmem:[%s339] sm:$0xf] %v340
                %v342 = vld [vmem:[%s338 + $0x8] sm:$0xf]
                %343 = vst [vmem:[%s339 + $0x4] sm:$0xf] %v342
                %v344 = vld [vmem:[%s338 + $0x10] sm:$0xf]
                %345 = vst [vmem:[%s339 + $0x8] sm:$0xf] %v344
                %v346 = vld [vmem:[%s338 + $0x18] sm:$0xf]
                %347 = vst [vmem:[%s339 + $0xc] sm:$0xf] %v346
                %v348 = vld [vmem:[%s338 + $0x20] sm:$0xf]
                %349 = vst [vmem:[%s339 + $0x10] sm:$0xf] %v348
                %v350 = vld [vmem:[%s338 + $0x28] sm:$0xf]
                %351 = vst [vmem:[%s339 + $0x14] sm:$0xf] %v350
                %v352 = vld [vmem:[%s338 + $0x30] sm:$0xf]
                %353 = vst [vmem:[%s339 + $0x18] sm:$0xf] %v352
                %v354 = vld [vmem:[%s338 + $0x38] sm:$0xf]
                %355 = vst [vmem:[%s339 + $0x1c] sm:$0xf] %v354
                %v356 = vld [vmem:[%s338 + $0x40] sm:$0xf]
                %357 = vst [vmem:[%s339 + $0x20] sm:$0xf] %v356
                %v358 = vld [vmem:[%s338 + $0x48] sm:$0xf]
                %359 = vst [vmem:[%s339 + $0x24] sm:$0xf] %v358
                %v360 = vld [vmem:[%s338 + $0x50] sm:$0xf]
                %361 = vst [vmem:[%s339 + $0x28] sm:$0xf] %v360
                %v362 = vld [vmem:[%s338 + $0x58] sm:$0xf]
                %363 = vst [vmem:[%s339 + $0x2c] sm:$0xf] %v362
                %v364 = vld [vmem:[%s338 + $0x60] sm:$0xf]
                %365 = vst [vmem:[%s339 + $0x30] sm:$0xf] %v364
                %v366 = vld [vmem:[%s338 + $0x68] sm:$0xf]
                %367 = vst [vmem:[%s339 + $0x34] sm:$0xf] %v366
                %v368 = vld [vmem:[%s338 + $0x70] sm:$0xf]
                %369 = vst [vmem:[%s339 + $0x38] sm:$0xf] %v368
                %v370 = vld [vmem:[%s338 + $0x78] sm:$0xf]
                %371 = vst [vmem:[%s339 + $0x3c] sm:$0xf] %v370
              $region73: #{tpu_custom_call.1} parent=67 // loop_footer
                %s337 = sadd.s32 1, %s333
              $region74: #{tpu_custom_call.1} parent=67 // loop_footer_branch
                %332 = sbr.rel target = $region70
              $region75: #{tpu_custom_call.1} parent=67 // loop_exit
                _
            $region68: #{tpu_custom_call.1} parent=59 // pred_fallthru
              _
          $region60: #{tpu_custom_call.1} parent=55 // pred_fallthru
            _
          %423 = vnop
        $region56: #{tpu_custom_call.1} parent=51 // pred_fallthru
          _
      $region52: #{tpu_custom_call.1} parent=5 // pred_fallthru
        _
      %p424 = scmp.le.s32.totalorder 1, %s19
      %p425 = scmp.lt.s32.totalorder %s19, 3
      %p426 = pnand %p424, %p425
      %p427 = pneg %p426
      // Predicated region
      $region94: #{tpu_custom_call.1} parent=5 // pred_check
        _
      $region95: #{tpu_custom_call.1} parent=5 // pred_check_branch
        %429 = sbr.rel (%p426) target = $region97
      $region96: #{tpu_custom_call.1} parent=5 // pred_region
        %s430 = ssub.s32 %s19, 1
        %s431 = sand.u32 %s32, 1
        %s432 = sand.u32 %s32, 1
        %s433 = smul.addr %s432, 64
        %s434 = scalar_lea.vmem [#allocation3], %s433
        // Predicated region
        $region98: #{tpu_custom_call.1} parent=96 // pred_check
          %p435 = pneg %p45
        $region99: #{tpu_custom_call.1} parent=96 // pred_check_branch
          %437 = sbr.rel (%p435) target = $region101
        $region100: #{tpu_custom_call.1} parent=96 // pred_region
          _
        $region101: #{tpu_custom_call.1} parent=96 // pred_fallthru
          _
        // Predicated region
        $region102: #{tpu_custom_call.1} parent=96 // pred_check
          %p438 = pneg %p171
        $region103: #{tpu_custom_call.1} parent=96 // pred_check_branch
          %440 = sbr.rel (%p438) target = $region105
        $region104: #{tpu_custom_call.1} parent=96 // pred_region
          %441 = dma.done [#allocation5], 32768
        $region105: #{tpu_custom_call.1} parent=96 // pred_fallthru
          _
        %s442 = sand.u32 %s32, 1
        %s443 = sand.u32 %s32, 1
        %s444 = smul.addr %s443, 64
        %s445 = scalar_lea.vmem [#allocation3], %s444
        %p446 = pneg %p45
        %p447 = pneg %p42
        %p448 = pneg %p66
        %p449 = pneg %p63
        %p450 = pneg %p87
        %p451 = pneg %p84
        %p452 = pneg %p108
        %p453 = pneg %p105
        %p454 = pneg %p129
        %p455 = pneg %p126
        %p456 = pneg %p150
        %p457 = pneg %p147
        %p458 = pneg %p171
        %p459 = pneg %p168
        %p460 = pneg %p192
        %p461 = pneg %p189
        %p462 = pneg %p213
        %p463 = pneg %p210
        %p464 = pneg %p234
        %p465 = pneg %p231
        %p466 = pneg %p260
        %p467 = pneg %p257
        %p468 = scmp.lt.s32.totalorder %s24, 1
        %s469 = scalar_select %p468, %s24, 1
        %s470 = smul.addr %s469, 8
        %s471 = scalar_lea.vmem %s10, %s470
        %p472 = scmp.lt.s32.totalorder %s24, 1
        %s473 = scalar_select %p472, %s24, 1
        %s474 = smul.addr %s473, 8
        %s475 = scalar_lea.vmem %s10, %s474
        %v477 = vld [vmem:[%s434] sm:$0xf]
        %v478 = vld [vmem:[%s434 + $0x4] sm:$0xf]
        %v479 = vld [vmem:[%s434 + $0x8] sm:$0xf]
        %v480 = vld [vmem:[%s434 + $0xc] sm:$0xf]
        %v481 = vld [vmem:[%s434 + $0x10] sm:$0xf]
        %v482 = vld [vmem:[%s434 + $0x14] sm:$0xf]
        %v483 = vld [vmem:[%s434 + $0x18] sm:$0xf]
        %v484 = vld [vmem:[%s434 + $0x1c] sm:$0xf]
        %v485 = vld [vmem:[%s434 + $0x20] sm:$0xf]
        %v486 = vld [vmem:[%s434 + $0x24] sm:$0xf]
        %v487 = vld [vmem:[%s434 + $0x28] sm:$0xf]
        %v488 = vld [vmem:[%s434 + $0x2c] sm:$0xf]
        %v489 = vld [vmem:[%s434 + $0x30] sm:$0xf]
        %v490 = vld [vmem:[%s434 + $0x34] sm:$0xf]
        %v491 = vld [vmem:[%s434 + $0x38] sm:$0xf]
        %v492 = vld [vmem:[%s434 + $0x3c] sm:$0xf]
        %v493 = vld [vmem:[%s1] sm:$0xf]
        %v494 = vld [vmem:[%s1 + $0x4] sm:$0xf]
        %v495 = vld [vmem:[%s1 + $0x8] sm:$0xf]
        %v496 = vld [vmem:[%s1 + $0xc] sm:$0xf]
        %v497 = vld [vmem:[%s1 + $0x10] sm:$0xf]
        %v498 = vld [vmem:[%s1 + $0x14] sm:$0xf]
        %v499 = vld [vmem:[%s1 + $0x18] sm:$0xf]
        %v500 = vld [vmem:[%s1 + $0x1c] sm:$0xf]
        %v501 = vld [vmem:[%s1 + $0x20] sm:$0xf]
        %v502 = vld [vmem:[%s1 + $0x24] sm:$0xf]
        %v503 = vld [vmem:[%s1 + $0x28] sm:$0xf]
        %v504 = vld [vmem:[%s1 + $0x2c] sm:$0xf]
        %v505 = vld [vmem:[%s1 + $0x30] sm:$0xf]
        %v506 = vld [vmem:[%s1 + $0x34] sm:$0xf]
        %v507 = vld [vmem:[%s1 + $0x38] sm:$0xf]
        %v508 = vld [vmem:[%s1 + $0x3c] sm:$0xf]
        %v509 = vld [vmem:[%s2] sm:$0x7]
        %v510 = vld [vmem:[%s3] sm:$0x1]
        %v512 = vlaneseq
        %v513 = vshrl.u32 %v512, 7
        %v514 = vsub.s32 0, %v513
        %v515 = vrot.slane %v510, %v514
        %v533 = vunpack.c.l.b16 %v477
        %v534 = vunpack.c.l.b16 %v478
        %v535 = vunpack.c.l.b16 %v479
        %v536 = vunpack.c.l.b16 %v480
        %v537 = vunpack.c.l.b16 %v481
        %v538 = vunpack.c.l.b16 %v482
        %v539 = vunpack.c.l.b16 %v483
        %v540 = vunpack.c.l.b16 %v484
        %v541 = vunpack.c.l.b16 %v485
        %v542 = vunpack.c.l.b16 %v486
        %v543 = vunpack.c.l.b16 %v487
        %v544 = vunpack.c.l.b16 %v488
        %v545 = vunpack.c.l.b16 %v489
        %v546 = vunpack.c.l.b16 %v490
        %v547 = vunpack.c.l.b16 %v491
        %v548 = vunpack.c.l.b16 %v492
        %v549 = vpack.c.b16 %v534, %v533
        %v550 = vpack.c.b16 %v536, %v535
        %v551 = vpack.c.b16 %v538, %v537
        %v552 = vpack.c.b16 %v540, %v539
        %v553 = vpack.c.b16 %v542, %v541
        %v554 = vpack.c.b16 %v544, %v543
        %v555 = vpack.c.b16 %v546, %v545
        %v556 = vpack.c.b16 %v548, %v547
        %vm557 = vcmask 48128
        %v559 = vsel %vm557, %v549, 0
        %v562 = vsel %vm557, %v550, 0
        %v565 = vsel %vm557, %v551, 0
        %v568 = vsel %vm557, %v552, 0
        %v571 = vsel %vm557, %v553, 0
        %v574 = vsel %vm557, %v554, 0
        %v577 = vsel %vm557, %v555, 0
        %v580 = vsel %vm557, %v556, 0
        %vm582 = vcmask 1042432
        %v584 = vsel %vm582, %v509, 0
        %586 = vmatprep.subr.bf16.mxu0 0
        %587 = vmatpush1.bf16.msra.mxu0 %v584
        %588 = vmatprep.subr.bf16.mxu0 0
        %589 = vmatpush1.bf16.msra.mxu0 0
        %590 = vmatprep.subr.bf16.mxu0 0
        %591 = vmatpush1.bf16.msra.mxu0 0
        %592 = vmatprep.subr.bf16.mxu0 0
        %593 = vmatpush1.bf16.msra.mxu0 0
        %594 = vmatprep.subr.bf16.mxu0 0
        %595 = vmatpush1.bf16.msra.mxu0 0
        %596 = vmatprep.subr.bf16.mxu0 0
        %597 = vmatpush1.bf16.msra.mxu0 0
        %598 = vmatprep.subr.bf16.mxu0 0
        %599 = vmatpush1.bf16.msra.mxu0 0
        %600 = vmatprep.subr.bf16.mxu0 0
        %601 = vmatpush1.bf16.msra.mxu0 0
        %602 = vmatprep.subr.bf16.mxu0 0
        %603 = vmatpush1.bf16.msra.mxu0 0
        %604 = vmatprep.subr.bf16.mxu0 0
        %605 = vmatpush1.bf16.msra.mxu0 0
        %606 = vmatprep.subr.bf16.mxu0 0
        %607 = vmatpush1.bf16.msra.mxu0 0
        %608 = vmatprep.subr.bf16.mxu0 0
        %609 = vmatpush1.bf16.msra.mxu0 0
        %610 = vmatprep.subr.bf16.mxu0 0
        %611 = vmatpush1.bf16.msra.mxu0 0
        %612 = vmatprep.subr.bf16.mxu0 0
        %613 = vmatpush1.bf16.msra.mxu0 0
        %614 = vmatprep.subr.bf16.mxu0 0
        %615 = vmatpush1.bf16.msra.mxu0 0
        %616 = vmatprep.subr.bf16.mxu0 0
        %617 = vmatpush1.bf16.msra.mxu0 0
        %618 = vmatprep.mubr.bf16.mxu0 0
        %619 = vmatmul.mubr.bf16.gmra.mrb[0].mxu0 %v559
        %v620 = vpop.f32.mrb[0].mxu0
        %v621 = vadd.f32 %v515, %v620
        %v622 = vpop.f32.mrb[0].mxu0
        %v623 = vpop.f32.mrb[0].mxu0
        %v624 = vadd.f32 %v515, %v623
        %v625 = vpop.f32.mrb[0].mxu0
        %626 = vmatprep.mubr.bf16.mxu0 0
        %627 = vmatmul.mubr.bf16.gmra.mrb[0].mxu0 %v562
        %v628 = vpop.f32.mrb[0].mxu0
        %v629 = vadd.f32 %v515, %v628
        %v630 = vpop.f32.mrb[0].mxu0
        %v631 = vpop.f32.mrb[0].mxu0
        %v632 = vadd.f32 %v515, %v631
        %v633 = vpop.f32.mrb[0].mxu0
        %634 = vmatprep.mubr.bf16.mxu0 0
        %635 = vmatmul.mubr.bf16.gmra.mrb[0].mxu0 %v565
        %v636 = vpop.f32.mrb[0].mxu0
        %v637 = vadd.f32 %v515, %v636
        %v638 = vpop.f32.mrb[0].mxu0
        %v639 = vpop.f32.mrb[0].mxu0
        %v640 = vadd.f32 %v515, %v639
        %v641 = vpop.f32.mrb[0].mxu0
        %642 = vmatprep.mubr.bf16.mxu0 0
        %643 = vmatmul.mubr.bf16.gmra.mrb[0].mxu0 %v568
        %v644 = vpop.f32.mrb[0].mxu0
        %v645 = vadd.f32 %v515, %v644
        %v646 = vpop.f32.mrb[0].mxu0
        %v647 = vpop.f32.mrb[0].mxu0
        %v648 = vadd.f32 %v515, %v647
        %v649 = vpop.f32.mrb[0].mxu0
        %650 = vmatprep.mubr.bf16.mxu0 0
        %651 = vmatmul.mubr.bf16.gmra.mrb[0].mxu0 %v571
        %v652 = vpop.f32.mrb[0].mxu0
        %v653 = vadd.f32 %v515, %v652
        %v654 = vpop.f32.mrb[0].mxu0
        %v655 = vpop.f32.mrb[0].mxu0
        %v656 = vadd.f32 %v515, %v655
        %v657 = vpop.f32.mrb[0].mxu0
        %658 = vmatprep.mubr.bf16.mxu0 0
        %659 = vmatmul.mubr.bf16.gmra.mrb[0].mxu0 %v574
        %v660 = vpop.f32.mrb[0].mxu0
        %v661 = vadd.f32 %v515, %v660
        %v662 = vpop.f32.mrb[0].mxu0
        %v663 = vpop.f32.mrb[0].mxu0
        %v664 = vadd.f32 %v515, %v663
        %v665 = vpop.f32.mrb[0].mxu0
        %666 = vmatprep.mubr.bf16.mxu0 0
        %667 = vmatmul.mubr.bf16.gmra.mrb[0].mxu0 %v577
        %v668 = vpop.f32.mrb[0].mxu0
        %v669 = vadd.f32 %v515, %v668
        %v670 = vpop.f32.mrb[0].mxu0
        %v671 = vpop.f32.mrb[0].mxu0
        %v672 = vadd.f32 %v515, %v671
        %v673 = vpop.f32.mrb[0].mxu0
        %674 = vmatprep.mubr.bf16.mxu0 0
        %675 = vmatmul.mubr.bf16.gmra.mrb[0].mxu0 %v580
        %v676 = vpop.f32.mrb[0].mxu0
        %v677 = vadd.f32 %v515, %v676
        %v678 = vpop.f32.mrb[0].mxu0
        %v679 = vpop.f32.mrb[0].mxu0
        %v680 = vadd.f32 %v515, %v679
        %v681 = vpop.f32.mrb[0].mxu0
        %682 = vdwg.mxu0
        %v683 = vpack.c.bf16 %v624, %v621
        %v684 = vpack.c.bf16 %v632, %v629
        %v685 = vpack.c.bf16 %v640, %v637
        %v686 = vpack.c.bf16 %v648, %v645
        %v687 = vpack.c.bf16 %v656, %v653
        %v688 = vpack.c.bf16 %v664, %v661
        %v689 = vpack.c.bf16 %v672, %v669
        %v690 = vpack.c.bf16 %v680, %v677
        %v707 = vunpack.c.l.b16 %v493
        %v708 = vunpack.c.l.b16 %v494
        %v709 = vunpack.c.l.b16 %v495
        %v710 = vunpack.c.l.b16 %v496
        %v711 = vunpack.c.l.b16 %v497
        %v712 = vunpack.c.l.b16 %v498
        %v713 = vunpack.c.l.b16 %v499
        %v714 = vunpack.c.l.b16 %v500
        %v715 = vunpack.c.l.b16 %v501
        %v716 = vunpack.c.l.b16 %v502
        %v717 = vunpack.c.l.b16 %v503
        %v718 = vunpack.c.l.b16 %v504
        %v719 = vunpack.c.l.b16 %v505
        %v720 = vunpack.c.l.b16 %v506
        %v721 = vunpack.c.l.b16 %v507
        %v722 = vunpack.c.l.b16 %v508
        %v723 = vpack.c.b16 %v708, %v707
        %v724 = vpack.c.b16 %v710, %v709
        %v725 = vpack.c.b16 %v712, %v711
        %v726 = vpack.c.b16 %v714, %v713
        %v727 = vpack.c.b16 %v716, %v715
        %v728 = vpack.c.b16 %v718, %v717
        %v729 = vpack.c.b16 %v720, %v719
        %v730 = vpack.c.b16 %v722, %v721
        %739 = vmatprep.subr.bf16.mxu0 0
        %740 = vmatpush1.bf16.msra.mxu0 %v683
        %741 = vmatprep.subr.bf16.mxu0 0
        %742 = vmatpush1.bf16.msra.mxu0 %v684
        %743 = vmatprep.subr.bf16.mxu0 0
        %744 = vmatpush1.bf16.msra.mxu0 %v685
        %745 = vmatprep.subr.bf16.mxu0 0
        %746 = vmatpush1.bf16.msra.mxu0 %v686
        %747 = vmatprep.subr.bf16.mxu0 0
        %748 = vmatpush1.bf16.msra.mxu0 %v687
        %749 = vmatprep.subr.bf16.mxu0 0
        %750 = vmatpush1.bf16.msra.mxu0 %v688
        %751 = vmatprep.subr.bf16.mxu0 0
        %752 = vmatpush1.bf16.msra.mxu0 %v689
        %753 = vmatprep.subr.bf16.mxu0 0
        %754 = vmatpush1.bf16.msra.mxu0 %v690
        %755 = vmatprep.subr.bf16.mxu0 0
        %756 = vmatpush1.bf16.msra.mxu0 0
        %757 = vmatprep.subr.bf16.mxu0 0
        %758 = vmatpush1.bf16.msra.mxu0 0
        %759 = vmatprep.subr.bf16.mxu0 0
        %760 = vmatpush1.bf16.msra.mxu0 0
        %761 = vmatprep.subr.bf16.mxu0 0
        %762 = vmatpush1.bf16.msra.mxu0 0
        %763 = vmatprep.subr.bf16.mxu0 0
        %764 = vmatpush1.bf16.msra.mxu0 0
        %765 = vmatprep.subr.bf16.mxu0 0
        %766 = vmatpush1.bf16.msra.mxu0 0
        %767 = vmatprep.subr.bf16.mxu0 0
        %768 = vmatpush1.bf16.msra.mxu0 0
        %769 = vmatprep.subr.bf16.mxu0 0
        %770 = vmatpush1.bf16.msra.mxu0 0
        %771 = vmatprep.mubr.bf16.mxu0 0
        %772 = vmatmul.mubr.bf16.gmra.mrb[0].mxu0 %v723
        %v773 = vpop.f32.mrb[0].mxu0
        %v774 = vadd.f32 0.0, %v773
        %v775 = vpop.f32.mrb[0].mxu0
        %v776 = vpop.f32.mrb[0].mxu0
        %v777 = vadd.f32 0.0, %v776
        %v778 = vpop.f32.mrb[0].mxu0
        %779 = vmatprep.mubr.bf16.mxu0 0
        %780 = vmatmul.mubr.bf16.gmra.mrb[0].mxu0 %v724
        %v781 = vpop.f32.mrb[0].mxu0
        %v782 = vadd.f32 0.0, %v781
        %v783 = vpop.f32.mrb[0].mxu0
        %v784 = vpop.f32.mrb[0].mxu0
        %v785 = vadd.f32 0.0, %v784
        %v786 = vpop.f32.mrb[0].mxu0
        %787 = vmatprep.mubr.bf16.mxu0 0
        %788 = vmatmul.mubr.bf16.gmra.mrb[0].mxu0 %v725
        %v789 = vpop.f32.mrb[0].mxu0
        %v790 = vadd.f32 0.0, %v789
        %v791 = vpop.f32.mrb[0].mxu0
        %v792 = vpop.f32.mrb[0].mxu0
        %v793 = vadd.f32 0.0, %v792
        %v794 = vpop.f32.mrb[0].mxu0
        %795 = vmatprep.mubr.bf16.mxu0 0
        %796 = vmatmul.mubr.bf16.gmra.mrb[0].mxu0 %v726
        %v797 = vpop.f32.mrb[0].mxu0
        %v798 = vadd.f32 0.0, %v797
        %v799 = vpop.f32.mrb[0].mxu0
        %v800 = vpop.f32.mrb[0].mxu0
        %v801 = vadd.f32 0.0, %v800
        %v802 = vpop.f32.mrb[0].mxu0
        %803 = vmatprep.mubr.bf16.mxu0 0
        %804 = vmatmul.mubr.bf16.gmra.mrb[0].mxu0 %v727
        %v805 = vpop.f32.mrb[0].mxu0
        %v806 = vadd.f32 0.0, %v805
        %v807 = vpop.f32.mrb[0].mxu0
        %v808 = vpop.f32.mrb[0].mxu0
        %v809 = vadd.f32 0.0, %v808
        %v810 = vpop.f32.mrb[0].mxu0
        %811 = vmatprep.mubr.bf16.mxu0 0
        %812 = vmatmul.mubr.bf16.gmra.mrb[0].mxu0 %v728
        %v813 = vpop.f32.mrb[0].mxu0
        %v814 = vadd.f32 0.0, %v813
        %v815 = vpop.f32.mrb[0].mxu0
        %v816 = vpop.f32.mrb[0].mxu0
        %v817 = vadd.f32 0.0, %v816
        %v818 = vpop.f32.mrb[0].mxu0
        %819 = vmatprep.mubr.bf16.mxu0 0
        %820 = vmatmul.mubr.bf16.gmra.mrb[0].mxu0 %v729
        %v821 = vpop.f32.mrb[0].mxu0
        %v822 = vadd.f32 0.0, %v821
        %v823 = vpop.f32.mrb[0].mxu0
        %v824 = vpop.f32.mrb[0].mxu0
        %v825 = vadd.f32 0.0, %v824
        %v826 = vpop.f32.mrb[0].mxu0
        %827 = vmatprep.mubr.bf16.mxu0 0
        %828 = vmatmul.mubr.bf16.gmra.mrb[0].mxu0 %v730
        %v829 = vpop.f32.mrb[0].mxu0
        %v830 = vadd.f32 0.0, %v829
        %v831 = vpop.f32.mrb[0].mxu0
        %v832 = vpop.f32.mrb[0].mxu0
        %v833 = vadd.f32 0.0, %v832
        %v834 = vpop.f32.mrb[0].mxu0
        %835 = vdwg.mxu0
        %852 = vrot.lane.b32.xlu0 %v774, 64
        %v853 = vpop.permute.xlu0 %852
        %854 = vrot.lane.b32.xlu0 %v777, 64
        %v855 = vpop.permute.xlu0 %854
        %856 = vrot.lane.b32.xlu0 %v782, 64
        %v857 = vpop.permute.xlu0 %856
        %858 = vrot.lane.b32.xlu0 %v785, 64
        %v859 = vpop.permute.xlu0 %858
        %860 = vrot.lane.b32.xlu0 %v790, 64
        %v861 = vpop.permute.xlu0 %860
        %862 = vrot.lane.b32.xlu0 %v793, 64
        %v863 = vpop.permute.xlu0 %862
        %864 = vrot.lane.b32.xlu0 %v798, 64
        %v865 = vpop.permute.xlu0 %864
        %866 = vrot.lane.b32.xlu0 %v801, 64
        %v867 = vpop.permute.xlu0 %866
        %868 = vrot.lane.b32.xlu0 %v806, 64
        %v869 = vpop.permute.xlu0 %868
        %870 = vrot.lane.b32.xlu0 %v809, 64
        %v871 = vpop.permute.xlu0 %870
        %872 = vrot.lane.b32.xlu0 %v814, 64
        %v873 = vpop.permute.xlu0 %872
        %874 = vrot.lane.b32.xlu0 %v817, 64
        %v875 = vpop.permute.xlu0 %874
        %876 = vrot.lane.b32.xlu0 %v822, 64
        %v877 = vpop.permute.xlu0 %876
        %878 = vrot.lane.b32.xlu0 %v825, 64
        %v879 = vpop.permute.xlu0 %878
        %880 = vrot.lane.b32.xlu0 %v830, 64
        %v881 = vpop.permute.xlu0 %880
        %882 = vrot.lane.b32.xlu0 %v833, 64
        %v883 = vpop.permute.xlu0 %882
        %vm900 = vcmask 523264
        %v901 = vsel %vm900, %v621, %v853
        %v902 = vsel %vm900, %v624, %v855
        %v903 = vsel %vm900, %v629, %v857
        %v904 = vsel %vm900, %v632, %v859
        %v905 = vsel %vm900, %v637, %v861
        %v906 = vsel %vm900, %v640, %v863
        %v907 = vsel %vm900, %v645, %v865
        %v908 = vsel %vm900, %v648, %v867
        %v909 = vsel %vm900, %v653, %v869
        %v910 = vsel %vm900, %v656, %v871
        %v911 = vsel %vm900, %v661, %v873
        %v912 = vsel %vm900, %v664, %v875
        %v913 = vsel %vm900, %v669, %v877
        %v914 = vsel %vm900, %v672, %v879
        %v915 = vsel %vm900, %v677, %v881
        %v916 = vsel %vm900, %v680, %v883
        %v917 = vpack.c.bf16 %v902, %v901
        %v918 = vpack.c.bf16 %v904, %v903
        %v919 = vpack.c.bf16 %v906, %v905
        %v920 = vpack.c.bf16 %v908, %v907
        %v921 = vpack.c.bf16 %v910, %v909
        %v922 = vpack.c.bf16 %v912, %v911
        %v923 = vpack.c.bf16 %v914, %v913
        %v924 = vpack.c.bf16 %v916, %v915
        %v925 = vld [vmem:[%s4] sm:$0xf]
        %v926 = vld [vmem:[%s4 + $0x4] sm:$0xf]
        %v927 = vld [vmem:[%s4 + $0x8] sm:$0xf]
        %v928 = vld [vmem:[%s4 + $0xc] sm:$0xf]
        %v929 = vld [vmem:[%s4 + $0x10] sm:$0xf]
        %v930 = vld [vmem:[%s4 + $0x14] sm:$0xf]
        %v931 = vld [vmem:[%s4 + $0x18] sm:$0xf]
        %v932 = vld [vmem:[%s4 + $0x1c] sm:$0xf]
        %v933 = vld [vmem:[%s4 + $0x20] sm:$0xf]
        %v934 = vld [vmem:[%s4 + $0x24] sm:$0xf]
        %v935 = vld [vmem:[%s4 + $0x28] sm:$0xf]
        %v936 = vld [vmem:[%s4 + $0x2c] sm:$0xf]
        %v937 = vld [vmem:[%s4 + $0x30] sm:$0xf]
        %v938 = vld [vmem:[%s4 + $0x34] sm:$0xf]
        %v939 = vld [vmem:[%s4 + $0x38] sm:$0xf]
        %v940 = vld [vmem:[%s4 + $0x3c] sm:$0xf]
        %v941 = vld [vmem:[%s5] sm:$0x1]
        %v942 = vlaneseq
        %v943 = vshrl.u32 %v942, 7
        %v944 = vsub.s32 0, %v943
        %v945 = vrot.slane %v941, %v944
        %v962 = vunpack.c.l.b16 %v925
        %v963 = vunpack.c.l.b16 %v926
        %v964 = vunpack.c.l.b16 %v927
        %v965 = vunpack.c.l.b16 %v928
        %v966 = vunpack.c.l.b16 %v929
        %v967 = vunpack.c.l.b16 %v930
        %v968 = vunpack.c.l.b16 %v931
        %v969 = vunpack.c.l.b16 %v932
        %v970 = vunpack.c.l.b16 %v933
        %v971 = vunpack.c.l.b16 %v934
        %v972 = vunpack.c.l.b16 %v935
        %v973 = vunpack.c.l.b16 %v936
        %v974 = vunpack.c.l.b16 %v937
        %v975 = vunpack.c.l.b16 %v938
        %v976 = vunpack.c.l.b16 %v939
        %v977 = vunpack.c.l.b16 %v940
        %v978 = vpack.c.b16 %v963, %v962
        %v979 = vpack.c.b16 %v965, %v964
        %v980 = vpack.c.b16 %v967, %v966
        %v981 = vpack.c.b16 %v969, %v968
        %v982 = vpack.c.b16 %v971, %v970
        %v983 = vpack.c.b16 %v973, %v972
        %v984 = vpack.c.b16 %v975, %v974
        %v985 = vpack.c.b16 %v977, %v976
        %994 = vmatprep.subr.bf16.mxu0 0
        %995 = vmatpush1.bf16.msra.mxu0 %v978
        %996 = vmatprep.subr.bf16.mxu0 0
        %997 = vmatpush1.bf16.msra.mxu0 %v979
        %998 = vmatprep.subr.bf16.mxu0 0
        %999 = vmatpush1.bf16.msra.mxu0 %v980
        %1000 = vmatprep.subr.bf16.mxu0 0
        %1001 = vmatpush1.bf16.msra.mxu0 %v981
        %1002 = vmatprep.subr.bf16.mxu0 0
        %1003 = vmatpush1.bf16.msra.mxu0 %v982
        %1004 = vmatprep.subr.bf16.mxu0 0
        %1005 = vmatpush1.bf16.msra.mxu0 %v983
        %1006 = vmatprep.subr.bf16.mxu0 0
        %1007 = vmatpush1.bf16.msra.mxu0 %v984
        %1008 = vmatprep.subr.bf16.mxu0 0
        %1009 = vmatpush1.bf16.msra.mxu0 %v985
        %1010 = vmatprep.subr.bf16.mxu0 0
        %1011 = vmatpush1.bf16.msra.mxu0 0
        %1012 = vmatprep.subr.bf16.mxu0 0
        %1013 = vmatpush1.bf16.msra.mxu0 0
        %1014 = vmatprep.subr.bf16.mxu0 0
        %1015 = vmatpush1.bf16.msra.mxu0 0
        %1016 = vmatprep.subr.bf16.mxu0 0
        %1017 = vmatpush1.bf16.msra.mxu0 0
        %1018 = vmatprep.subr.bf16.mxu0 0
        %1019 = vmatpush1.bf16.msra.mxu0 0
        %1020 = vmatprep.subr.bf16.mxu0 0
        %1021 = vmatpush1.bf16.msra.mxu0 0
        %1022 = vmatprep.subr.bf16.mxu0 0
        %1023 = vmatpush1.bf16.msra.mxu0 0
        %1024 = vmatprep.subr.bf16.mxu0 0
        %1025 = vmatpush1.bf16.msra.mxu0 0
        %1026 = vmatprep.mubr.bf16.mxu0 0
        %1027 = vmatmul.mubr.bf16.gmra.mrb[0].mxu0 %v917
        %v1028 = vpop.f32.mrb[0].mxu0
        %v1029 = vadd.f32 %v945, %v1028
        %v1030 = vpop.f32.mrb[0].mxu0
        %v1031 = vpop.f32.mrb[0].mxu0
        %v1032 = vadd.f32 %v945, %v1031
        %v1033 = vpop.f32.mrb[0].mxu0
        %1034 = vmatprep.mubr.bf16.mxu0 0
        %1035 = vmatmul.mubr.bf16.gmra.mrb[0].mxu0 %v918
        %v1036 = vpop.f32.mrb[0].mxu0
        %v1037 = vadd.f32 %v945, %v1036
        %v1038 = vpop.f32.mrb[0].mxu0
        %v1039 = vpop.f32.mrb[0].mxu0
        %v1040 = vadd.f32 %v945, %v1039
        %v1041 = vpop.f32.mrb[0].mxu0
        %1042 = vmatprep.mubr.bf16.mxu0 0
        %1043 = vmatmul.mubr.bf16.gmra.mrb[0].mxu0 %v919
        %v1044 = vpop.f32.mrb[0].mxu0
        %v1045 = vadd.f32 %v945, %v1044
        %v1046 = vpop.f32.mrb[0].mxu0
        %v1047 = vpop.f32.mrb[0].mxu0
        %v1048 = vadd.f32 %v945, %v1047
        %v1049 = vpop.f32.mrb[0].mxu0
        %1050 = vmatprep.mubr.bf16.mxu0 0
        %1051 = vmatmul.mubr.bf16.gmra.mrb[0].mxu0 %v920
        %v1052 = vpop.f32.mrb[0].mxu0
        %v1053 = vadd.f32 %v945, %v1052
        %v1054 = vpop.f32.mrb[0].mxu0
        %v1055 = vpop.f32.mrb[0].mxu0
        %v1056 = vadd.f32 %v945, %v1055
        %v1057 = vpop.f32.mrb[0].mxu0
        %1058 = vmatprep.mubr.bf16.mxu0 0
        %1059 = vmatmul.mubr.bf16.gmra.mrb[0].mxu0 %v921
        %v1060 = vpop.f32.mrb[0].mxu0
        %v1061 = vadd.f32 %v945, %v1060
        %v1062 = vpop.f32.mrb[0].mxu0
        %v1063 = vpop.f32.mrb[0].mxu0
        %v1064 = vadd.f32 %v945, %v1063
        %v1065 = vpop.f32.mrb[0].mxu0
        %1066 = vmatprep.mubr.bf16.mxu0 0
        %1067 = vmatmul.mubr.bf16.gmra.mrb[0].mxu0 %v922
        %v1068 = vpop.f32.mrb[0].mxu0
        %v1069 = vadd.f32 %v945, %v1068
        %v1070 = vpop.f32.mrb[0].mxu0
        %v1071 = vpop.f32.mrb[0].mxu0
        %v1072 = vadd.f32 %v945, %v1071
        %v1073 = vpop.f32.mrb[0].mxu0
        %1074 = vmatprep.mubr.bf16.mxu0 0
        %1075 = vmatmul.mubr.bf16.gmra.mrb[0].mxu0 %v923
        %v1076 = vpop.f32.mrb[0].mxu0
        %v1077 = vadd.f32 %v945, %v1076
        %v1078 = vpop.f32.mrb[0].mxu0
        %v1079 = vpop.f32.mrb[0].mxu0
        %v1080 = vadd.f32 %v945, %v1079
        %v1081 = vpop.f32.mrb[0].mxu0
        %1082 = vmatprep.mubr.bf16.mxu0 0
        %1083 = vmatmul.mubr.bf16.gmra.mrb[0].mxu0 %v924
        %v1084 = vpop.f32.mrb[0].mxu0
        %v1085 = vadd.f32 %v945, %v1084
        %v1086 = vpop.f32.mrb[0].mxu0
        %v1087 = vpop.f32.mrb[0].mxu0
        %v1088 = vadd.f32 %v945, %v1087
        %v1089 = vpop.f32.mrb[0].mxu0
        %1090 = vdwg.mxu0
        %v1091 = vmax.f32 %v1029, 0.0
        %v1092 = vmax.f32 %v1032, 0.0
        %v1093 = vmax.f32 %v1037, 0.0
        %v1094 = vmax.f32 %v1040, 0.0
        %v1095 = vmax.f32 %v1045, 0.0
        %v1096 = vmax.f32 %v1048, 0.0
        %v1097 = vmax.f32 %v1053, 0.0
        %v1098 = vmax.f32 %v1056, 0.0
        %v1099 = vmax.f32 %v1061, 0.0
        %v1100 = vmax.f32 %v1064, 0.0
        %v1101 = vmax.f32 %v1069, 0.0
        %v1102 = vmax.f32 %v1072, 0.0
        %v1103 = vmax.f32 %v1077, 0.0
        %v1104 = vmax.f32 %v1080, 0.0
        %v1105 = vmax.f32 %v1085, 0.0
        %v1106 = vmax.f32 %v1088, 0.0
        %v1107 = vpack.c.bf16 %v1092, %v1091
        %v1108 = vpack.c.bf16 %v1094, %v1093
        %v1109 = vpack.c.bf16 %v1096, %v1095
        %v1110 = vpack.c.bf16 %v1098, %v1097
        %v1111 = vpack.c.bf16 %v1100, %v1099
        %v1112 = vpack.c.bf16 %v1102, %v1101
        %v1113 = vpack.c.bf16 %v1104, %v1103
        %v1114 = vpack.c.bf16 %v1106, %v1105
        %1115 = vmatprep.subr.bf16.mxu0 0
        %1116 = vmatpush1.bf16.msra.mxu0 %v1107
        %1117 = vmatprep.subr.bf16.mxu0 0
        %1118 = vmatpush1.bf16.msra.mxu0 %v1108
        %1119 = vmatprep.subr.bf16.mxu0 0
        %1120 = vmatpush1.bf16.msra.mxu0 %v1109
        %1121 = vmatprep.subr.bf16.mxu0 0
        %1122 = vmatpush1.bf16.msra.mxu0 %v1110
        %1123 = vmatprep.subr.bf16.mxu0 0
        %1124 = vmatpush1.bf16.msra.mxu0 %v1111
        %1125 = vmatprep.subr.bf16.mxu0 0
        %1126 = vmatpush1.bf16.msra.mxu0 %v1112
        %1127 = vmatprep.subr.bf16.mxu0 0
        %1128 = vmatpush1.bf16.msra.mxu0 %v1113
        %1129 = vmatprep.subr.bf16.mxu0 0
        %1130 = vmatpush1.bf16.msra.mxu0 %v1114
        %1131 = vmatprep.subr.bf16.mxu0 0
        %1132 = vmatpush1.bf16.msra.mxu0 0
        %1133 = vmatprep.subr.bf16.mxu0 0
        %1134 = vmatpush1.bf16.msra.mxu0 0
        %1135 = vmatprep.subr.bf16.mxu0 0
        %1136 = vmatpush1.bf16.msra.mxu0 0
        %1137 = vmatprep.subr.bf16.mxu0 0
        %1138 = vmatpush1.bf16.msra.mxu0 0
        %1139 = vmatprep.subr.bf16.mxu0 0
        %1140 = vmatpush1.bf16.msra.mxu0 0
        %1141 = vmatprep.subr.bf16.mxu0 0
        %1142 = vmatpush1.bf16.msra.mxu0 0
        %1143 = vmatprep.subr.bf16.mxu0 0
        %1144 = vmatpush1.bf16.msra.mxu0 0
        %1145 = vmatprep.subr.bf16.mxu0 0
        %1146 = vmatpush1.bf16.msra.mxu0 0
        %1147 = vmatprep.mubr.bf16.mxu0 0
        %1148 = vmatmul.mubr.bf16.gmra.mrb[0].mxu0 %v723
        %v1149 = vpop.f32.mrb[0].mxu0
        %v1150 = vadd.f32 0.0, %v1149
        %v1151 = vpop.f32.mrb[0].mxu0
        %v1152 = vpop.f32.mrb[0].mxu0
        %v1153 = vadd.f32 0.0, %v1152
        %v1154 = vpop.f32.mrb[0].mxu0
        %1155 = vmatprep.mubr.bf16.mxu0 0
        %1156 = vmatmul.mubr.bf16.gmra.mrb[0].mxu0 %v724
        %v1157 = vpop.f32.mrb[0].mxu0
        %v1158 = vadd.f32 0.0, %v1157
        %v1159 = vpop.f32.mrb[0].mxu0
        %v1160 = vpop.f32.mrb[0].mxu0
        %v1161 = vadd.f32 0.0, %v1160
        %v1162 = vpop.f32.mrb[0].mxu0
        %1163 = vmatprep.mubr.bf16.mxu0 0
        %1164 = vmatmul.mubr.bf16.gmra.mrb[0].mxu0 %v725
        %v1165 = vpop.f32.mrb[0].mxu0
        %v1166 = vadd.f32 0.0, %v1165
        %v1167 = vpop.f32.mrb[0].mxu0
        %v1168 = vpop.f32.mrb[0].mxu0
        %v1169 = vadd.f32 0.0, %v1168
        %v1170 = vpop.f32.mrb[0].mxu0
        %1171 = vmatprep.mubr.bf16.mxu0 0
        %1172 = vmatmul.mubr.bf16.gmra.mrb[0].mxu0 %v726
        %v1173 = vpop.f32.mrb[0].mxu0
        %v1174 = vadd.f32 0.0, %v1173
        %v1175 = vpop.f32.mrb[0].mxu0
        %v1176 = vpop.f32.mrb[0].mxu0
        %v1177 = vadd.f32 0.0, %v1176
        %v1178 = vpop.f32.mrb[0].mxu0
        %1179 = vmatprep.mubr.bf16.mxu0 0
        %1180 = vmatmul.mubr.bf16.gmra.mrb[0].mxu0 %v727
        %v1181 = vpop.f32.mrb[0].mxu0
        %v1182 = vadd.f32 0.0, %v1181
        %v1183 = vpop.f32.mrb[0].mxu0
        %v1184 = vpop.f32.mrb[0].mxu0
        %v1185 = vadd.f32 0.0, %v1184
        %v1186 = vpop.f32.mrb[0].mxu0
        %1187 = vmatprep.mubr.bf16.mxu0 0
        %1188 = vmatmul.mubr.bf16.gmra.mrb[0].mxu0 %v728
        %v1189 = vpop.f32.mrb[0].mxu0
        %v1190 = vadd.f32 0.0, %v1189
        %v1191 = vpop.f32.mrb[0].mxu0
        %v1192 = vpop.f32.mrb[0].mxu0
        %v1193 = vadd.f32 0.0, %v1192
        %v1194 = vpop.f32.mrb[0].mxu0
        %1195 = vmatprep.mubr.bf16.mxu0 0
        %1196 = vmatmul.mubr.bf16.gmra.mrb[0].mxu0 %v729
        %v1197 = vpop.f32.mrb[0].mxu0
        %v1198 = vadd.f32 0.0, %v1197
        %v1199 = vpop.f32.mrb[0].mxu0
        %v1200 = vpop.f32.mrb[0].mxu0
        %v1201 = vadd.f32 0.0, %v1200
        %v1202 = vpop.f32.mrb[0].mxu0
        %1203 = vmatprep.mubr.bf16.mxu0 0
        %1204 = vmatmul.mubr.bf16.gmra.mrb[0].mxu0 %v730
        %v1205 = vpop.f32.mrb[0].mxu0
        %v1206 = vadd.f32 0.0, %v1205
        %v1207 = vpop.f32.mrb[0].mxu0
        %v1208 = vpop.f32.mrb[0].mxu0
        %v1209 = vadd.f32 0.0, %v1208
        %v1210 = vpop.f32.mrb[0].mxu0
        %1211 = vdwg.mxu0
        %1228 = vrot.lane.b32.xlu0 %v1150, 64
        %v1229 = vpop.permute.xlu0 %1228
        %1230 = vrot.lane.b32.xlu0 %v1153, 64
        %v1231 = vpop.permute.xlu0 %1230
        %1232 = vrot.lane.b32.xlu0 %v1158, 64
        %v1233 = vpop.permute.xlu0 %1232
        %1234 = vrot.lane.b32.xlu0 %v1161, 64
        %v1235 = vpop.permute.xlu0 %1234
        %1236 = vrot.lane.b32.xlu0 %v1166, 64
        %v1237 = vpop.permute.xlu0 %1236
        %1238 = vrot.lane.b32.xlu0 %v1169, 64
        %v1239 = vpop.permute.xlu0 %1238
        %1240 = vrot.lane.b32.xlu0 %v1174, 64
        %v1241 = vpop.permute.xlu0 %1240
        %1242 = vrot.lane.b32.xlu0 %v1177, 64
        %v1243 = vpop.permute.xlu0 %1242
        %1244 = vrot.lane.b32.xlu0 %v1182, 64
        %v1245 = vpop.permute.xlu0 %1244
        %1246 = vrot.lane.b32.xlu0 %v1185, 64
        %v1247 = vpop.permute.xlu0 %1246
        %1248 = vrot.lane.b32.xlu0 %v1190, 64
        %v1249 = vpop.permute.xlu0 %1248
        %1250 = vrot.lane.b32.xlu0 %v1193, 64
        %v1251 = vpop.permute.xlu0 %1250
        %1252 = vrot.lane.b32.xlu0 %v1198, 64
        %v1253 = vpop.permute.xlu0 %1252
        %1254 = vrot.lane.b32.xlu0 %v1201, 64
        %v1255 = vpop.permute.xlu0 %1254
        %1256 = vrot.lane.b32.xlu0 %v1206, 64
        %v1257 = vpop.permute.xlu0 %1256
        %1258 = vrot.lane.b32.xlu0 %v1209, 64
        %v1259 = vpop.permute.xlu0 %1258
        %v1276 = vsel %vm900, %v1091, %v1229
        %v1277 = vsel %vm900, %v1092, %v1231
        %v1278 = vsel %vm900, %v1093, %v1233
        %v1279 = vsel %vm900, %v1094, %v1235
        %v1280 = vsel %vm900, %v1095, %v1237
        %v1281 = vsel %vm900, %v1096, %v1239
        %v1282 = vsel %vm900, %v1097, %v1241
        %v1283 = vsel %vm900, %v1098, %v1243
        %v1284 = vsel %vm900, %v1099, %v1245
        %v1285 = vsel %vm900, %v1100, %v1247
        %v1286 = vsel %vm900, %v1101, %v1249
        %v1287 = vsel %vm900, %v1102, %v1251
        %v1288 = vsel %vm900, %v1103, %v1253
        %v1289 = vsel %vm900, %v1104, %v1255
        %v1290 = vsel %vm900, %v1105, %v1257
        %v1291 = vsel %vm900, %v1106, %v1259
        %v1292 = vpack.c.bf16 %v1277, %v1276
        %v1293 = vpack.c.bf16 %v1279, %v1278
        %v1294 = vpack.c.bf16 %v1281, %v1280
        %v1295 = vpack.c.bf16 %v1283, %v1282
        %v1296 = vpack.c.bf16 %v1285, %v1284
        %v1297 = vpack.c.bf16 %v1287, %v1286
        %v1298 = vpack.c.bf16 %v1289, %v1288
        %v1299 = vpack.c.bf16 %v1291, %v1290
        %s1300 = scalar_lea.vmem %s4, 64
        %v1301 = vld [vmem:[%s1300] sm:$0xf]
        %v1302 = vld [vmem:[%s1300 + $0x4] sm:$0xf]
        %v1303 = vld [vmem:[%s1300 + $0x8] sm:$0xf]
        %v1304 = vld [vmem:[%s1300 + $0xc] sm:$0xf]
        %v1305 = vld [vmem:[%s1300 + $0x10] sm:$0xf]
        %v1306 = vld [vmem:[%s1300 + $0x14] sm:$0xf]
        %v1307 = vld [vmem:[%s1300 + $0x18] sm:$0xf]
        %v1308 = vld [vmem:[%s1300 + $0x1c] sm:$0xf]
        %v1309 = vld [vmem:[%s1300 + $0x20] sm:$0xf]
        %v1310 = vld [vmem:[%s1300 + $0x24] sm:$0xf]
        %v1311 = vld [vmem:[%s1300 + $0x28] sm:$0xf]
        %v1312 = vld [vmem:[%s1300 + $0x2c] sm:$0xf]
        %v1313 = vld [vmem:[%s1300 + $0x30] sm:$0xf]
        %v1314 = vld [vmem:[%s1300 + $0x34] sm:$0xf]
        %v1315 = vld [vmem:[%s1300 + $0x38] sm:$0xf]
        %v1316 = vld [vmem:[%s1300 + $0x3c] sm:$0xf]
        %v1317 = vld [vmem:[%s5 + $0x1] sm:$0x1]
        %v1318 = vlaneseq
        %v1319 = vshrl.u32 %v1318, 7
        %v1320 = vsub.s32 0, %v1319
        %v1321 = vrot.slane %v1317, %v1320
        %v1338 = vunpack.c.l.b16 %v1301
        %v1339 = vunpack.c.l.b16 %v1302
        %v1340 = vunpack.c.l.b16 %v1303
        %v1341 = vunpack.c.l.b16 %v1304
        %v1342 = vunpack.c.l.b16 %v1305
        %v1343 = vunpack.c.l.b16 %v1306
        %v1344 = vunpack.c.l.b16 %v1307
        %v1345 = vunpack.c.l.b16 %v1308
        %v1346 = vunpack.c.l.b16 %v1309
        %v1347 = vunpack.c.l.b16 %v1310
        %v1348 = vunpack.c.l.b16 %v1311
        %v1349 = vunpack.c.l.b16 %v1312
        %v1350 = vunpack.c.l.b16 %v1313
        %v1351 = vunpack.c.l.b16 %v1314
        %v1352 = vunpack.c.l.b16 %v1315
        %v1353 = vunpack.c.l.b16 %v1316
        %v1354 = vpack.c.b16 %v1339, %v1338
        %v1355 = vpack.c.b16 %v1341, %v1340
        %v1356 = vpack.c.b16 %v1343, %v1342
        %v1357 = vpack.c.b16 %v1345, %v1344
        %v1358 = vpack.c.b16 %v1347, %v1346
        %v1359 = vpack.c.b16 %v1349, %v1348
        %v1360 = vpack.c.b16 %v1351, %v1350
        %v1361 = vpack.c.b16 %v1353, %v1352
        %1370 = vmatprep.subr.bf16.mxu0 0
        %1371 = vmatpush1.bf16.msra.mxu0 %v1354
        %1372 = vmatprep.subr.bf16.mxu0 0
        %1373 = vmatpush1.bf16.msra.mxu0 %v1355
        %1374 = vmatprep.subr.bf16.mxu0 0
        %1375 = vmatpush1.bf16.msra.mxu0 %v1356
        %1376 = vmatprep.subr.bf16.mxu0 0
        %1377 = vmatpush1.bf16.msra.mxu0 %v1357
        %1378 = vmatprep.subr.bf16.mxu0 0
        %1379 = vmatpush1.bf16.msra.mxu0 %v1358
        %1380 = vmatprep.subr.bf16.mxu0 0
        %1381 = vmatpush1.bf16.msra.mxu0 %v1359
        %1382 = vmatprep.subr.bf16.mxu0 0
        %1383 = vmatpush1.bf16.msra.mxu0 %v1360
        %1384 = vmatprep.subr.bf16.mxu0 0
        %1385 = vmatpush1.bf16.msra.mxu0 %v1361
        %1386 = vmatprep.subr.bf16.mxu0 0
        %1387 = vmatpush1.bf16.msra.mxu0 0
        %1388 = vmatprep.subr.bf16.mxu0 0
        %1389 = vmatpush1.bf16.msra.mxu0 0
        %1390 = vmatprep.subr.bf16.mxu0 0
        %1391 = vmatpush1.bf16.msra.mxu0 0
        %1392 = vmatprep.subr.bf16.mxu0 0
        %1393 = vmatpush1.bf16.msra.mxu0 0
        %1394 = vmatprep.subr.bf16.mxu0 0
        %1395 = vmatpush1.bf16.msra.mxu0 0
        %1396 = vmatprep.subr.bf16.mxu0 0
        %1397 = vmatpush1.bf16.msra.mxu0 0
        %1398 = vmatprep.subr.bf16.mxu0 0
        %1399 = vmatpush1.bf16.msra.mxu0 0
        %1400 = vmatprep.subr.bf16.mxu0 0
        %1401 = vmatpush1.bf16.msra.mxu0 0
        %1402 = vmatprep.mubr.bf16.mxu0 0
        %1403 = vmatmul.mubr.bf16.gmra.mrb[0].mxu0 %v1292
        %v1404 = vpop.f32.mrb[0].mxu0
        %v1405 = vadd.f32 %v1321, %v1404
        %v1406 = vpop.f32.mrb[0].mxu0
        %v1407 = vpop.f32.mrb[0].mxu0
        %v1408 = vadd.f32 %v1321, %v1407
        %v1409 = vpop.f32.mrb[0].mxu0
        %1410 = vmatprep.mubr.bf16.mxu0 0
        %1411 = vmatmul.mubr.bf16.gmra.mrb[0].mxu0 %v1293
        %v1412 = vpop.f32.mrb[0].mxu0
        %v1413 = vadd.f32 %v1321, %v1412
        %v1414 = vpop.f32.mrb[0].mxu0
        %v1415 = vpop.f32.mrb[0].mxu0
        %v1416 = vadd.f32 %v1321, %v1415
        %v1417 = vpop.f32.mrb[0].mxu0
        %1418 = vmatprep.mubr.bf16.mxu0 0
        %1419 = vmatmul.mubr.bf16.gmra.mrb[0].mxu0 %v1294
        %v1420 = vpop.f32.mrb[0].mxu0
        %v1421 = vadd.f32 %v1321, %v1420
        %v1422 = vpop.f32.mrb[0].mxu0
        %v1423 = vpop.f32.mrb[0].mxu0
        %v1424 = vadd.f32 %v1321, %v1423
        %v1425 = vpop.f32.mrb[0].mxu0
        %1426 = vmatprep.mubr.bf16.mxu0 0
        %1427 = vmatmul.mubr.bf16.gmra.mrb[0].mxu0 %v1295
        %v1428 = vpop.f32.mrb[0].mxu0
        %v1429 = vadd.f32 %v1321, %v1428
        %v1430 = vpop.f32.mrb[0].mxu0
        %v1431 = vpop.f32.mrb[0].mxu0
        %v1432 = vadd.f32 %v1321, %v1431
        %v1433 = vpop.f32.mrb[0].mxu0
        %1434 = vmatprep.mubr.bf16.mxu0 0
        %1435 = vmatmul.mubr.bf16.gmra.mrb[0].mxu0 %v1296
        %v1436 = vpop.f32.mrb[0].mxu0
        %v1437 = vadd.f32 %v1321, %v1436
        %v1438 = vpop.f32.mrb[0].mxu0
        %v1439 = vpop.f32.mrb[0].mxu0
        %v1440 = vadd.f32 %v1321, %v1439
        %v1441 = vpop.f32.mrb[0].mxu0
        %1442 = vmatprep.mubr.bf16.mxu0 0
        %1443 = vmatmul.mubr.bf16.gmra.mrb[0].mxu0 %v1297
        %v1444 = vpop.f32.mrb[0].mxu0
        %v1445 = vadd.f32 %v1321, %v1444
        %v1446 = vpop.f32.mrb[0].mxu0
        %v1447 = vpop.f32.mrb[0].mxu0
        %v1448 = vadd.f32 %v1321, %v1447
        %v1449 = vpop.f32.mrb[0].mxu0
        %1450 = vmatprep.mubr.bf16.mxu0 0
        %1451 = vmatmul.mubr.bf16.gmra.mrb[0].mxu0 %v1298
        %v1452 = vpop.f32.mrb[0].mxu0
        %v1453 = vadd.f32 %v1321, %v1452
        %v1454 = vpop.f32.mrb[0].mxu0
        %v1455 = vpop.f32.mrb[0].mxu0
        %v1456 = vadd.f32 %v1321, %v1455
        %v1457 = vpop.f32.mrb[0].mxu0
        %1458 = vmatprep.mubr.bf16.mxu0 0
        %1459 = vmatmul.mubr.bf16.gmra.mrb[0].mxu0 %v1299
        %v1460 = vpop.f32.mrb[0].mxu0
        %v1461 = vadd.f32 %v1321, %v1460
        %v1462 = vpop.f32.mrb[0].mxu0
        %v1463 = vpop.f32.mrb[0].mxu0
        %v1464 = vadd.f32 %v1321, %v1463
        %v1465 = vpop.f32.mrb[0].mxu0
        %1466 = vdwg.mxu0
        %v1467 = vadd.f32 %v621, %v1405
        %v1468 = vadd.f32 %v624, %v1408
        %v1469 = vadd.f32 %v629, %v1413
        %v1470 = vadd.f32 %v632, %v1416
        %v1471 = vadd.f32 %v637, %v1421
        %v1472 = vadd.f32 %v640, %v1424
        %v1473 = vadd.f32 %v645, %v1429
        %v1474 = vadd.f32 %v648, %v1432
        %v1475 = vadd.f32 %v653, %v1437
        %v1476 = vadd.f32 %v656, %v1440
        %v1477 = vadd.f32 %v661, %v1445
        %v1478 = vadd.f32 %v664, %v1448
        %v1479 = vadd.f32 %v669, %v1453
        %v1480 = vadd.f32 %v672, %v1456
        %v1481 = vadd.f32 %v677, %v1461
        %v1482 = vadd.f32 %v680, %v1464
        %v1483 = vmax.f32 %v1467, 0.0
        %v1484 = vmax.f32 %v1468, 0.0
        %v1485 = vmax.f32 %v1469, 0.0
        %v1486 = vmax.f32 %v1470, 0.0
        %v1487 = vmax.f32 %v1471, 0.0
        %v1488 = vmax.f32 %v1472, 0.0
        %v1489 = vmax.f32 %v1473, 0.0
        %v1490 = vmax.f32 %v1474, 0.0
        %v1491 = vmax.f32 %v1475, 0.0
        %v1492 = vmax.f32 %v1476, 0.0
        %v1493 = vmax.f32 %v1477, 0.0
        %v1494 = vmax.f32 %v1478, 0.0
        %v1495 = vmax.f32 %v1479, 0.0
        %v1496 = vmax.f32 %v1480, 0.0
        %v1497 = vmax.f32 %v1481, 0.0
        %v1498 = vmax.f32 %v1482, 0.0
        %v1499 = vpack.c.bf16 %v1484, %v1483
        %v1500 = vpack.c.bf16 %v1486, %v1485
        %v1501 = vpack.c.bf16 %v1488, %v1487
        %v1502 = vpack.c.bf16 %v1490, %v1489
        %v1503 = vpack.c.bf16 %v1492, %v1491
        %v1504 = vpack.c.bf16 %v1494, %v1493
        %v1505 = vpack.c.bf16 %v1496, %v1495
        %v1506 = vpack.c.bf16 %v1498, %v1497
        %1507 = vmatprep.subr.bf16.mxu0 0
        %1508 = vmatpush1.bf16.msra.mxu0 %v1499
        %1509 = vmatprep.subr.bf16.mxu0 0
        %1510 = vmatpush1.bf16.msra.mxu0 %v1500
        %1511 = vmatprep.subr.bf16.mxu0 0
        %1512 = vmatpush1.bf16.msra.mxu0 %v1501
        %1513 = vmatprep.subr.bf16.mxu0 0
        %1514 = vmatpush1.bf16.msra.mxu0 %v1502
        %1515 = vmatprep.subr.bf16.mxu0 0
        %1516 = vmatpush1.bf16.msra.mxu0 %v1503
        %1517 = vmatprep.subr.bf16.mxu0 0
        %1518 = vmatpush1.bf16.msra.mxu0 %v1504
        %1519 = vmatprep.subr.bf16.mxu0 0
        %1520 = vmatpush1.bf16.msra.mxu0 %v1505
        %1521 = vmatprep.subr.bf16.mxu0 0
        %1522 = vmatpush1.bf16.msra.mxu0 %v1506
        %1523 = vmatprep.subr.bf16.mxu0 0
        %1524 = vmatpush1.bf16.msra.mxu0 0
        %1525 = vmatprep.subr.bf16.mxu0 0
        %1526 = vmatpush1.bf16.msra.mxu0 0
        %1527 = vmatprep.subr.bf16.mxu0 0
        %1528 = vmatpush1.bf16.msra.mxu0 0
        %1529 = vmatprep.subr.bf16.mxu0 0
        %1530 = vmatpush1.bf16.msra.mxu0 0
        %1531 = vmatprep.subr.bf16.mxu0 0
        %1532 = vmatpush1.bf16.msra.mxu0 0
        %1533 = vmatprep.subr.bf16.mxu0 0
        %1534 = vmatpush1.bf16.msra.mxu0 0
        %1535 = vmatprep.subr.bf16.mxu0 0
        %1536 = vmatpush1.bf16.msra.mxu0 0
        %1537 = vmatprep.subr.bf16.mxu0 0
        %1538 = vmatpush1.bf16.msra.mxu0 0
        %1539 = vmatprep.mubr.bf16.mxu0 0
        %1540 = vmatmul.mubr.bf16.gmra.mrb[0].mxu0 %v723
        %v1541 = vpop.f32.mrb[0].mxu0
        %v1542 = vadd.f32 0.0, %v1541
        %v1543 = vpop.f32.mrb[0].mxu0
        %v1544 = vpop.f32.mrb[0].mxu0
        %v1545 = vadd.f32 0.0, %v1544
        %v1546 = vpop.f32.mrb[0].mxu0
        %1547 = vmatprep.mubr.bf16.mxu0 0
        %1548 = vmatmul.mubr.bf16.gmra.mrb[0].mxu0 %v724
        %v1549 = vpop.f32.mrb[0].mxu0
        %v1550 = vadd.f32 0.0, %v1549
        %v1551 = vpop.f32.mrb[0].mxu0
        %v1552 = vpop.f32.mrb[0].mxu0
        %v1553 = vadd.f32 0.0, %v1552
        %v1554 = vpop.f32.mrb[0].mxu0
        %1555 = vmatprep.mubr.bf16.mxu0 0
        %1556 = vmatmul.mubr.bf16.gmra.mrb[0].mxu0 %v725
        %v1557 = vpop.f32.mrb[0].mxu0
        %v1558 = vadd.f32 0.0, %v1557
        %v1559 = vpop.f32.mrb[0].mxu0
        %v1560 = vpop.f32.mrb[0].mxu0
        %v1561 = vadd.f32 0.0, %v1560
        %v1562 = vpop.f32.mrb[0].mxu0
        %1563 = vmatprep.mubr.bf16.mxu0 0
        %1564 = vmatmul.mubr.bf16.gmra.mrb[0].mxu0 %v726
        %v1565 = vpop.f32.mrb[0].mxu0
        %v1566 = vadd.f32 0.0, %v1565
        %v1567 = vpop.f32.mrb[0].mxu0
        %v1568 = vpop.f32.mrb[0].mxu0
        %v1569 = vadd.f32 0.0, %v1568
        %v1570 = vpop.f32.mrb[0].mxu0
        %1571 = vmatprep.mubr.bf16.mxu0 0
        %1572 = vmatmul.mubr.bf16.gmra.mrb[0].mxu0 %v727
        %v1573 = vpop.f32.mrb[0].mxu0
        %v1574 = vadd.f32 0.0, %v1573
        %v1575 = vpop.f32.mrb[0].mxu0
        %v1576 = vpop.f32.mrb[0].mxu0
        %v1577 = vadd.f32 0.0, %v1576
        %v1578 = vpop.f32.mrb[0].mxu0
        %1579 = vmatprep.mubr.bf16.mxu0 0
        %1580 = vmatmul.mubr.bf16.gmra.mrb[0].mxu0 %v728
        %v1581 = vpop.f32.mrb[0].mxu0
        %v1582 = vadd.f32 0.0, %v1581
        %v1583 = vpop.f32.mrb[0].mxu0
        %v1584 = vpop.f32.mrb[0].mxu0
        %v1585 = vadd.f32 0.0, %v1584
        %v1586 = vpop.f32.mrb[0].mxu0
        %1587 = vmatprep.mubr.bf16.mxu0 0
        %1588 = vmatmul.mubr.bf16.gmra.mrb[0].mxu0 %v729
        %v1589 = vpop.f32.mrb[0].mxu0
        %v1590 = vadd.f32 0.0, %v1589
        %v1591 = vpop.f32.mrb[0].mxu0
        %v1592 = vpop.f32.mrb[0].mxu0
        %v1593 = vadd.f32 0.0, %v1592
        %v1594 = vpop.f32.mrb[0].mxu0
        %1595 = vmatprep.mubr.bf16.mxu0 0
        %1596 = vmatmul.mubr.bf16.gmra.mrb[0].mxu0 %v730
        %v1597 = vpop.f32.mrb[0].mxu0
        %v1598 = vadd.f32 0.0, %v1597
        %v1599 = vpop.f32.mrb[0].mxu0
        %v1600 = vpop.f32.mrb[0].mxu0
        %v1601 = vadd.f32 0.0, %v1600
        %v1602 = vpop.f32.mrb[0].mxu0
        %1603 = vdwg.mxu0
        %1620 = vrot.lane.b32.xlu0 %v1542, 64
        %v1621 = vpop.permute.xlu0 %1620
        %1622 = vrot.lane.b32.xlu0 %v1545, 64
        %v1623 = vpop.permute.xlu0 %1622
        %1624 = vrot.lane.b32.xlu0 %v1550, 64
        %v1625 = vpop.permute.xlu0 %1624
        %1626 = vrot.lane.b32.xlu0 %v1553, 64
        %v1627 = vpop.permute.xlu0 %1626
        %1628 = vrot.lane.b32.xlu0 %v1558, 64
        %v1629 = vpop.permute.xlu0 %1628
        %1630 = vrot.lane.b32.xlu0 %v1561, 64
        %v1631 = vpop.permute.xlu0 %1630
        %1632 = vrot.lane.b32.xlu0 %v1566, 64
        %v1633 = vpop.permute.xlu0 %1632
        %1634 = vrot.lane.b32.xlu0 %v1569, 64
        %v1635 = vpop.permute.xlu0 %1634
        %1636 = vrot.lane.b32.xlu0 %v1574, 64
        %v1637 = vpop.permute.xlu0 %1636
        %1638 = vrot.lane.b32.xlu0 %v1577, 64
        %v1639 = vpop.permute.xlu0 %1638
        %1640 = vrot.lane.b32.xlu0 %v1582, 64
        %v1641 = vpop.permute.xlu0 %1640
        %1642 = vrot.lane.b32.xlu0 %v1585, 64
        %v1643 = vpop.permute.xlu0 %1642
        %1644 = vrot.lane.b32.xlu0 %v1590, 64
        %v1645 = vpop.permute.xlu0 %1644
        %1646 = vrot.lane.b32.xlu0 %v1593, 64
        %v1647 = vpop.permute.xlu0 %1646
        %1648 = vrot.lane.b32.xlu0 %v1598, 64
        %v1649 = vpop.permute.xlu0 %1648
        %1650 = vrot.lane.b32.xlu0 %v1601, 64
        %v1651 = vpop.permute.xlu0 %1650
        %v1668 = vsel %vm900, %v1483, %v1621
        %v1669 = vsel %vm900, %v1484, %v1623
        %v1670 = vsel %vm900, %v1485, %v1625
        %v1671 = vsel %vm900, %v1486, %v1627
        %v1672 = vsel %vm900, %v1487, %v1629
        %v1673 = vsel %vm900, %v1488, %v1631
        %v1674 = vsel %vm900, %v1489, %v1633
        %v1675 = vsel %vm900, %v1490, %v1635
        %v1676 = vsel %vm900, %v1491, %v1637
        %v1677 = vsel %vm900, %v1492, %v1639
        %v1678 = vsel %vm900, %v1493, %v1641
        %v1679 = vsel %vm900, %v1494, %v1643
        %v1680 = vsel %vm900, %v1495, %v1645
        %v1681 = vsel %vm900, %v1496, %v1647
        %v1682 = vsel %vm900, %v1497, %v1649
        %v1683 = vsel %vm900, %v1498, %v1651
        %v1684 = vpack.c.bf16 %v1669, %v1668
        %v1685 = vpack.c.bf16 %v1671, %v1670
        %v1686 = vpack.c.bf16 %v1673, %v1672
        %v1687 = vpack.c.bf16 %v1675, %v1674
        %v1688 = vpack.c.bf16 %v1677, %v1676
        %v1689 = vpack.c.bf16 %v1679, %v1678
        %v1690 = vpack.c.bf16 %v1681, %v1680
        %v1691 = vpack.c.bf16 %v1683, %v1682
        %s1692 = scalar_lea.vmem %s4, 128
        %v1693 = vld [vmem:[%s1692] sm:$0xf]
        %v1694 = vld [vmem:[%s1692 + $0x4] sm:$0xf]
        %v1695 = vld [vmem:[%s1692 + $0x8] sm:$0xf]
        %v1696 = vld [vmem:[%s1692 + $0xc] sm:$0xf]
        %v1697 = vld [vmem:[%s1692 + $0x10] sm:$0xf]
        %v1698 = vld [vmem:[%s1692 + $0x14] sm:$0xf]
        %v1699 = vld [vmem:[%s1692 + $0x18] sm:$0xf]
        %v1700 = vld [vmem:[%s1692 + $0x1c] sm:$0xf]
        %v1701 = vld [vmem:[%s1692 + $0x20] sm:$0xf]
        %v1702 = vld [vmem:[%s1692 + $0x24] sm:$0xf]
        %v1703 = vld [vmem:[%s1692 + $0x28] sm:$0xf]
        %v1704 = vld [vmem:[%s1692 + $0x2c] sm:$0xf]
        %v1705 = vld [vmem:[%s1692 + $0x30] sm:$0xf]
        %v1706 = vld [vmem:[%s1692 + $0x34] sm:$0xf]
        %v1707 = vld [vmem:[%s1692 + $0x38] sm:$0xf]
        %v1708 = vld [vmem:[%s1692 + $0x3c] sm:$0xf]
        %v1709 = vld [vmem:[%s5 + $0x2] sm:$0x1]
        %v1710 = vlaneseq
        %v1711 = vshrl.u32 %v1710, 7
        %v1712 = vsub.s32 0, %v1711
        %v1713 = vrot.slane %v1709, %v1712
        %v1730 = vunpack.c.l.b16 %v1693
        %v1731 = vunpack.c.l.b16 %v1694
        %v1732 = vunpack.c.l.b16 %v1695
        %v1733 = vunpack.c.l.b16 %v1696
        %v1734 = vunpack.c.l.b16 %v1697
        %v1735 = vunpack.c.l.b16 %v1698
        %v1736 = vunpack.c.l.b16 %v1699
        %v1737 = vunpack.c.l.b16 %v1700
        %v1738 = vunpack.c.l.b16 %v1701
        %v1739 = vunpack.c.l.b16 %v1702
        %v1740 = vunpack.c.l.b16 %v1703
        %v1741 = vunpack.c.l.b16 %v1704
        %v1742 = vunpack.c.l.b16 %v1705
        %v1743 = vunpack.c.l.b16 %v1706
        %v1744 = vunpack.c.l.b16 %v1707
        %v1745 = vunpack.c.l.b16 %v1708
        %v1746 = vpack.c.b16 %v1731, %v1730
        %v1747 = vpack.c.b16 %v1733, %v1732
        %v1748 = vpack.c.b16 %v1735, %v1734
        %v1749 = vpack.c.b16 %v1737, %v1736
        %v1750 = vpack.c.b16 %v1739, %v1738
        %v1751 = vpack.c.b16 %v1741, %v1740
        %v1752 = vpack.c.b16 %v1743, %v1742
        %v1753 = vpack.c.b16 %v1745, %v1744
        %1762 = vmatprep.subr.bf16.mxu0 0
        %1763 = vmatpush1.bf16.msra.mxu0 %v1746
        %1764 = vmatprep.subr.bf16.mxu0 0
        %1765 = vmatpush1.bf16.msra.mxu0 %v1747
        %1766 = vmatprep.subr.bf16.mxu0 0
        %1767 = vmatpush1.bf16.msra.mxu0 %v1748
        %1768 = vmatprep.subr.bf16.mxu0 0
        %1769 = vmatpush1.bf16.msra.mxu0 %v1749
        %1770 = vmatprep.subr.bf16.mxu0 0
        %1771 = vmatpush1.bf16.msra.mxu0 %v1750
        %1772 = vmatprep.subr.bf16.mxu0 0
        %1773 = vmatpush1.bf16.msra.mxu0 %v1751
        %1774 = vmatprep.subr.bf16.mxu0 0
        %1775 = vmatpush1.bf16.msra.mxu0 %v1752
        %1776 = vmatprep.subr.bf16.mxu0 0
        %1777 = vmatpush1.bf16.msra.mxu0 %v1753
        %1778 = vmatprep.subr.bf16.mxu0 0
        %1779 = vmatpush1.bf16.msra.mxu0 0
        %1780 = vmatprep.subr.bf16.mxu0 0
        %1781 = vmatpush1.bf16.msra.mxu0 0
        %1782 = vmatprep.subr.bf16.mxu0 0
        %1783 = vmatpush1.bf16.msra.mxu0 0
        %1784 = vmatprep.subr.bf16.mxu0 0
        %1785 = vmatpush1.bf16.msra.mxu0 0
        %1786 = vmatprep.subr.bf16.mxu0 0
        %1787 = vmatpush1.bf16.msra.mxu0 0
        %1788 = vmatprep.subr.bf16.mxu0 0
        %1789 = vmatpush1.bf16.msra.mxu0 0
        %1790 = vmatprep.subr.bf16.mxu0 0
        %1791 = vmatpush1.bf16.msra.mxu0 0
        %1792 = vmatprep.subr.bf16.mxu0 0
        %1793 = vmatpush1.bf16.msra.mxu0 0
        %1794 = vmatprep.mubr.bf16.mxu0 0
        %1795 = vmatmul.mubr.bf16.gmra.mrb[0].mxu0 %v1684
        %v1796 = vpop.f32.mrb[0].mxu0
        %v1797 = vadd.f32 %v1713, %v1796
        %v1798 = vpop.f32.mrb[0].mxu0
        %v1799 = vpop.f32.mrb[0].mxu0
        %v1800 = vadd.f32 %v1713, %v1799
        %v1801 = vpop.f32.mrb[0].mxu0
        %1802 = vmatprep.mubr.bf16.mxu0 0
        %1803 = vmatmul.mubr.bf16.gmra.mrb[0].mxu0 %v1685
        %v1804 = vpop.f32.mrb[0].mxu0
        %v1805 = vadd.f32 %v1713, %v1804
        %v1806 = vpop.f32.mrb[0].mxu0
        %v1807 = vpop.f32.mrb[0].mxu0
        %v1808 = vadd.f32 %v1713, %v1807
        %v1809 = vpop.f32.mrb[0].mxu0
        %1810 = vmatprep.mubr.bf16.mxu0 0
        %1811 = vmatmul.mubr.bf16.gmra.mrb[0].mxu0 %v1686
        %v1812 = vpop.f32.mrb[0].mxu0
        %v1813 = vadd.f32 %v1713, %v1812
        %v1814 = vpop.f32.mrb[0].mxu0
        %v1815 = vpop.f32.mrb[0].mxu0
        %v1816 = vadd.f32 %v1713, %v1815
        %v1817 = vpop.f32.mrb[0].mxu0
        %1818 = vmatprep.mubr.bf16.mxu0 0
        %1819 = vmatmul.mubr.bf16.gmra.mrb[0].mxu0 %v1687
        %v1820 = vpop.f32.mrb[0].mxu0
        %v1821 = vadd.f32 %v1713, %v1820
        %v1822 = vpop.f32.mrb[0].mxu0
        %v1823 = vpop.f32.mrb[0].mxu0
        %v1824 = vadd.f32 %v1713, %v1823
        %v1825 = vpop.f32.mrb[0].mxu0
        %1826 = vmatprep.mubr.bf16.mxu0 0
        %1827 = vmatmul.mubr.bf16.gmra.mrb[0].mxu0 %v1688
        %v1828 = vpop.f32.mrb[0].mxu0
        %v1829 = vadd.f32 %v1713, %v1828
        %v1830 = vpop.f32.mrb[0].mxu0
        %v1831 = vpop.f32.mrb[0].mxu0
        %v1832 = vadd.f32 %v1713, %v1831
        %v1833 = vpop.f32.mrb[0].mxu0
        %1834 = vmatprep.mubr.bf16.mxu0 0
        %1835 = vmatmul.mubr.bf16.gmra.mrb[0].mxu0 %v1689
        %v1836 = vpop.f32.mrb[0].mxu0
        %v1837 = vadd.f32 %v1713, %v1836
        %v1838 = vpop.f32.mrb[0].mxu0
        %v1839 = vpop.f32.mrb[0].mxu0
        %v1840 = vadd.f32 %v1713, %v1839
        %v1841 = vpop.f32.mrb[0].mxu0
        %1842 = vmatprep.mubr.bf16.mxu0 0
        %1843 = vmatmul.mubr.bf16.gmra.mrb[0].mxu0 %v1690
        %v1844 = vpop.f32.mrb[0].mxu0
        %v1845 = vadd.f32 %v1713, %v1844
        %v1846 = vpop.f32.mrb[0].mxu0
        %v1847 = vpop.f32.mrb[0].mxu0
        %v1848 = vadd.f32 %v1713, %v1847
        %v1849 = vpop.f32.mrb[0].mxu0
        %1850 = vmatprep.mubr.bf16.mxu0 0
        %1851 = vmatmul.mubr.bf16.gmra.mrb[0].mxu0 %v1691
        %v1852 = vpop.f32.mrb[0].mxu0
        %v1853 = vadd.f32 %v1713, %v1852
        %v1854 = vpop.f32.mrb[0].mxu0
        %v1855 = vpop.f32.mrb[0].mxu0
        %v1856 = vadd.f32 %v1713, %v1855
        %v1857 = vpop.f32.mrb[0].mxu0
        %1858 = vdwg.mxu0
        %v1859 = vmax.f32 %v1797, 0.0
        %v1860 = vmax.f32 %v1800, 0.0
        %v1861 = vmax.f32 %v1805, 0.0
        %v1862 = vmax.f32 %v1808, 0.0
        %v1863 = vmax.f32 %v1813, 0.0
        %v1864 = vmax.f32 %v1816, 0.0
        %v1865 = vmax.f32 %v1821, 0.0
        %v1866 = vmax.f32 %v1824, 0.0
        %v1867 = vmax.f32 %v1829, 0.0
        %v1868 = vmax.f32 %v1832, 0.0
        %v1869 = vmax.f32 %v1837, 0.0
        %v1870 = vmax.f32 %v1840, 0.0
        %v1871 = vmax.f32 %v1845, 0.0
        %v1872 = vmax.f32 %v1848, 0.0
        %v1873 = vmax.f32 %v1853, 0.0
        %v1874 = vmax.f32 %v1856, 0.0
        %v1875 = vpack.c.bf16 %v1860, %v1859
        %v1876 = vpack.c.bf16 %v1862, %v1861
        %v1877 = vpack.c.bf16 %v1864, %v1863
        %v1878 = vpack.c.bf16 %v1866, %v1865
        %v1879 = vpack.c.bf16 %v1868, %v1867
        %v1880 = vpack.c.bf16 %v1870, %v1869
        %v1881 = vpack.c.bf16 %v1872, %v1871
        %v1882 = vpack.c.bf16 %v1874, %v1873
        %1883 = vmatprep.subr.bf16.mxu0 0
        %1884 = vmatpush1.bf16.msra.mxu0 %v1875
        %1885 = vmatprep.subr.bf16.mxu0 0
        %1886 = vmatpush1.bf16.msra.mxu0 %v1876
        %1887 = vmatprep.subr.bf16.mxu0 0
        %1888 = vmatpush1.bf16.msra.mxu0 %v1877
        %1889 = vmatprep.subr.bf16.mxu0 0
        %1890 = vmatpush1.bf16.msra.mxu0 %v1878
        %1891 = vmatprep.subr.bf16.mxu0 0
        %1892 = vmatpush1.bf16.msra.mxu0 %v1879
        %1893 = vmatprep.subr.bf16.mxu0 0
        %1894 = vmatpush1.bf16.msra.mxu0 %v1880
        %1895 = vmatprep.subr.bf16.mxu0 0
        %1896 = vmatpush1.bf16.msra.mxu0 %v1881
        %1897 = vmatprep.subr.bf16.mxu0 0
        %1898 = vmatpush1.bf16.msra.mxu0 %v1882
        %1899 = vmatprep.subr.bf16.mxu0 0
        %1900 = vmatpush1.bf16.msra.mxu0 0
        %1901 = vmatprep.subr.bf16.mxu0 0
        %1902 = vmatpush1.bf16.msra.mxu0 0
        %1903 = vmatprep.subr.bf16.mxu0 0
        %1904 = vmatpush1.bf16.msra.mxu0 0
        %1905 = vmatprep.subr.bf16.mxu0 0
        %1906 = vmatpush1.bf16.msra.mxu0 0
        %1907 = vmatprep.subr.bf16.mxu0 0
        %1908 = vmatpush1.bf16.msra.mxu0 0
        %1909 = vmatprep.subr.bf16.mxu0 0
        %1910 = vmatpush1.bf16.msra.mxu0 0
        %1911 = vmatprep.subr.bf16.mxu0 0
        %1912 = vmatpush1.bf16.msra.mxu0 0
        %1913 = vmatprep.subr.bf16.mxu0 0
        %1914 = vmatpush1.bf16.msra.mxu0 0
        %1915 = vmatprep.mubr.bf16.mxu0 0
        %1916 = vmatmul.mubr.bf16.gmra.mrb[0].mxu0 %v723
        %v1917 = vpop.f32.mrb[0].mxu0
        %v1918 = vadd.f32 0.0, %v1917
        %v1919 = vpop.f32.mrb[0].mxu0
        %v1920 = vpop.f32.mrb[0].mxu0
        %v1921 = vadd.f32 0.0, %v1920
        %v1922 = vpop.f32.mrb[0].mxu0
        %1923 = vmatprep.mubr.bf16.mxu0 0
        %1924 = vmatmul.mubr.bf16.gmra.mrb[0].mxu0 %v724
        %v1925 = vpop.f32.mrb[0].mxu0
        %v1926 = vadd.f32 0.0, %v1925
        %v1927 = vpop.f32.mrb[0].mxu0
        %v1928 = vpop.f32.mrb[0].mxu0
        %v1929 = vadd.f32 0.0, %v1928
        %v1930 = vpop.f32.mrb[0].mxu0
        %1931 = vmatprep.mubr.bf16.mxu0 0
        %1932 = vmatmul.mubr.bf16.gmra.mrb[0].mxu0 %v725
        %v1933 = vpop.f32.mrb[0].mxu0
        %v1934 = vadd.f32 0.0, %v1933
        %v1935 = vpop.f32.mrb[0].mxu0
        %v1936 = vpop.f32.mrb[0].mxu0
        %v1937 = vadd.f32 0.0, %v1936
        %v1938 = vpop.f32.mrb[0].mxu0
        %1939 = vmatprep.mubr.bf16.mxu0 0
        %1940 = vmatmul.mubr.bf16.gmra.mrb[0].mxu0 %v726
        %v1941 = vpop.f32.mrb[0].mxu0
        %v1942 = vadd.f32 0.0, %v1941
        %v1943 = vpop.f32.mrb[0].mxu0
        %v1944 = vpop.f32.mrb[0].mxu0
        %v1945 = vadd.f32 0.0, %v1944
        %v1946 = vpop.f32.mrb[0].mxu0
        %1947 = vmatprep.mubr.bf16.mxu0 0
        %1948 = vmatmul.mubr.bf16.gmra.mrb[0].mxu0 %v727
        %v1949 = vpop.f32.mrb[0].mxu0
        %v1950 = vadd.f32 0.0, %v1949
        %v1951 = vpop.f32.mrb[0].mxu0
        %v1952 = vpop.f32.mrb[0].mxu0
        %v1953 = vadd.f32 0.0, %v1952
        %v1954 = vpop.f32.mrb[0].mxu0
        %1955 = vmatprep.mubr.bf16.mxu0 0
        %1956 = vmatmul.mubr.bf16.gmra.mrb[0].mxu0 %v728
        %v1957 = vpop.f32.mrb[0].mxu0
        %v1958 = vadd.f32 0.0, %v1957
        %v1959 = vpop.f32.mrb[0].mxu0
        %v1960 = vpop.f32.mrb[0].mxu0
        %v1961 = vadd.f32 0.0, %v1960
        %v1962 = vpop.f32.mrb[0].mxu0
        %1963 = vmatprep.mubr.bf16.mxu0 0
        %1964 = vmatmul.mubr.bf16.gmra.mrb[0].mxu0 %v729
        %v1965 = vpop.f32.mrb[0].mxu0
        %v1966 = vadd.f32 0.0, %v1965
        %v1967 = vpop.f32.mrb[0].mxu0
        %v1968 = vpop.f32.mrb[0].mxu0
        %v1969 = vadd.f32 0.0, %v1968
        %v1970 = vpop.f32.mrb[0].mxu0
        %1971 = vmatprep.mubr.bf16.mxu0 0
        %1972 = vmatmul.mubr.bf16.gmra.mrb[0].mxu0 %v730
        %v1973 = vpop.f32.mrb[0].mxu0
        %v1974 = vadd.f32 0.0, %v1973
        %v1975 = vpop.f32.mrb[0].mxu0
        %v1976 = vpop.f32.mrb[0].mxu0
        %v1977 = vadd.f32 0.0, %v1976
        %v1978 = vpop.f32.mrb[0].mxu0
        %1979 = vdwg.mxu0
        %1996 = vrot.lane.b32.xlu0 %v1918, 64
        %v1997 = vpop.permute.xlu0 %1996
        %1998 = vrot.lane.b32.xlu0 %v1921, 64
        %v1999 = vpop.permute.xlu0 %1998
        %2000 = vrot.lane.b32.xlu0 %v1926, 64
        %v2001 = vpop.permute.xlu0 %2000
        %2002 = vrot.lane.b32.xlu0 %v1929, 64
        %v2003 = vpop.permute.xlu0 %2002
        %2004 = vrot.lane.b32.xlu0 %v1934, 64
        %v2005 = vpop.permute.xlu0 %2004
        %2006 = vrot.lane.b32.xlu0 %v1937, 64
        %v2007 = vpop.permute.xlu0 %2006
        %2008 = vrot.lane.b32.xlu0 %v1942, 64
        %v2009 = vpop.permute.xlu0 %2008
        %2010 = vrot.lane.b32.xlu0 %v1945, 64
        %v2011 = vpop.permute.xlu0 %2010
        %2012 = vrot.lane.b32.xlu0 %v1950, 64
        %v2013 = vpop.permute.xlu0 %2012
        %2014 = vrot.lane.b32.xlu0 %v1953, 64
        %v2015 = vpop.permute.xlu0 %2014
        %2016 = vrot.lane.b32.xlu0 %v1958, 64
        %v2017 = vpop.permute.xlu0 %2016
        %2018 = vrot.lane.b32.xlu0 %v1961, 64
        %v2019 = vpop.permute.xlu0 %2018
        %2020 = vrot.lane.b32.xlu0 %v1966, 64
        %v2021 = vpop.permute.xlu0 %2020
        %2022 = vrot.lane.b32.xlu0 %v1969, 64
        %v2023 = vpop.permute.xlu0 %2022
        %2024 = vrot.lane.b32.xlu0 %v1974, 64
        %v2025 = vpop.permute.xlu0 %2024
        %2026 = vrot.lane.b32.xlu0 %v1977, 64
        %v2027 = vpop.permute.xlu0 %2026
        %v2044 = vsel %vm900, %v1859, %v1997
        %v2045 = vsel %vm900, %v1860, %v1999
        %v2046 = vsel %vm900, %v1861, %v2001
        %v2047 = vsel %vm900, %v1862, %v2003
        %v2048 = vsel %vm900, %v1863, %v2005
        %v2049 = vsel %vm900, %v1864, %v2007
        %v2050 = vsel %vm900, %v1865, %v2009
        %v2051 = vsel %vm900, %v1866, %v2011
        %v2052 = vsel %vm900, %v1867, %v2013
        %v2053 = vsel %vm900, %v1868, %v2015
        %v2054 = vsel %vm900, %v1869, %v2017
        %v2055 = vsel %vm900, %v1870, %v2019
        %v2056 = vsel %vm900, %v1871, %v2021
        %v2057 = vsel %vm900, %v1872, %v2023
        %v2058 = vsel %vm900, %v1873, %v2025
        %v2059 = vsel %vm900, %v1874, %v2027
        %v2060 = vpack.c.bf16 %v2045, %v2044
        %v2061 = vpack.c.bf16 %v2047, %v2046
        %v2062 = vpack.c.bf16 %v2049, %v2048
        %v2063 = vpack.c.bf16 %v2051, %v2050
        %v2064 = vpack.c.bf16 %v2053, %v2052
        %v2065 = vpack.c.bf16 %v2055, %v2054
        %v2066 = vpack.c.bf16 %v2057, %v2056
        %v2067 = vpack.c.bf16 %v2059, %v2058
        %s2068 = scalar_lea.vmem %s4, 192
        %v2069 = vld [vmem:[%s2068] sm:$0xf]
        %v2070 = vld [vmem:[%s2068 + $0x4] sm:$0xf]
        %v2071 = vld [vmem:[%s2068 + $0x8] sm:$0xf]
        %v2072 = vld [vmem:[%s2068 + $0xc] sm:$0xf]
        %v2073 = vld [vmem:[%s2068 + $0x10] sm:$0xf]
        %v2074 = vld [vmem:[%s2068 + $0x14] sm:$0xf]
        %v2075 = vld [vmem:[%s2068 + $0x18] sm:$0xf]
        %v2076 = vld [vmem:[%s2068 + $0x1c] sm:$0xf]
        %v2077 = vld [vmem:[%s2068 + $0x20] sm:$0xf]
        %v2078 = vld [vmem:[%s2068 + $0x24] sm:$0xf]
        %v2079 = vld [vmem:[%s2068 + $0x28] sm:$0xf]
        %v2080 = vld [vmem:[%s2068 + $0x2c] sm:$0xf]
        %v2081 = vld [vmem:[%s2068 + $0x30] sm:$0xf]
        %v2082 = vld [vmem:[%s2068 + $0x34] sm:$0xf]
        %v2083 = vld [vmem:[%s2068 + $0x38] sm:$0xf]
        %v2084 = vld [vmem:[%s2068 + $0x3c] sm:$0xf]
        %v2085 = vld [vmem:[%s5 + $0x3] sm:$0x1]
        %v2086 = vlaneseq
        %v2087 = vshrl.u32 %v2086, 7
        %v2088 = vsub.s32 0, %v2087
        %v2089 = vrot.slane %v2085, %v2088
        %v2106 = vunpack.c.l.b16 %v2069
        %v2107 = vunpack.c.l.b16 %v2070
        %v2108 = vunpack.c.l.b16 %v2071
        %v2109 = vunpack.c.l.b16 %v2072
        %v2110 = vunpack.c.l.b16 %v2073
        %v2111 = vunpack.c.l.b16 %v2074
        %v2112 = vunpack.c.l.b16 %v2075
        %v2113 = vunpack.c.l.b16 %v2076
        %v2114 = vunpack.c.l.b16 %v2077
        %v2115 = vunpack.c.l.b16 %v2078
        %v2116 = vunpack.c.l.b16 %v2079
        %v2117 = vunpack.c.l.b16 %v2080
        %v2118 = vunpack.c.l.b16 %v2081
        %v2119 = vunpack.c.l.b16 %v2082
        %v2120 = vunpack.c.l.b16 %v2083
        %v2121 = vunpack.c.l.b16 %v2084
        %v2122 = vpack.c.b16 %v2107, %v2106
        %v2123 = vpack.c.b16 %v2109, %v2108
        %v2124 = vpack.c.b16 %v2111, %v2110
        %v2125 = vpack.c.b16 %v2113, %v2112
        %v2126 = vpack.c.b16 %v2115, %v2114
        %v2127 = vpack.c.b16 %v2117, %v2116
        %v2128 = vpack.c.b16 %v2119, %v2118
        %v2129 = vpack.c.b16 %v2121, %v2120
        %2138 = vmatprep.subr.bf16.mxu0 0
        %2139 = vmatpush1.bf16.msra.mxu0 %v2122
        %2140 = vmatprep.subr.bf16.mxu0 0
        %2141 = vmatpush1.bf16.msra.mxu0 %v2123
        %2142 = vmatprep.subr.bf16.mxu0 0
        %2143 = vmatpush1.bf16.msra.mxu0 %v2124
        %2144 = vmatprep.subr.bf16.mxu0 0
        %2145 = vmatpush1.bf16.msra.mxu0 %v2125
        %2146 = vmatprep.subr.bf16.mxu0 0
        %2147 = vmatpush1.bf16.msra.mxu0 %v2126
        %2148 = vmatprep.subr.bf16.mxu0 0
        %2149 = vmatpush1.bf16.msra.mxu0 %v2127
        %2150 = vmatprep.subr.bf16.mxu0 0
        %2151 = vmatpush1.bf16.msra.mxu0 %v2128
        %2152 = vmatprep.subr.bf16.mxu0 0
        %2153 = vmatpush1.bf16.msra.mxu0 %v2129
        %2154 = vmatprep.subr.bf16.mxu0 0
        %2155 = vmatpush1.bf16.msra.mxu0 0
        %2156 = vmatprep.subr.bf16.mxu0 0
        %2157 = vmatpush1.bf16.msra.mxu0 0
        %2158 = vmatprep.subr.bf16.mxu0 0
        %2159 = vmatpush1.bf16.msra.mxu0 0
        %2160 = vmatprep.subr.bf16.mxu0 0
        %2161 = vmatpush1.bf16.msra.mxu0 0
        %2162 = vmatprep.subr.bf16.mxu0 0
        %2163 = vmatpush1.bf16.msra.mxu0 0
        %2164 = vmatprep.subr.bf16.mxu0 0
        %2165 = vmatpush1.bf16.msra.mxu0 0
        %2166 = vmatprep.subr.bf16.mxu0 0
        %2167 = vmatpush1.bf16.msra.mxu0 0
        %2168 = vmatprep.subr.bf16.mxu0 0
        %2169 = vmatpush1.bf16.msra.mxu0 0
        %2170 = vmatprep.mubr.bf16.mxu0 0
        %2171 = vmatmul.mubr.bf16.gmra.mrb[0].mxu0 %v2060
        %v2172 = vpop.f32.mrb[0].mxu0
        %v2173 = vadd.f32 %v2089, %v2172
        %v2174 = vpop.f32.mrb[0].mxu0
        %v2175 = vpop.f32.mrb[0].mxu0
        %v2176 = vadd.f32 %v2089, %v2175
        %v2177 = vpop.f32.mrb[0].mxu0
        %2178 = vmatprep.mubr.bf16.mxu0 0
        %2179 = vmatmul.mubr.bf16.gmra.mrb[0].mxu0 %v2061
        %v2180 = vpop.f32.mrb[0].mxu0
        %v2181 = vadd.f32 %v2089, %v2180
        %v2182 = vpop.f32.mrb[0].mxu0
        %v2183 = vpop.f32.mrb[0].mxu0
        %v2184 = vadd.f32 %v2089, %v2183
        %v2185 = vpop.f32.mrb[0].mxu0
        %2186 = vmatprep.mubr.bf16.mxu0 0
        %2187 = vmatmul.mubr.bf16.gmra.mrb[0].mxu0 %v2062
        %v2188 = vpop.f32.mrb[0].mxu0
        %v2189 = vadd.f32 %v2089, %v2188
        %v2190 = vpop.f32.mrb[0].mxu0
        %v2191 = vpop.f32.mrb[0].mxu0
        %v2192 = vadd.f32 %v2089, %v2191
        %v2193 = vpop.f32.mrb[0].mxu0
        %2194 = vmatprep.mubr.bf16.mxu0 0
        %2195 = vmatmul.mubr.bf16.gmra.mrb[0].mxu0 %v2063
        %v2196 = vpop.f32.mrb[0].mxu0
        %v2197 = vadd.f32 %v2089, %v2196
        %v2198 = vpop.f32.mrb[0].mxu0
        %v2199 = vpop.f32.mrb[0].mxu0
        %v2200 = vadd.f32 %v2089, %v2199
        %v2201 = vpop.f32.mrb[0].mxu0
        %2202 = vmatprep.mubr.bf16.mxu0 0
        %2203 = vmatmul.mubr.bf16.gmra.mrb[0].mxu0 %v2064
        %v2204 = vpop.f32.mrb[0].mxu0
        %v2205 = vadd.f32 %v2089, %v2204
        %v2206 = vpop.f32.mrb[0].mxu0
        %v2207 = vpop.f32.mrb[0].mxu0
        %v2208 = vadd.f32 %v2089, %v2207
        %v2209 = vpop.f32.mrb[0].mxu0
        %2210 = vmatprep.mubr.bf16.mxu0 0
        %2211 = vmatmul.mubr.bf16.gmra.mrb[0].mxu0 %v2065
        %v2212 = vpop.f32.mrb[0].mxu0
        %v2213 = vadd.f32 %v2089, %v2212
        %v2214 = vpop.f32.mrb[0].mxu0
        %v2215 = vpop.f32.mrb[0].mxu0
        %v2216 = vadd.f32 %v2089, %v2215
        %v2217 = vpop.f32.mrb[0].mxu0
        %2218 = vmatprep.mubr.bf16.mxu0 0
        %2219 = vmatmul.mubr.bf16.gmra.mrb[0].mxu0 %v2066
        %v2220 = vpop.f32.mrb[0].mxu0
        %v2221 = vadd.f32 %v2089, %v2220
        %v2222 = vpop.f32.mrb[0].mxu0
        %v2223 = vpop.f32.mrb[0].mxu0
        %v2224 = vadd.f32 %v2089, %v2223
        %v2225 = vpop.f32.mrb[0].mxu0
        %2226 = vmatprep.mubr.bf16.mxu0 0
        %2227 = vmatmul.mubr.bf16.gmra.mrb[0].mxu0 %v2067
        %v2228 = vpop.f32.mrb[0].mxu0
        %v2229 = vadd.f32 %v2089, %v2228
        %v2230 = vpop.f32.mrb[0].mxu0
        %v2231 = vpop.f32.mrb[0].mxu0
        %v2232 = vadd.f32 %v2089, %v2231
        %v2233 = vpop.f32.mrb[0].mxu0
        %2234 = vdwg.mxu0
        %v2235 = vadd.f32 %v1483, %v2173
        %v2236 = vadd.f32 %v1484, %v2176
        %v2237 = vadd.f32 %v1485, %v2181
        %v2238 = vadd.f32 %v1486, %v2184
        %v2239 = vadd.f32 %v1487, %v2189
        %v2240 = vadd.f32 %v1488, %v2192
        %v2241 = vadd.f32 %v1489, %v2197
        %v2242 = vadd.f32 %v1490, %v2200
        %v2243 = vadd.f32 %v1491, %v2205
        %v2244 = vadd.f32 %v1492, %v2208
        %v2245 = vadd.f32 %v1493, %v2213
        %v2246 = vadd.f32 %v1494, %v2216
        %v2247 = vadd.f32 %v1495, %v2221
        %v2248 = vadd.f32 %v1496, %v2224
        %v2249 = vadd.f32 %v1497, %v2229
        %v2250 = vadd.f32 %v1498, %v2232
        %v2251 = vmax.f32 %v2235, 0.0
        %v2252 = vmax.f32 %v2236, 0.0
        %v2253 = vmax.f32 %v2237, 0.0
        %v2254 = vmax.f32 %v2238, 0.0
        %v2255 = vmax.f32 %v2239, 0.0
        %v2256 = vmax.f32 %v2240, 0.0
        %v2257 = vmax.f32 %v2241, 0.0
        %v2258 = vmax.f32 %v2242, 0.0
        %v2259 = vmax.f32 %v2243, 0.0
        %v2260 = vmax.f32 %v2244, 0.0
        %v2261 = vmax.f32 %v2245, 0.0
        %v2262 = vmax.f32 %v2246, 0.0
        %v2263 = vmax.f32 %v2247, 0.0
        %v2264 = vmax.f32 %v2248, 0.0
        %v2265 = vmax.f32 %v2249, 0.0
        %v2266 = vmax.f32 %v2250, 0.0
        %v2267 = vpack.c.bf16 %v2252, %v2251
        %v2268 = vpack.c.bf16 %v2254, %v2253
        %v2269 = vpack.c.bf16 %v2256, %v2255
        %v2270 = vpack.c.bf16 %v2258, %v2257
        %v2271 = vpack.c.bf16 %v2260, %v2259
        %v2272 = vpack.c.bf16 %v2262, %v2261
        %v2273 = vpack.c.bf16 %v2264, %v2263
        %v2274 = vpack.c.bf16 %v2266, %v2265
        %2275 = vmatprep.subr.bf16.mxu0 0
        %2276 = vmatpush1.bf16.msra.mxu0 %v2267
        %2277 = vmatprep.subr.bf16.mxu0 0
        %2278 = vmatpush1.bf16.msra.mxu0 %v2268
        %2279 = vmatprep.subr.bf16.mxu0 0
        %2280 = vmatpush1.bf16.msra.mxu0 %v2269
        %2281 = vmatprep.subr.bf16.mxu0 0
        %2282 = vmatpush1.bf16.msra.mxu0 %v2270
        %2283 = vmatprep.subr.bf16.mxu0 0
        %2284 = vmatpush1.bf16.msra.mxu0 %v2271
        %2285 = vmatprep.subr.bf16.mxu0 0
        %2286 = vmatpush1.bf16.msra.mxu0 %v2272
        %2287 = vmatprep.subr.bf16.mxu0 0
        %2288 = vmatpush1.bf16.msra.mxu0 %v2273
        %2289 = vmatprep.subr.bf16.mxu0 0
        %2290 = vmatpush1.bf16.msra.mxu0 %v2274
        %2291 = vmatprep.subr.bf16.mxu0 0
        %2292 = vmatpush1.bf16.msra.mxu0 0
        %2293 = vmatprep.subr.bf16.mxu0 0
        %2294 = vmatpush1.bf16.msra.mxu0 0
        %2295 = vmatprep.subr.bf16.mxu0 0
        %2296 = vmatpush1.bf16.msra.mxu0 0
        %2297 = vmatprep.subr.bf16.mxu0 0
        %2298 = vmatpush1.bf16.msra.mxu0 0
        %2299 = vmatprep.subr.bf16.mxu0 0
        %2300 = vmatpush1.bf16.msra.mxu0 0
        %2301 = vmatprep.subr.bf16.mxu0 0
        %2302 = vmatpush1.bf16.msra.mxu0 0
        %2303 = vmatprep.subr.bf16.mxu0 0
        %2304 = vmatpush1.bf16.msra.mxu0 0
        %2305 = vmatprep.subr.bf16.mxu0 0
        %2306 = vmatpush1.bf16.msra.mxu0 0
        %2307 = vmatprep.mubr.bf16.mxu0 0
        %2308 = vmatmul.mubr.bf16.gmra.mrb[0].mxu0 %v723
        %v2309 = vpop.f32.mrb[0].mxu0
        %v2310 = vadd.f32 0.0, %v2309
        %v2311 = vpop.f32.mrb[0].mxu0
        %v2312 = vpop.f32.mrb[0].mxu0
        %v2313 = vadd.f32 0.0, %v2312
        %v2314 = vpop.f32.mrb[0].mxu0
        %2315 = vmatprep.mubr.bf16.mxu0 0
        %2316 = vmatmul.mubr.bf16.gmra.mrb[0].mxu0 %v724
        %v2317 = vpop.f32.mrb[0].mxu0
        %v2318 = vadd.f32 0.0, %v2317
        %v2319 = vpop.f32.mrb[0].mxu0
        %v2320 = vpop.f32.mrb[0].mxu0
        %v2321 = vadd.f32 0.0, %v2320
        %v2322 = vpop.f32.mrb[0].mxu0
        %2323 = vmatprep.mubr.bf16.mxu0 0
        %2324 = vmatmul.mubr.bf16.gmra.mrb[0].mxu0 %v725
        %v2325 = vpop.f32.mrb[0].mxu0
        %v2326 = vadd.f32 0.0, %v2325
        %v2327 = vpop.f32.mrb[0].mxu0
        %v2328 = vpop.f32.mrb[0].mxu0
        %v2329 = vadd.f32 0.0, %v2328
        %v2330 = vpop.f32.mrb[0].mxu0
        %2331 = vmatprep.mubr.bf16.mxu0 0
        %2332 = vmatmul.mubr.bf16.gmra.mrb[0].mxu0 %v726
        %v2333 = vpop.f32.mrb[0].mxu0
        %v2334 = vadd.f32 0.0, %v2333
        %v2335 = vpop.f32.mrb[0].mxu0
        %v2336 = vpop.f32.mrb[0].mxu0
        %v2337 = vadd.f32 0.0, %v2336
        %v2338 = vpop.f32.mrb[0].mxu0
        %2339 = vmatprep.mubr.bf16.mxu0 0
        %2340 = vmatmul.mubr.bf16.gmra.mrb[0].mxu0 %v727
        %v2341 = vpop.f32.mrb[0].mxu0
        %v2342 = vadd.f32 0.0, %v2341
        %v2343 = vpop.f32.mrb[0].mxu0
        %v2344 = vpop.f32.mrb[0].mxu0
        %v2345 = vadd.f32 0.0, %v2344
        %v2346 = vpop.f32.mrb[0].mxu0
        %2347 = vmatprep.mubr.bf16.mxu0 0
        %2348 = vmatmul.mubr.bf16.gmra.mrb[0].mxu0 %v728
        %v2349 = vpop.f32.mrb[0].mxu0
        %v2350 = vadd.f32 0.0, %v2349
        %v2351 = vpop.f32.mrb[0].mxu0
        %v2352 = vpop.f32.mrb[0].mxu0
        %v2353 = vadd.f32 0.0, %v2352
        %v2354 = vpop.f32.mrb[0].mxu0
        %2355 = vmatprep.mubr.bf16.mxu0 0
        %2356 = vmatmul.mubr.bf16.gmra.mrb[0].mxu0 %v729
        %v2357 = vpop.f32.mrb[0].mxu0
        %v2358 = vadd.f32 0.0, %v2357
        %v2359 = vpop.f32.mrb[0].mxu0
        %v2360 = vpop.f32.mrb[0].mxu0
        %v2361 = vadd.f32 0.0, %v2360
        %v2362 = vpop.f32.mrb[0].mxu0
        %2363 = vmatprep.mubr.bf16.mxu0 0
        %2364 = vmatmul.mubr.bf16.gmra.mrb[0].mxu0 %v730
        %v2365 = vpop.f32.mrb[0].mxu0
        %v2366 = vadd.f32 0.0, %v2365
        %v2367 = vpop.f32.mrb[0].mxu0
        %v2368 = vpop.f32.mrb[0].mxu0
        %v2369 = vadd.f32 0.0, %v2368
        %v2370 = vpop.f32.mrb[0].mxu0
        %2371 = vdwg.mxu0
        %2388 = vrot.lane.b32.xlu0 %v2310, 64
        %v2389 = vpop.permute.xlu0 %2388
        %2390 = vrot.lane.b32.xlu0 %v2313, 64
        %v2391 = vpop.permute.xlu0 %2390
        %2392 = vrot.lane.b32.xlu0 %v2318, 64
        %v2393 = vpop.permute.xlu0 %2392
        %2394 = vrot.lane.b32.xlu0 %v2321, 64
        %v2395 = vpop.permute.xlu0 %2394
        %2396 = vrot.lane.b32.xlu0 %v2326, 64
        %v2397 = vpop.permute.xlu0 %2396
        %2398 = vrot.lane.b32.xlu0 %v2329, 64
        %v2399 = vpop.permute.xlu0 %2398
        %2400 = vrot.lane.b32.xlu0 %v2334, 64
        %v2401 = vpop.permute.xlu0 %2400
        %2402 = vrot.lane.b32.xlu0 %v2337, 64
        %v2403 = vpop.permute.xlu0 %2402
        %2404 = vrot.lane.b32.xlu0 %v2342, 64
        %v2405 = vpop.permute.xlu0 %2404
        %2406 = vrot.lane.b32.xlu0 %v2345, 64
        %v2407 = vpop.permute.xlu0 %2406
        %2408 = vrot.lane.b32.xlu0 %v2350, 64
        %v2409 = vpop.permute.xlu0 %2408
        %2410 = vrot.lane.b32.xlu0 %v2353, 64
        %v2411 = vpop.permute.xlu0 %2410
        %2412 = vrot.lane.b32.xlu0 %v2358, 64
        %v2413 = vpop.permute.xlu0 %2412
        %2414 = vrot.lane.b32.xlu0 %v2361, 64
        %v2415 = vpop.permute.xlu0 %2414
        %2416 = vrot.lane.b32.xlu0 %v2366, 64
        %v2417 = vpop.permute.xlu0 %2416
        %2418 = vrot.lane.b32.xlu0 %v2369, 64
        %v2419 = vpop.permute.xlu0 %2418
        %v2436 = vsel %vm900, %v2251, %v2389
        %v2437 = vsel %vm900, %v2252, %v2391
        %v2438 = vsel %vm900, %v2253, %v2393
        %v2439 = vsel %vm900, %v2254, %v2395
        %v2440 = vsel %vm900, %v2255, %v2397
        %v2441 = vsel %vm900, %v2256, %v2399
        %v2442 = vsel %vm900, %v2257, %v2401
        %v2443 = vsel %vm900, %v2258, %v2403
        %v2444 = vsel %vm900, %v2259, %v2405
        %v2445 = vsel %vm900, %v2260, %v2407
        %v2446 = vsel %vm900, %v2261, %v2409
        %v2447 = vsel %vm900, %v2262, %v2411
        %v2448 = vsel %vm900, %v2263, %v2413
        %v2449 = vsel %vm900, %v2264, %v2415
        %v2450 = vsel %vm900, %v2265, %v2417
        %v2451 = vsel %vm900, %v2266, %v2419
        %v2452 = vpack.c.bf16 %v2437, %v2436
        %v2453 = vpack.c.bf16 %v2439, %v2438
        %v2454 = vpack.c.bf16 %v2441, %v2440
        %v2455 = vpack.c.bf16 %v2443, %v2442
        %v2456 = vpack.c.bf16 %v2445, %v2444
        %v2457 = vpack.c.bf16 %v2447, %v2446
        %v2458 = vpack.c.bf16 %v2449, %v2448
        %v2459 = vpack.c.bf16 %v2451, %v2450
        %s2460 = scalar_lea.vmem %s4, 256
        %v2461 = vld [vmem:[%s2460] sm:$0xf]
        %v2462 = vld [vmem:[%s2460 + $0x4] sm:$0xf]
        %v2463 = vld [vmem:[%s2460 + $0x8] sm:$0xf]
        %v2464 = vld [vmem:[%s2460 + $0xc] sm:$0xf]
        %v2465 = vld [vmem:[%s2460 + $0x10] sm:$0xf]
        %v2466 = vld [vmem:[%s2460 + $0x14] sm:$0xf]
        %v2467 = vld [vmem:[%s2460 + $0x18] sm:$0xf]
        %v2468 = vld [vmem:[%s2460 + $0x1c] sm:$0xf]
        %v2469 = vld [vmem:[%s2460 + $0x20] sm:$0xf]
        %v2470 = vld [vmem:[%s2460 + $0x24] sm:$0xf]
        %v2471 = vld [vmem:[%s2460 + $0x28] sm:$0xf]
        %v2472 = vld [vmem:[%s2460 + $0x2c] sm:$0xf]
        %v2473 = vld [vmem:[%s2460 + $0x30] sm:$0xf]
        %v2474 = vld [vmem:[%s2460 + $0x34] sm:$0xf]
        %v2475 = vld [vmem:[%s2460 + $0x38] sm:$0xf]
        %v2476 = vld [vmem:[%s2460 + $0x3c] sm:$0xf]
        %v2477 = vld [vmem:[%s5 + $0x4] sm:$0x1]
        %v2478 = vlaneseq
        %v2479 = vshrl.u32 %v2478, 7
        %v2480 = vsub.s32 0, %v2479
        %v2481 = vrot.slane %v2477, %v2480
        %v2498 = vunpack.c.l.b16 %v2461
        %v2499 = vunpack.c.l.b16 %v2462
        %v2500 = vunpack.c.l.b16 %v2463
        %v2501 = vunpack.c.l.b16 %v2464
        %v2502 = vunpack.c.l.b16 %v2465
        %v2503 = vunpack.c.l.b16 %v2466
        %v2504 = vunpack.c.l.b16 %v2467
        %v2505 = vunpack.c.l.b16 %v2468
        %v2506 = vunpack.c.l.b16 %v2469
        %v2507 = vunpack.c.l.b16 %v2470
        %v2508 = vunpack.c.l.b16 %v2471
        %v2509 = vunpack.c.l.b16 %v2472
        %v2510 = vunpack.c.l.b16 %v2473
        %v2511 = vunpack.c.l.b16 %v2474
        %v2512 = vunpack.c.l.b16 %v2475
        %v2513 = vunpack.c.l.b16 %v2476
        %v2514 = vpack.c.b16 %v2499, %v2498
        %v2515 = vpack.c.b16 %v2501, %v2500
        %v2516 = vpack.c.b16 %v2503, %v2502
        %v2517 = vpack.c.b16 %v2505, %v2504
        %v2518 = vpack.c.b16 %v2507, %v2506
        %v2519 = vpack.c.b16 %v2509, %v2508
        %v2520 = vpack.c.b16 %v2511, %v2510
        %v2521 = vpack.c.b16 %v2513, %v2512
        %2530 = vmatprep.subr.bf16.mxu0 0
        %2531 = vmatpush1.bf16.msra.mxu0 %v2514
        %2532 = vmatprep.subr.bf16.mxu0 0
        %2533 = vmatpush1.bf16.msra.mxu0 %v2515
        %2534 = vmatprep.subr.bf16.mxu0 0
        %2535 = vmatpush1.bf16.msra.mxu0 %v2516
        %2536 = vmatprep.subr.bf16.mxu0 0
        %2537 = vmatpush1.bf16.msra.mxu0 %v2517
        %2538 = vmatprep.subr.bf16.mxu0 0
        %2539 = vmatpush1.bf16.msra.mxu0 %v2518
        %2540 = vmatprep.subr.bf16.mxu0 0
        %2541 = vmatpush1.bf16.msra.mxu0 %v2519
        %2542 = vmatprep.subr.bf16.mxu0 0
        %2543 = vmatpush1.bf16.msra.mxu0 %v2520
        %2544 = vmatprep.subr.bf16.mxu0 0
        %2545 = vmatpush1.bf16.msra.mxu0 %v2521
        %2546 = vmatprep.subr.bf16.mxu0 0
        %2547 = vmatpush1.bf16.msra.mxu0 0
        %2548 = vmatprep.subr.bf16.mxu0 0
        %2549 = vmatpush1.bf16.msra.mxu0 0
        %2550 = vmatprep.subr.bf16.mxu0 0
        %2551 = vmatpush1.bf16.msra.mxu0 0
        %2552 = vmatprep.subr.bf16.mxu0 0
        %2553 = vmatpush1.bf16.msra.mxu0 0
        %2554 = vmatprep.subr.bf16.mxu0 0
        %2555 = vmatpush1.bf16.msra.mxu0 0
        %2556 = vmatprep.subr.bf16.mxu0 0
        %2557 = vmatpush1.bf16.msra.mxu0 0
        %2558 = vmatprep.subr.bf16.mxu0 0
        %2559 = vmatpush1.bf16.msra.mxu0 0
        %2560 = vmatprep.subr.bf16.mxu0 0
        %2561 = vmatpush1.bf16.msra.mxu0 0
        %2562 = vmatprep.mubr.bf16.mxu0 0
        %2563 = vmatmul.mubr.bf16.gmra.mrb[0].mxu0 %v2452
        %v2564 = vpop.f32.mrb[0].mxu0
        %v2565 = vadd.f32 %v2481, %v2564
        %v2566 = vpop.f32.mrb[0].mxu0
        %v2567 = vpop.f32.mrb[0].mxu0
        %v2568 = vadd.f32 %v2481, %v2567
        %v2569 = vpop.f32.mrb[0].mxu0
        %2570 = vmatprep.mubr.bf16.mxu0 0
        %2571 = vmatmul.mubr.bf16.gmra.mrb[0].mxu0 %v2453
        %v2572 = vpop.f32.mrb[0].mxu0
        %v2573 = vadd.f32 %v2481, %v2572
        %v2574 = vpop.f32.mrb[0].mxu0
        %v2575 = vpop.f32.mrb[0].mxu0
        %v2576 = vadd.f32 %v2481, %v2575
        %v2577 = vpop.f32.mrb[0].mxu0
        %2578 = vmatprep.mubr.bf16.mxu0 0
        %2579 = vmatmul.mubr.bf16.gmra.mrb[0].mxu0 %v2454
        %v2580 = vpop.f32.mrb[0].mxu0
        %v2581 = vadd.f32 %v2481, %v2580
        %v2582 = vpop.f32.mrb[0].mxu0
        %v2583 = vpop.f32.mrb[0].mxu0
        %v2584 = vadd.f32 %v2481, %v2583
        %v2585 = vpop.f32.mrb[0].mxu0
        %2586 = vmatprep.mubr.bf16.mxu0 0
        %2587 = vmatmul.mubr.bf16.gmra.mrb[0].mxu0 %v2455
        %v2588 = vpop.f32.mrb[0].mxu0
        %v2589 = vadd.f32 %v2481, %v2588
        %v2590 = vpop.f32.mrb[0].mxu0
        %v2591 = vpop.f32.mrb[0].mxu0
        %v2592 = vadd.f32 %v2481, %v2591
        %v2593 = vpop.f32.mrb[0].mxu0
        %2594 = vmatprep.mubr.bf16.mxu0 0
        %2595 = vmatmul.mubr.bf16.gmra.mrb[0].mxu0 %v2456
        %v2596 = vpop.f32.mrb[0].mxu0
        %v2597 = vadd.f32 %v2481, %v2596
        %v2598 = vpop.f32.mrb[0].mxu0
        %v2599 = vpop.f32.mrb[0].mxu0
        %v2600 = vadd.f32 %v2481, %v2599
        %v2601 = vpop.f32.mrb[0].mxu0
        %2602 = vmatprep.mubr.bf16.mxu0 0
        %2603 = vmatmul.mubr.bf16.gmra.mrb[0].mxu0 %v2457
        %v2604 = vpop.f32.mrb[0].mxu0
        %v2605 = vadd.f32 %v2481, %v2604
        %v2606 = vpop.f32.mrb[0].mxu0
        %v2607 = vpop.f32.mrb[0].mxu0
        %v2608 = vadd.f32 %v2481, %v2607
        %v2609 = vpop.f32.mrb[0].mxu0
        %2610 = vmatprep.mubr.bf16.mxu0 0
        %2611 = vmatmul.mubr.bf16.gmra.mrb[0].mxu0 %v2458
        %v2612 = vpop.f32.mrb[0].mxu0
        %v2613 = vadd.f32 %v2481, %v2612
        %v2614 = vpop.f32.mrb[0].mxu0
        %v2615 = vpop.f32.mrb[0].mxu0
        %v2616 = vadd.f32 %v2481, %v2615
        %v2617 = vpop.f32.mrb[0].mxu0
        %2618 = vmatprep.mubr.bf16.mxu0 0
        %2619 = vmatmul.mubr.bf16.gmra.mrb[0].mxu0 %v2459
        %v2620 = vpop.f32.mrb[0].mxu0
        %v2621 = vadd.f32 %v2481, %v2620
        %v2622 = vpop.f32.mrb[0].mxu0
        %v2623 = vpop.f32.mrb[0].mxu0
        %v2624 = vadd.f32 %v2481, %v2623
        %v2625 = vpop.f32.mrb[0].mxu0
        %2626 = vdwg.mxu0
        %v2627 = vpack.c.bf16 %v2568, %v2565
        %v2628 = vpack.c.bf16 %v2576, %v2573
        %v2629 = vpack.c.bf16 %v2584, %v2581
        %v2630 = vpack.c.bf16 %v2592, %v2589
        %v2631 = vpack.c.bf16 %v2600, %v2597
        %v2632 = vpack.c.bf16 %v2608, %v2605
        %v2633 = vpack.c.bf16 %v2616, %v2613
        %v2634 = vpack.c.bf16 %v2624, %v2621
        %v2643 = vunpack.c.l.b16 %v2627
        %v2644 = vunpack.c.h.b16 %v2627
        %v2645 = vunpack.c.l.b16 %v2628
        %v2646 = vunpack.c.h.b16 %v2628
        %v2647 = vunpack.c.l.b16 %v2629
        %v2648 = vunpack.c.h.b16 %v2629
        %v2649 = vunpack.c.l.b16 %v2630
        %v2650 = vunpack.c.h.b16 %v2630
        %v2651 = vunpack.c.l.b16 %v2631
        %v2652 = vunpack.c.h.b16 %v2631
        %v2653 = vunpack.c.l.b16 %v2632
        %v2654 = vunpack.c.h.b16 %v2632
        %v2655 = vunpack.c.l.b16 %v2633
        %v2656 = vunpack.c.h.b16 %v2633
        %v2657 = vunpack.c.l.b16 %v2634
        %v2658 = vunpack.c.h.b16 %v2634
        %v2659 = vpack.c.b16 %v2643, %v2643
        %v2660 = vpack.c.b16 %v2644, %v2644
        %v2661 = vpack.c.b16 %v2645, %v2645
        %v2662 = vpack.c.b16 %v2646, %v2646
        %v2663 = vpack.c.b16 %v2647, %v2647
        %v2664 = vpack.c.b16 %v2648, %v2648
        %v2665 = vpack.c.b16 %v2649, %v2649
        %v2666 = vpack.c.b16 %v2650, %v2650
        %v2667 = vpack.c.b16 %v2651, %v2651
        %v2668 = vpack.c.b16 %v2652, %v2652
        %v2669 = vpack.c.b16 %v2653, %v2653
        %v2670 = vpack.c.b16 %v2654, %v2654
        %v2671 = vpack.c.b16 %v2655, %v2655
        %v2672 = vpack.c.b16 %v2656, %v2656
        %v2673 = vpack.c.b16 %v2657, %v2657
        %v2674 = vpack.c.b16 %v2658, %v2658
        %v2675 = vld [vmem:[#allocation4] sm:$0xff]
        %v2676 = vld [vmem:[#allocation4 + $0x8] sm:$0xff]
        %v2677 = vld [vmem:[#allocation4 + $0x10] sm:$0xff]
        %v2678 = vld [vmem:[#allocation4 + $0x18] sm:$0xff]
        %v2679 = vld [vmem:[#allocation4 + $0x20] sm:$0xff]
        %v2680 = vld [vmem:[#allocation4 + $0x28] sm:$0xff]
        %v2681 = vld [vmem:[#allocation4 + $0x30] sm:$0xff]
        %v2682 = vld [vmem:[#allocation4 + $0x38] sm:$0xff]
        %v2683 = vld [vmem:[#allocation4 + $0x40] sm:$0xff]
        %v2684 = vld [vmem:[#allocation4 + $0x48] sm:$0xff]
        %v2685 = vld [vmem:[#allocation4 + $0x50] sm:$0xff]
        %v2686 = vld [vmem:[#allocation4 + $0x58] sm:$0xff]
        %v2687 = vld [vmem:[#allocation4 + $0x60] sm:$0xff]
        %v2688 = vld [vmem:[#allocation4 + $0x68] sm:$0xff]
        %v2689 = vld [vmem:[#allocation4 + $0x70] sm:$0xff]
        %v2690 = vld [vmem:[#allocation4 + $0x78] sm:$0xff]
        %v2691 = vld [vmem:[#allocation4 + $0x80] sm:$0xff]
        %v2692 = vld [vmem:[#allocation4 + $0x88] sm:$0xff]
        %v2693 = vld [vmem:[#allocation4 + $0x90] sm:$0xff]
        %v2694 = vld [vmem:[#allocation4 + $0x98] sm:$0xff]
        %v2695 = vld [vmem:[#allocation4 + $0xa0] sm:$0xff]
        %v2696 = vld [vmem:[#allocation4 + $0xa8] sm:$0xff]
        %v2697 = vld [vmem:[#allocation4 + $0xb0] sm:$0xff]
        %v2698 = vld [vmem:[#allocation4 + $0xb8] sm:$0xff]
        %v2699 = vld [vmem:[#allocation4 + $0xc0] sm:$0xff]
        %v2700 = vld [vmem:[#allocation4 + $0xc8] sm:$0xff]
        %v2701 = vld [vmem:[#allocation4 + $0xd0] sm:$0xff]
        %v2702 = vld [vmem:[#allocation4 + $0xd8] sm:$0xff]
        %v2703 = vld [vmem:[#allocation4 + $0xe0] sm:$0xff]
        %v2704 = vld [vmem:[#allocation4 + $0xe8] sm:$0xff]
        %v2705 = vld [vmem:[#allocation4 + $0xf0] sm:$0xff]
        %v2706 = vld [vmem:[#allocation4 + $0xf8] sm:$0xff]
        %v2707 = vld [vmem:[#allocation4 + $0x100] sm:$0xff]
        %v2708 = vld [vmem:[#allocation4 + $0x108] sm:$0xff]
        %v2709 = vld [vmem:[#allocation4 + $0x110] sm:$0xff]
        %v2710 = vld [vmem:[#allocation4 + $0x118] sm:$0xff]
        %v2711 = vld [vmem:[#allocation4 + $0x120] sm:$0xff]
        %v2712 = vld [vmem:[#allocation4 + $0x128] sm:$0xff]
        %v2713 = vld [vmem:[#allocation4 + $0x130] sm:$0xff]
        %v2714 = vld [vmem:[#allocation4 + $0x138] sm:$0xff]
        %v2715 = vld [vmem:[#allocation4 + $0x140] sm:$0xff]
        %v2716 = vld [vmem:[#allocation4 + $0x148] sm:$0xff]
        %v2717 = vld [vmem:[#allocation4 + $0x150] sm:$0xff]
        %v2718 = vld [vmem:[#allocation4 + $0x158] sm:$0xff]
        %v2719 = vld [vmem:[#allocation4 + $0x160] sm:$0xff]
        %v2720 = vld [vmem:[#allocation4 + $0x168] sm:$0xff]
        %v2721 = vld [vmem:[#allocation4 + $0x170] sm:$0xff]
        %v2722 = vld [vmem:[#allocation4 + $0x178] sm:$0xff]
        %v2723 = vld [vmem:[#allocation4 + $0x180] sm:$0xff]
        %v2724 = vld [vmem:[#allocation4 + $0x188] sm:$0xff]
        %v2725 = vld [vmem:[#allocation4 + $0x190] sm:$0xff]
        %v2726 = vld [vmem:[#allocation4 + $0x198] sm:$0xff]
        %v2727 = vld [vmem:[#allocation4 + $0x1a0] sm:$0xff]
        %v2728 = vld [vmem:[#allocation4 + $0x1a8] sm:$0xff]
        %v2729 = vld [vmem:[#allocation4 + $0x1b0] sm:$0xff]
        %v2730 = vld [vmem:[#allocation4 + $0x1b8] sm:$0xff]
        %v2731 = vld [vmem:[#allocation4 + $0x1c0] sm:$0xff]
        %v2732 = vld [vmem:[#allocation4 + $0x1c8] sm:$0xff]
        %v2733 = vld [vmem:[#allocation4 + $0x1d0] sm:$0xff]
        %v2734 = vld [vmem:[#allocation4 + $0x1d8] sm:$0xff]
        %v2735 = vld [vmem:[#allocation4 + $0x1e0] sm:$0xff]
        %v2736 = vld [vmem:[#allocation4 + $0x1e8] sm:$0xff]
        %v2737 = vld [vmem:[#allocation4 + $0x1f0] sm:$0xff]
        %v2738 = vld [vmem:[#allocation4 + $0x1f8] sm:$0xff]
        %v2739 = vld [vmem:[#allocation4 + $0x200] sm:$0xff]
        %v2740 = vld [vmem:[#allocation4 + $0x208] sm:$0xff]
        %v2741 = vld [vmem:[#allocation4 + $0x210] sm:$0xff]
        %v2742 = vld [vmem:[#allocation4 + $0x218] sm:$0xff]
        %v2743 = vld [vmem:[#allocation4 + $0x220] sm:$0xff]
        %v2744 = vld [vmem:[#allocation4 + $0x228] sm:$0xff]
        %v2745 = vld [vmem:[#allocation4 + $0x230] sm:$0xff]
        %v2746 = vld [vmem:[#allocation4 + $0x238] sm:$0xff]
        %v2747 = vld [vmem:[#allocation4 + $0x240] sm:$0xff]
        %v2748 = vld [vmem:[#allocation4 + $0x248] sm:$0xff]
        %v2749 = vld [vmem:[#allocation4 + $0x250] sm:$0xff]
        %v2750 = vld [vmem:[#allocation4 + $0x258] sm:$0xff]
        %v2751 = vld [vmem:[#allocation4 + $0x260] sm:$0xff]
        %v2752 = vld [vmem:[#allocation4 + $0x268] sm:$0xff]
        %v2753 = vld [vmem:[#allocation4 + $0x270] sm:$0xff]
        %v2754 = vld [vmem:[#allocation4 + $0x278] sm:$0xff]
        %v2755 = vld [vmem:[#allocation4 + $0x280] sm:$0xff]
        %v2756 = vld [vmem:[#allocation4 + $0x288] sm:$0xff]
        %v2757 = vld [vmem:[#allocation4 + $0x290] sm:$0xff]
        %v2758 = vld [vmem:[#allocation4 + $0x298] sm:$0xff]
        %v2759 = vld [vmem:[#allocation4 + $0x2a0] sm:$0xff]
        %v2760 = vld [vmem:[#allocation4 + $0x2a8] sm:$0xff]
        %v2761 = vld [vmem:[#allocation4 + $0x2b0] sm:$0xff]
        %v2762 = vld [vmem:[#allocation4 + $0x2b8] sm:$0xff]
        %v2763 = vld [vmem:[#allocation4 + $0x2c0] sm:$0xff]
        %v2764 = vld [vmem:[#allocation4 + $0x2c8] sm:$0xff]
        %v2765 = vld [vmem:[#allocation4 + $0x2d0] sm:$0xff]
        %v2766 = vld [vmem:[#allocation4 + $0x2d8] sm:$0xff]
        %v2767 = vld [vmem:[#allocation4 + $0x2e0] sm:$0xff]
        %v2768 = vld [vmem:[#allocation4 + $0x2e8] sm:$0xff]
        %v2769 = vld [vmem:[#allocation4 + $0x2f0] sm:$0xff]
        %v2770 = vld [vmem:[#allocation4 + $0x2f8] sm:$0xff]
        %v2771 = vld [vmem:[#allocation4 + $0x300] sm:$0xff]
        %v2772 = vld [vmem:[#allocation4 + $0x308] sm:$0xff]
        %v2773 = vld [vmem:[#allocation4 + $0x310] sm:$0xff]
        %v2774 = vld [vmem:[#allocation4 + $0x318] sm:$0xff]
        %v2775 = vld [vmem:[#allocation4 + $0x320] sm:$0xff]
        %v2776 = vld [vmem:[#allocation4 + $0x328] sm:$0xff]
        %v2777 = vld [vmem:[#allocation4 + $0x330] sm:$0xff]
        %v2778 = vld [vmem:[#allocation4 + $0x338] sm:$0xff]
        %v2779 = vld [vmem:[#allocation4 + $0x340] sm:$0xff]
        %v2780 = vld [vmem:[#allocation4 + $0x348] sm:$0xff]
        %v2781 = vld [vmem:[#allocation4 + $0x350] sm:$0xff]
        %v2782 = vld [vmem:[#allocation4 + $0x358] sm:$0xff]
        %v2783 = vld [vmem:[#allocation4 + $0x360] sm:$0xff]
        %v2784 = vld [vmem:[#allocation4 + $0x368] sm:$0xff]
        %v2785 = vld [vmem:[#allocation4 + $0x370] sm:$0xff]
        %v2786 = vld [vmem:[#allocation4 + $0x378] sm:$0xff]
        %v2787 = vld [vmem:[#allocation4 + $0x380] sm:$0xff]
        %v2788 = vld [vmem:[#allocation4 + $0x388] sm:$0xff]
        %v2789 = vld [vmem:[#allocation4 + $0x390] sm:$0xff]
        %v2790 = vld [vmem:[#allocation4 + $0x398] sm:$0xff]
        %v2791 = vld [vmem:[#allocation4 + $0x3a0] sm:$0xff]
        %v2792 = vld [vmem:[#allocation4 + $0x3a8] sm:$0xff]
        %v2793 = vld [vmem:[#allocation4 + $0x3b0] sm:$0xff]
        %v2794 = vld [vmem:[#allocation4 + $0x3b8] sm:$0xff]
        %v2795 = vld [vmem:[#allocation4 + $0x3c0] sm:$0xff]
        %v2796 = vld [vmem:[#allocation4 + $0x3c8] sm:$0xff]
        %v2797 = vld [vmem:[#allocation4 + $0x3d0] sm:$0xff]
        %v2798 = vld [vmem:[#allocation4 + $0x3d8] sm:$0xff]
        %v2799 = vld [vmem:[#allocation4 + $0x3e0] sm:$0xff]
        %v2800 = vld [vmem:[#allocation4 + $0x3e8] sm:$0xff]
        %v2801 = vld [vmem:[#allocation4 + $0x3f0] sm:$0xff]
        %v2802 = vld [vmem:[#allocation4 + $0x3f8] sm:$0xff]
        %v2803 = vld [vmem:[#allocation4 + $0x400] sm:$0xff]
        %v2804 = vld [vmem:[#allocation4 + $0x408] sm:$0xff]
        %v2805 = vld [vmem:[#allocation4 + $0x410] sm:$0xff]
        %v2806 = vld [vmem:[#allocation4 + $0x418] sm:$0xff]
        %v2807 = vld [vmem:[#allocation4 + $0x420] sm:$0xff]
        %v2808 = vld [vmem:[#allocation4 + $0x428] sm:$0xff]
        %v2809 = vld [vmem:[#allocation4 + $0x430] sm:$0xff]
        %v2810 = vld [vmem:[#allocation4 + $0x438] sm:$0xff]
        %v2811 = vld [vmem:[#allocation4 + $0x440] sm:$0xff]
        %v2812 = vld [vmem:[#allocation4 + $0x448] sm:$0xff]
        %v2813 = vld [vmem:[#allocation4 + $0x450] sm:$0xff]
        %v2814 = vld [vmem:[#allocation4 + $0x458] sm:$0xff]
        %v2815 = vld [vmem:[#allocation4 + $0x460] sm:$0xff]
        %v2816 = vld [vmem:[#allocation4 + $0x468] sm:$0xff]
        %v2817 = vld [vmem:[#allocation4 + $0x470] sm:$0xff]
        %v2818 = vld [vmem:[#allocation4 + $0x478] sm:$0xff]
        %v2819 = vld [vmem:[#allocation4 + $0x480] sm:$0xff]
        %v2820 = vld [vmem:[#allocation4 + $0x488] sm:$0xff]
        %v2821 = vld [vmem:[#allocation4 + $0x490] sm:$0xff]
        %v2822 = vld [vmem:[#allocation4 + $0x498] sm:$0xff]
        %v2823 = vld [vmem:[#allocation4 + $0x4a0] sm:$0xff]
        %v2824 = vld [vmem:[#allocation4 + $0x4a8] sm:$0xff]
        %v2825 = vld [vmem:[#allocation4 + $0x4b0] sm:$0xff]
        %v2826 = vld [vmem:[#allocation4 + $0x4b8] sm:$0xff]
        %v2827 = vld [vmem:[#allocation4 + $0x4c0] sm:$0xff]
        %v2828 = vld [vmem:[#allocation4 + $0x4c8] sm:$0xff]
        %v2829 = vld [vmem:[#allocation4 + $0x4d0] sm:$0xff]
        %v2830 = vld [vmem:[#allocation4 + $0x4d8] sm:$0xff]
        %v2831 = vld [vmem:[#allocation4 + $0x4e0] sm:$0xff]
        %v2832 = vld [vmem:[#allocation4 + $0x4e8] sm:$0xff]
        %v2833 = vld [vmem:[#allocation4 + $0x4f0] sm:$0xff]
        %v2834 = vld [vmem:[#allocation4 + $0x4f8] sm:$0xff]
        %v2835 = vld [vmem:[#allocation4 + $0x500] sm:$0xff]
        %v2836 = vld [vmem:[#allocation4 + $0x508] sm:$0xff]
        %v2837 = vld [vmem:[#allocation4 + $0x510] sm:$0xff]
        %v2838 = vld [vmem:[#allocation4 + $0x518] sm:$0xff]
        %v2839 = vld [vmem:[#allocation4 + $0x520] sm:$0xff]
        %v2840 = vld [vmem:[#allocation4 + $0x528] sm:$0xff]
        %v2841 = vld [vmem:[#allocation4 + $0x530] sm:$0xff]
        %v2842 = vld [vmem:[#allocation4 + $0x538] sm:$0xff]
        %v2843 = vld [vmem:[#allocation4 + $0x540] sm:$0xff]
        %v2844 = vld [vmem:[#allocation4 + $0x548] sm:$0xff]
        %v2845 = vld [vmem:[#allocation4 + $0x550] sm:$0xff]
        %v2846 = vld [vmem:[#allocation4 + $0x558] sm:$0xff]
        %v2847 = vld [vmem:[#allocation4 + $0x560] sm:$0xff]
        %v2848 = vld [vmem:[#allocation4 + $0x568] sm:$0xff]
        %v2849 = vld [vmem:[#allocation4 + $0x570] sm:$0xff]
        %v2850 = vld [vmem:[#allocation4 + $0x578] sm:$0xff]
        %v2851 = vld [vmem:[#allocation4 + $0x580] sm:$0xff]
        %v2852 = vld [vmem:[#allocation4 + $0x588] sm:$0xff]
        %v2853 = vld [vmem:[#allocation4 + $0x590] sm:$0xff]
        %v2854 = vld [vmem:[#allocation4 + $0x598] sm:$0xff]
        %v2855 = vld [vmem:[#allocation4 + $0x5a0] sm:$0xff]
        %v2856 = vld [vmem:[#allocation4 + $0x5a8] sm:$0xff]
        %v2857 = vld [vmem:[#allocation4 + $0x5b0] sm:$0xff]
        %v2858 = vld [vmem:[#allocation4 + $0x5b8] sm:$0xff]
        %v2859 = vld [vmem:[#allocation4 + $0x5c0] sm:$0xff]
        %v2860 = vld [vmem:[#allocation4 + $0x5c8] sm:$0xff]
        %v2861 = vld [vmem:[#allocation4 + $0x5d0] sm:$0xff]
        %v2862 = vld [vmem:[#allocation4 + $0x5d8] sm:$0xff]
        %v2863 = vld [vmem:[#allocation4 + $0x5e0] sm:$0xff]
        %v2864 = vld [vmem:[#allocation4 + $0x5e8] sm:$0xff]
        %v2865 = vld [vmem:[#allocation4 + $0x5f0] sm:$0xff]
        %v2866 = vld [vmem:[#allocation4 + $0x5f8] sm:$0xff]
        %v2867 = vld [vmem:[#allocation4 + $0x600] sm:$0xff]
        %v2868 = vld [vmem:[#allocation4 + $0x608] sm:$0xff]
        %v2869 = vld [vmem:[#allocation4 + $0x610] sm:$0xff]
        %v2870 = vld [vmem:[#allocation4 + $0x618] sm:$0xff]
        %v2871 = vld [vmem:[#allocation4 + $0x620] sm:$0xff]
        %v2872 = vld [vmem:[#allocation4 + $0x628] sm:$0xff]
        %v2873 = vld [vmem:[#allocation4 + $0x630] sm:$0xff]
        %v2874 = vld [vmem:[#allocation4 + $0x638] sm:$0xff]
        %v2875 = vld [vmem:[#allocation4 + $0x640] sm:$0xff]
        %v2876 = vld [vmem:[#allocation4 + $0x648] sm:$0xff]
        %v2877 = vld [vmem:[#allocation4 + $0x650] sm:$0xff]
        %v2878 = vld [vmem:[#allocation4 + $0x658] sm:$0xff]
        %v2879 = vld [vmem:[#allocation4 + $0x660] sm:$0xff]
        %v2880 = vld [vmem:[#allocation4 + $0x668] sm:$0xff]
        %v2881 = vld [vmem:[#allocation4 + $0x670] sm:$0xff]
        %v2882 = vld [vmem:[#allocation4 + $0x678] sm:$0xff]
        %v2883 = vld [vmem:[#allocation4 + $0x680] sm:$0xff]
        %v2884 = vld [vmem:[#allocation4 + $0x688] sm:$0xff]
        %v2885 = vld [vmem:[#allocation4 + $0x690] sm:$0xff]
        %v2886 = vld [vmem:[#allocation4 + $0x698] sm:$0xff]
        %v2887 = vld [vmem:[#allocation4 + $0x6a0] sm:$0xff]
        %v2888 = vld [vmem:[#allocation4 + $0x6a8] sm:$0xff]
        %v2889 = vld [vmem:[#allocation4 + $0x6b0] sm:$0xff]
        %v2890 = vld [vmem:[#allocation4 + $0x6b8] sm:$0xff]
        %v2891 = vld [vmem:[#allocation4 + $0x6c0] sm:$0xff]
        %v2892 = vld [vmem:[#allocation4 + $0x6c8] sm:$0xff]
        %v2893 = vld [vmem:[#allocation4 + $0x6d0] sm:$0xff]
        %v2894 = vld [vmem:[#allocation4 + $0x6d8] sm:$0xff]
        %v2895 = vld [vmem:[#allocation4 + $0x6e0] sm:$0xff]
        %v2896 = vld [vmem:[#allocation4 + $0x6e8] sm:$0xff]
        %v2897 = vld [vmem:[#allocation4 + $0x6f0] sm:$0xff]
        %v2898 = vld [vmem:[#allocation4 + $0x6f8] sm:$0xff]
        %v2899 = vld [vmem:[#allocation4 + $0x700] sm:$0xff]
        %v2900 = vld [vmem:[#allocation4 + $0x708] sm:$0xff]
        %v2901 = vld [vmem:[#allocation4 + $0x710] sm:$0xff]
        %v2902 = vld [vmem:[#allocation4 + $0x718] sm:$0xff]
        %v2903 = vld [vmem:[#allocation4 + $0x720] sm:$0xff]
        %v2904 = vld [vmem:[#allocation4 + $0x728] sm:$0xff]
        %v2905 = vld [vmem:[#allocation4 + $0x730] sm:$0xff]
        %v2906 = vld [vmem:[#allocation4 + $0x738] sm:$0xff]
        %v2907 = vld [vmem:[#allocation4 + $0x740] sm:$0xff]
        %v2908 = vld [vmem:[#allocation4 + $0x748] sm:$0xff]
        %v2909 = vld [vmem:[#allocation4 + $0x750] sm:$0xff]
        %v2910 = vld [vmem:[#allocation4 + $0x758] sm:$0xff]
        %v2911 = vld [vmem:[#allocation4 + $0x760] sm:$0xff]
        %v2912 = vld [vmem:[#allocation4 + $0x768] sm:$0xff]
        %v2913 = vld [vmem:[#allocation4 + $0x770] sm:$0xff]
        %v2914 = vld [vmem:[#allocation4 + $0x778] sm:$0xff]
        %v2915 = vld [vmem:[#allocation4 + $0x780] sm:$0xff]
        %v2916 = vld [vmem:[#allocation4 + $0x788] sm:$0xff]
        %v2917 = vld [vmem:[#allocation4 + $0x790] sm:$0xff]
        %v2918 = vld [vmem:[#allocation4 + $0x798] sm:$0xff]
        %v2919 = vld [vmem:[#allocation4 + $0x7a0] sm:$0xff]
        %v2920 = vld [vmem:[#allocation4 + $0x7a8] sm:$0xff]
        %v2921 = vld [vmem:[#allocation4 + $0x7b0] sm:$0xff]
        %v2922 = vld [vmem:[#allocation4 + $0x7b8] sm:$0xff]
        %v2923 = vld [vmem:[#allocation4 + $0x7c0] sm:$0xff]
        %v2924 = vld [vmem:[#allocation4 + $0x7c8] sm:$0xff]
        %v2925 = vld [vmem:[#allocation4 + $0x7d0] sm:$0xff]
        %v2926 = vld [vmem:[#allocation4 + $0x7d8] sm:$0xff]
        %v2927 = vld [vmem:[#allocation4 + $0x7e0] sm:$0xff]
        %v2928 = vld [vmem:[#allocation4 + $0x7e8] sm:$0xff]
        %v2929 = vld [vmem:[#allocation4 + $0x7f0] sm:$0xff]
        %v2930 = vld [vmem:[#allocation4 + $0x7f8] sm:$0xff]
        %v2947 = vunpack.c.l.b16 %v2675
        %v2948 = vunpack.c.h.b16 %v2675
        %v2949 = vunpack.c.l.b16 %v2676
        %v2950 = vunpack.c.h.b16 %v2676
        %v2951 = vunpack.c.l.b16 %v2677
        %v2952 = vunpack.c.h.b16 %v2677
        %v2953 = vunpack.c.l.b16 %v2678
        %v2954 = vunpack.c.h.b16 %v2678
        %v2955 = vunpack.c.l.b16 %v2679
        %v2956 = vunpack.c.h.b16 %v2679
        %v2957 = vunpack.c.l.b16 %v2680
        %v2958 = vunpack.c.h.b16 %v2680
        %v2959 = vunpack.c.l.b16 %v2681
        %v2960 = vunpack.c.h.b16 %v2681
        %v2961 = vunpack.c.l.b16 %v2682
        %v2962 = vunpack.c.h.b16 %v2682
        %v2963 = vunpack.c.l.b16 %v2683
        %v2964 = vunpack.c.h.b16 %v2683
        %v2965 = vunpack.c.l.b16 %v2684
        %v2966 = vunpack.c.h.b16 %v2684
        %v2967 = vunpack.c.l.b16 %v2685
        %v2968 = vunpack.c.h.b16 %v2685
        %v2969 = vunpack.c.l.b16 %v2686
        %v2970 = vunpack.c.h.b16 %v2686
        %v2971 = vunpack.c.l.b16 %v2687
        %v2972 = vunpack.c.h.b16 %v2687
        %v2973 = vunpack.c.l.b16 %v2688
        %v2974 = vunpack.c.h.b16 %v2688
        %v2975 = vunpack.c.l.b16 %v2689
        %v2976 = vunpack.c.h.b16 %v2689
        %v2977 = vunpack.c.l.b16 %v2690
        %v2978 = vunpack.c.h.b16 %v2690
        %v2979 = vpack.c.b16 %v2951, %v2947
        %v2980 = vpack.c.b16 %v2952, %v2948
        %v2981 = vpack.c.b16 %v2953, %v2949
        %v2982 = vpack.c.b16 %v2954, %v2950
        %v2983 = vpack.c.b16 %v2959, %v2955
        %v2984 = vpack.c.b16 %v2960, %v2956
        %v2985 = vpack.c.b16 %v2961, %v2957
        %v2986 = vpack.c.b16 %v2962, %v2958
        %v2987 = vpack.c.b16 %v2967, %v2963
        %v2988 = vpack.c.b16 %v2968, %v2964
        %v2989 = vpack.c.b16 %v2969, %v2965
        %v2990 = vpack.c.b16 %v2970, %v2966
        %v2991 = vpack.c.b16 %v2975, %v2971
        %v2992 = vpack.c.b16 %v2976, %v2972
        %v2993 = vpack.c.b16 %v2977, %v2973
        %v2994 = vpack.c.b16 %v2978, %v2974
        %v3012 = vsel %vm900, %v2659, 0
        %3014 = vmatprep.subr.bf16.mxu0 %v2980
        %3015 = vmatpush1.bf16.msra.mxu0 %v2979
        %3016 = vmatprep.subr.bf16.mxu0 %v2984
        %3017 = vmatpush1.bf16.msra.mxu0 %v2983
        %3018 = vmatprep.subr.bf16.mxu0 %v2988
        %3019 = vmatpush1.bf16.msra.mxu0 %v2987
        %3020 = vmatprep.subr.bf16.mxu0 %v2992
        %3021 = vmatpush1.bf16.msra.mxu0 %v2991
        %3022 = vmatprep.subr.bf16.mxu0 0
        %3023 = vmatpush1.bf16.msra.mxu0 0
        %3024 = vmatprep.subr.bf16.mxu0 0
        %3025 = vmatpush1.bf16.msra.mxu0 0
        %3026 = vmatprep.subr.bf16.mxu0 0
        %3027 = vmatpush1.bf16.msra.mxu0 0
        %3028 = vmatprep.subr.bf16.mxu0 0
        %3029 = vmatpush1.bf16.msra.mxu0 0
        %3030 = vmatprep.subr.bf16.mxu0 0
        %3031 = vmatpush1.bf16.msra.mxu0 0
        %3032 = vmatprep.subr.bf16.mxu0 0
        %3033 = vmatpush1.bf16.msra.mxu0 0
        %3034 = vmatprep.subr.bf16.mxu0 0
        %3035 = vmatpush1.bf16.msra.mxu0 0
        %3036 = vmatprep.subr.bf16.mxu0 0
        %3037 = vmatpush1.bf16.msra.mxu0 0
        %3038 = vmatprep.subr.bf16.mxu0 0
        %3039 = vmatpush1.bf16.msra.mxu0 0
        %3040 = vmatprep.subr.bf16.mxu0 0
        %3041 = vmatpush1.bf16.msra.mxu0 0
        %3042 = vmatprep.subr.bf16.mxu0 0
        %3043 = vmatpush1.bf16.msra.mxu0 0
        %3044 = vmatprep.subr.bf16.mxu0 0
        %3045 = vmatpush1.bf16.msra.mxu0 0
        %3046 = vmatprep.mubr.bf16.mxu0 0
        %3047 = vmatmul.mubr.bf16.gmra.mrb[0].mxu0 %v3012
        %v3048 = vpop.f32.mrb[0].mxu0
        %v3049 = vadd.f32 0.0, %v3048
        %v3050 = vpop.f32.mrb[0].mxu0
        %v3051 = vadd.f32 0.0, %v3050
        %v3052 = vpop.f32.mrb[0].mxu0
        %v3053 = vpop.f32.mrb[0].mxu0
        %3054 = vdwg.mxu0
        %3055 = vmatprep.subr.bf16.mxu0 %v2982
        %3056 = vmatpush1.bf16.msra.mxu0 %v2981
        %3057 = vmatprep.subr.bf16.mxu0 %v2986
        %3058 = vmatpush1.bf16.msra.mxu0 %v2985
        %3059 = vmatprep.subr.bf16.mxu0 %v2990
        %3060 = vmatpush1.bf16.msra.mxu0 %v2989
        %3061 = vmatprep.subr.bf16.mxu0 %v2994
        %3062 = vmatpush1.bf16.msra.mxu0 %v2993
        %3063 = vmatprep.subr.bf16.mxu0 0
        %3064 = vmatpush1.bf16.msra.mxu0 0
        %3065 = vmatprep.subr.bf16.mxu0 0
        %3066 = vmatpush1.bf16.msra.mxu0 0
        %3067 = vmatprep.subr.bf16.mxu0 0
        %3068 = vmatpush1.bf16.msra.mxu0 0
        %3069 = vmatprep.subr.bf16.mxu0 0
        %3070 = vmatpush1.bf16.msra.mxu0 0
        %3071 = vmatprep.subr.bf16.mxu0 0
        %3072 = vmatpush1.bf16.msra.mxu0 0
        %3073 = vmatprep.subr.bf16.mxu0 0
        %3074 = vmatpush1.bf16.msra.mxu0 0
        %3075 = vmatprep.subr.bf16.mxu0 0
        %3076 = vmatpush1.bf16.msra.mxu0 0
        %3077 = vmatprep.subr.bf16.mxu0 0
        %3078 = vmatpush1.bf16.msra.mxu0 0
        %3079 = vmatprep.subr.bf16.mxu0 0
        %3080 = vmatpush1.bf16.msra.mxu0 0
        %3081 = vmatprep.subr.bf16.mxu0 0
        %3082 = vmatpush1.bf16.msra.mxu0 0
        %3083 = vmatprep.subr.bf16.mxu0 0
        %3084 = vmatpush1.bf16.msra.mxu0 0
        %3085 = vmatprep.subr.bf16.mxu0 0
        %3086 = vmatpush1.bf16.msra.mxu0 0
        %3087 = vmatprep.mubr.bf16.mxu0 0
        %3088 = vmatmul.mubr.bf16.gmra.mrb[0].mxu0 %v3012
        %v3089 = vpop.f32.mrb[0].mxu0
        %v3090 = vadd.f32 0.0, %v3089
        %v3091 = vpop.f32.mrb[0].mxu0
        %v3092 = vadd.f32 0.0, %v3091
        %v3093 = vpop.f32.mrb[0].mxu0
        %v3094 = vpop.f32.mrb[0].mxu0
        %3095 = vdwg.mxu0
        %v3112 = vunpack.c.l.b16 %v2691
        %v3113 = vunpack.c.h.b16 %v2691
        %v3114 = vunpack.c.l.b16 %v2692
        %v3115 = vunpack.c.h.b16 %v2692
        %v3116 = vunpack.c.l.b16 %v2693
        %v3117 = vunpack.c.h.b16 %v2693
        %v3118 = vunpack.c.l.b16 %v2694
        %v3119 = vunpack.c.h.b16 %v2694
        %v3120 = vunpack.c.l.b16 %v2695
        %v3121 = vunpack.c.h.b16 %v2695
        %v3122 = vunpack.c.l.b16 %v2696
        %v3123 = vunpack.c.h.b16 %v2696
        %v3124 = vunpack.c.l.b16 %v2697
        %v3125 = vunpack.c.h.b16 %v2697
        %v3126 = vunpack.c.l.b16 %v2698
        %v3127 = vunpack.c.h.b16 %v2698
        %v3128 = vunpack.c.l.b16 %v2699
        %v3129 = vunpack.c.h.b16 %v2699
        %v3130 = vunpack.c.l.b16 %v2700
        %v3131 = vunpack.c.h.b16 %v2700
        %v3132 = vunpack.c.l.b16 %v2701
        %v3133 = vunpack.c.h.b16 %v2701
        %v3134 = vunpack.c.l.b16 %v2702
        %v3135 = vunpack.c.h.b16 %v2702
        %v3136 = vunpack.c.l.b16 %v2703
        %v3137 = vunpack.c.h.b16 %v2703
        %v3138 = vunpack.c.l.b16 %v2704
        %v3139 = vunpack.c.h.b16 %v2704
        %v3140 = vunpack.c.l.b16 %v2705
        %v3141 = vunpack.c.h.b16 %v2705
        %v3142 = vunpack.c.l.b16 %v2706
        %v3143 = vunpack.c.h.b16 %v2706
        %v3144 = vpack.c.b16 %v3116, %v3112
        %v3145 = vpack.c.b16 %v3117, %v3113
        %v3146 = vpack.c.b16 %v3118, %v3114
        %v3147 = vpack.c.b16 %v3119, %v3115
        %v3148 = vpack.c.b16 %v3124, %v3120
        %v3149 = vpack.c.b16 %v3125, %v3121
        %v3150 = vpack.c.b16 %v3126, %v3122
        %v3151 = vpack.c.b16 %v3127, %v3123
        %v3152 = vpack.c.b16 %v3132, %v3128
        %v3153 = vpack.c.b16 %v3133, %v3129
        %v3154 = vpack.c.b16 %v3134, %v3130
        %v3155 = vpack.c.b16 %v3135, %v3131
        %v3156 = vpack.c.b16 %v3140, %v3136
        %v3157 = vpack.c.b16 %v3141, %v3137
        %v3158 = vpack.c.b16 %v3142, %v3138
        %v3159 = vpack.c.b16 %v3143, %v3139
        %v3177 = vsel %vm900, %v2660, 0
        %3179 = vmatprep.subr.bf16.mxu0 %v3145
        %3180 = vmatpush1.bf16.msra.mxu0 %v3144
        %3181 = vmatprep.subr.bf16.mxu0 %v3149
        %3182 = vmatpush1.bf16.msra.mxu0 %v3148
        %3183 = vmatprep.subr.bf16.mxu0 %v3153
        %3184 = vmatpush1.bf16.msra.mxu0 %v3152
        %3185 = vmatprep.subr.bf16.mxu0 %v3157
        %3186 = vmatpush1.bf16.msra.mxu0 %v3156
        %3187 = vmatprep.subr.bf16.mxu0 0
        %3188 = vmatpush1.bf16.msra.mxu0 0
        %3189 = vmatprep.subr.bf16.mxu0 0
        %3190 = vmatpush1.bf16.msra.mxu0 0
        %3191 = vmatprep.subr.bf16.mxu0 0
        %3192 = vmatpush1.bf16.msra.mxu0 0
        %3193 = vmatprep.subr.bf16.mxu0 0
        %3194 = vmatpush1.bf16.msra.mxu0 0
        %3195 = vmatprep.subr.bf16.mxu0 0
        %3196 = vmatpush1.bf16.msra.mxu0 0
        %3197 = vmatprep.subr.bf16.mxu0 0
        %3198 = vmatpush1.bf16.msra.mxu0 0
        %3199 = vmatprep.subr.bf16.mxu0 0
        %3200 = vmatpush1.bf16.msra.mxu0 0
        %3201 = vmatprep.subr.bf16.mxu0 0
        %3202 = vmatpush1.bf16.msra.mxu0 0
        %3203 = vmatprep.subr.bf16.mxu0 0
        %3204 = vmatpush1.bf16.msra.mxu0 0
        %3205 = vmatprep.subr.bf16.mxu0 0
        %3206 = vmatpush1.bf16.msra.mxu0 0
        %3207 = vmatprep.subr.bf16.mxu0 0
        %3208 = vmatpush1.bf16.msra.mxu0 0
        %3209 = vmatprep.subr.bf16.mxu0 0
        %3210 = vmatpush1.bf16.msra.mxu0 0
        %3211 = vmatprep.mubr.bf16.mxu0 0
        %3212 = vmatmul.mubr.bf16.gmra.mrb[0].mxu0 %v3177
        %v3213 = vpop.f32.mrb[0].mxu0
        %v3214 = vadd.f32 0.0, %v3213
        %v3215 = vpop.f32.mrb[0].mxu0
        %v3216 = vadd.f32 0.0, %v3215
        %v3217 = vpop.f32.mrb[0].mxu0
        %v3218 = vpop.f32.mrb[0].mxu0
        %3219 = vdwg.mxu0
        %3220 = vmatprep.subr.bf16.mxu0 %v3147
        %3221 = vmatpush1.bf16.msra.mxu0 %v3146
        %3222 = vmatprep.subr.bf16.mxu0 %v3151
        %3223 = vmatpush1.bf16.msra.mxu0 %v3150
        %3224 = vmatprep.subr.bf16.mxu0 %v3155
        %3225 = vmatpush1.bf16.msra.mxu0 %v3154
        %3226 = vmatprep.subr.bf16.mxu0 %v3159
        %3227 = vmatpush1.bf16.msra.mxu0 %v3158
        %3228 = vmatprep.subr.bf16.mxu0 0
        %3229 = vmatpush1.bf16.msra.mxu0 0
        %3230 = vmatprep.subr.bf16.mxu0 0
        %3231 = vmatpush1.bf16.msra.mxu0 0
        %3232 = vmatprep.subr.bf16.mxu0 0
        %3233 = vmatpush1.bf16.msra.mxu0 0
        %3234 = vmatprep.subr.bf16.mxu0 0
        %3235 = vmatpush1.bf16.msra.mxu0 0
        %3236 = vmatprep.subr.bf16.mxu0 0
        %3237 = vmatpush1.bf16.msra.mxu0 0
        %3238 = vmatprep.subr.bf16.mxu0 0
        %3239 = vmatpush1.bf16.msra.mxu0 0
        %3240 = vmatprep.subr.bf16.mxu0 0
        %3241 = vmatpush1.bf16.msra.mxu0 0
        %3242 = vmatprep.subr.bf16.mxu0 0
        %3243 = vmatpush1.bf16.msra.mxu0 0
        %3244 = vmatprep.subr.bf16.mxu0 0
        %3245 = vmatpush1.bf16.msra.mxu0 0
        %3246 = vmatprep.subr.bf16.mxu0 0
        %3247 = vmatpush1.bf16.msra.mxu0 0
        %3248 = vmatprep.subr.bf16.mxu0 0
        %3249 = vmatpush1.bf16.msra.mxu0 0
        %3250 = vmatprep.subr.bf16.mxu0 0
        %3251 = vmatpush1.bf16.msra.mxu0 0
        %3252 = vmatprep.mubr.bf16.mxu0 0
        %3253 = vmatmul.mubr.bf16.gmra.mrb[0].mxu0 %v3177
        %v3254 = vpop.f32.mrb[0].mxu0
        %v3255 = vadd.f32 0.0, %v3254
        %v3256 = vpop.f32.mrb[0].mxu0
        %v3257 = vadd.f32 0.0, %v3256
        %v3258 = vpop.f32.mrb[0].mxu0
        %v3259 = vpop.f32.mrb[0].mxu0
        %3260 = vdwg.mxu0
        %v3277 = vunpack.c.l.b16 %v2707
        %v3278 = vunpack.c.h.b16 %v2707
        %v3279 = vunpack.c.l.b16 %v2708
        %v3280 = vunpack.c.h.b16 %v2708
        %v3281 = vunpack.c.l.b16 %v2709
        %v3282 = vunpack.c.h.b16 %v2709
        %v3283 = vunpack.c.l.b16 %v2710
        %v3284 = vunpack.c.h.b16 %v2710
        %v3285 = vunpack.c.l.b16 %v2711
        %v3286 = vunpack.c.h.b16 %v2711
        %v3287 = vunpack.c.l.b16 %v2712
        %v3288 = vunpack.c.h.b16 %v2712
        %v3289 = vunpack.c.l.b16 %v2713
        %v3290 = vunpack.c.h.b16 %v2713
        %v3291 = vunpack.c.l.b16 %v2714
        %v3292 = vunpack.c.h.b16 %v2714
        %v3293 = vunpack.c.l.b16 %v2715
        %v3294 = vunpack.c.h.b16 %v2715
        %v3295 = vunpack.c.l.b16 %v2716
        %v3296 = vunpack.c.h.b16 %v2716
        %v3297 = vunpack.c.l.b16 %v2717
        %v3298 = vunpack.c.h.b16 %v2717
        %v3299 = vunpack.c.l.b16 %v2718
        %v3300 = vunpack.c.h.b16 %v2718
        %v3301 = vunpack.c.l.b16 %v2719
        %v3302 = vunpack.c.h.b16 %v2719
        %v3303 = vunpack.c.l.b16 %v2720
        %v3304 = vunpack.c.h.b16 %v2720
        %v3305 = vunpack.c.l.b16 %v2721
        %v3306 = vunpack.c.h.b16 %v2721
        %v3307 = vunpack.c.l.b16 %v2722
        %v3308 = vunpack.c.h.b16 %v2722
        %v3309 = vpack.c.b16 %v3281, %v3277
        %v3310 = vpack.c.b16 %v3282, %v3278
        %v3311 = vpack.c.b16 %v3283, %v3279
        %v3312 = vpack.c.b16 %v3284, %v3280
        %v3313 = vpack.c.b16 %v3289, %v3285
        %v3314 = vpack.c.b16 %v3290, %v3286
        %v3315 = vpack.c.b16 %v3291, %v3287
        %v3316 = vpack.c.b16 %v3292, %v3288
        %v3317 = vpack.c.b16 %v3297, %v3293
        %v3318 = vpack.c.b16 %v3298, %v3294
        %v3319 = vpack.c.b16 %v3299, %v3295
        %v3320 = vpack.c.b16 %v3300, %v3296
        %v3321 = vpack.c.b16 %v3305, %v3301
        %v3322 = vpack.c.b16 %v3306, %v3302
        %v3323 = vpack.c.b16 %v3307, %v3303
        %v3324 = vpack.c.b16 %v3308, %v3304
        %v3342 = vsel %vm900, %v2661, 0
        %3344 = vmatprep.subr.bf16.mxu0 %v3310
        %3345 = vmatpush1.bf16.msra.mxu0 %v3309
        %3346 = vmatprep.subr.bf16.mxu0 %v3314
        %3347 = vmatpush1.bf16.msra.mxu0 %v3313
        %3348 = vmatprep.subr.bf16.mxu0 %v3318
        %3349 = vmatpush1.bf16.msra.mxu0 %v3317
        %3350 = vmatprep.subr.bf16.mxu0 %v3322
        %3351 = vmatpush1.bf16.msra.mxu0 %v3321
        %3352 = vmatprep.subr.bf16.mxu0 0
        %3353 = vmatpush1.bf16.msra.mxu0 0
        %3354 = vmatprep.subr.bf16.mxu0 0
        %3355 = vmatpush1.bf16.msra.mxu0 0
        %3356 = vmatprep.subr.bf16.mxu0 0
        %3357 = vmatpush1.bf16.msra.mxu0 0
        %3358 = vmatprep.subr.bf16.mxu0 0
        %3359 = vmatpush1.bf16.msra.mxu0 0
        %3360 = vmatprep.subr.bf16.mxu0 0
        %3361 = vmatpush1.bf16.msra.mxu0 0
        %3362 = vmatprep.subr.bf16.mxu0 0
        %3363 = vmatpush1.bf16.msra.mxu0 0
        %3364 = vmatprep.subr.bf16.mxu0 0
        %3365 = vmatpush1.bf16.msra.mxu0 0
        %3366 = vmatprep.subr.bf16.mxu0 0
        %3367 = vmatpush1.bf16.msra.mxu0 0
        %3368 = vmatprep.subr.bf16.mxu0 0
        %3369 = vmatpush1.bf16.msra.mxu0 0
        %3370 = vmatprep.subr.bf16.mxu0 0
        %3371 = vmatpush1.bf16.msra.mxu0 0
        %3372 = vmatprep.subr.bf16.mxu0 0
        %3373 = vmatpush1.bf16.msra.mxu0 0
        %3374 = vmatprep.subr.bf16.mxu0 0
        %3375 = vmatpush1.bf16.msra.mxu0 0
        %3376 = vmatprep.mubr.bf16.mxu0 0
        %3377 = vmatmul.mubr.bf16.gmra.mrb[0].mxu0 %v3342
        %v3378 = vpop.f32.mrb[0].mxu0
        %v3379 = vadd.f32 0.0, %v3378
        %v3380 = vpop.f32.mrb[0].mxu0
        %v3381 = vadd.f32 0.0, %v3380
        %v3382 = vpop.f32.mrb[0].mxu0
        %v3383 = vpop.f32.mrb[0].mxu0
        %3384 = vdwg.mxu0
        %3385 = vmatprep.subr.bf16.mxu0 %v3312
        %3386 = vmatpush1.bf16.msra.mxu0 %v3311
        %3387 = vmatprep.subr.bf16.mxu0 %v3316
        %3388 = vmatpush1.bf16.msra.mxu0 %v3315
        %3389 = vmatprep.subr.bf16.mxu0 %v3320
        %3390 = vmatpush1.bf16.msra.mxu0 %v3319
        %3391 = vmatprep.subr.bf16.mxu0 %v3324
        %3392 = vmatpush1.bf16.msra.mxu0 %v3323
        %3393 = vmatprep.subr.bf16.mxu0 0
        %3394 = vmatpush1.bf16.msra.mxu0 0
        %3395 = vmatprep.subr.bf16.mxu0 0
        %3396 = vmatpush1.bf16.msra.mxu0 0
        %3397 = vmatprep.subr.bf16.mxu0 0
        %3398 = vmatpush1.bf16.msra.mxu0 0
        %3399 = vmatprep.subr.bf16.mxu0 0
        %3400 = vmatpush1.bf16.msra.mxu0 0
        %3401 = vmatprep.subr.bf16.mxu0 0
        %3402 = vmatpush1.bf16.msra.mxu0 0
        %3403 = vmatprep.subr.bf16.mxu0 0
        %3404 = vmatpush1.bf16.msra.mxu0 0
        %3405 = vmatprep.subr.bf16.mxu0 0
        %3406 = vmatpush1.bf16.msra.mxu0 0
        %3407 = vmatprep.subr.bf16.mxu0 0
        %3408 = vmatpush1.bf16.msra.mxu0 0
        %3409 = vmatprep.subr.bf16.mxu0 0
        %3410 = vmatpush1.bf16.msra.mxu0 0
        %3411 = vmatprep.subr.bf16.mxu0 0
        %3412 = vmatpush1.bf16.msra.mxu0 0
        %3413 = vmatprep.subr.bf16.mxu0 0
        %3414 = vmatpush1.bf16.msra.mxu0 0
        %3415 = vmatprep.subr.bf16.mxu0 0
        %3416 = vmatpush1.bf16.msra.mxu0 0
        %3417 = vmatprep.mubr.bf16.mxu0 0
        %3418 = vmatmul.mubr.bf16.gmra.mrb[0].mxu0 %v3342
        %v3419 = vpop.f32.mrb[0].mxu0
        %v3420 = vadd.f32 0.0, %v3419
        %v3421 = vpop.f32.mrb[0].mxu0
        %v3422 = vadd.f32 0.0, %v3421
        %v3423 = vpop.f32.mrb[0].mxu0
        %v3424 = vpop.f32.mrb[0].mxu0
        %3425 = vdwg.mxu0
        %v3442 = vunpack.c.l.b16 %v2723
        %v3443 = vunpack.c.h.b16 %v2723
        %v3444 = vunpack.c.l.b16 %v2724
        %v3445 = vunpack.c.h.b16 %v2724
        %v3446 = vunpack.c.l.b16 %v2725
        %v3447 = vunpack.c.h.b16 %v2725
        %v3448 = vunpack.c.l.b16 %v2726
        %v3449 = vunpack.c.h.b16 %v2726
        %v3450 = vunpack.c.l.b16 %v2727
        %v3451 = vunpack.c.h.b16 %v2727
        %v3452 = vunpack.c.l.b16 %v2728
        %v3453 = vunpack.c.h.b16 %v2728
        %v3454 = vunpack.c.l.b16 %v2729
        %v3455 = vunpack.c.h.b16 %v2729
        %v3456 = vunpack.c.l.b16 %v2730
        %v3457 = vunpack.c.h.b16 %v2730
        %v3458 = vunpack.c.l.b16 %v2731
        %v3459 = vunpack.c.h.b16 %v2731
        %v3460 = vunpack.c.l.b16 %v2732
        %v3461 = vunpack.c.h.b16 %v2732
        %v3462 = vunpack.c.l.b16 %v2733
        %v3463 = vunpack.c.h.b16 %v2733
        %v3464 = vunpack.c.l.b16 %v2734
        %v3465 = vunpack.c.h.b16 %v2734
        %v3466 = vunpack.c.l.b16 %v2735
        %v3467 = vunpack.c.h.b16 %v2735
        %v3468 = vunpack.c.l.b16 %v2736
        %v3469 = vunpack.c.h.b16 %v2736
        %v3470 = vunpack.c.l.b16 %v2737
        %v3471 = vunpack.c.h.b16 %v2737
        %v3472 = vunpack.c.l.b16 %v2738
        %v3473 = vunpack.c.h.b16 %v2738
        %v3474 = vpack.c.b16 %v3446, %v3442
        %v3475 = vpack.c.b16 %v3447, %v3443
        %v3476 = vpack.c.b16 %v3448, %v3444
        %v3477 = vpack.c.b16 %v3449, %v3445
        %v3478 = vpack.c.b16 %v3454, %v3450
        %v3479 = vpack.c.b16 %v3455, %v3451
        %v3480 = vpack.c.b16 %v3456, %v3452
        %v3481 = vpack.c.b16 %v3457, %v3453
        %v3482 = vpack.c.b16 %v3462, %v3458
        %v3483 = vpack.c.b16 %v3463, %v3459
        %v3484 = vpack.c.b16 %v3464, %v3460
        %v3485 = vpack.c.b16 %v3465, %v3461
        %v3486 = vpack.c.b16 %v3470, %v3466
        %v3487 = vpack.c.b16 %v3471, %v3467
        %v3488 = vpack.c.b16 %v3472, %v3468
        %v3489 = vpack.c.b16 %v3473, %v3469
        %v3507 = vsel %vm900, %v2662, 0
        %3509 = vmatprep.subr.bf16.mxu0 %v3475
        %3510 = vmatpush1.bf16.msra.mxu0 %v3474
        %3511 = vmatprep.subr.bf16.mxu0 %v3479
        %3512 = vmatpush1.bf16.msra.mxu0 %v3478
        %3513 = vmatprep.subr.bf16.mxu0 %v3483
        %3514 = vmatpush1.bf16.msra.mxu0 %v3482
        %3515 = vmatprep.subr.bf16.mxu0 %v3487
        %3516 = vmatpush1.bf16.msra.mxu0 %v3486
        %3517 = vmatprep.subr.bf16.mxu0 0
        %3518 = vmatpush1.bf16.msra.mxu0 0
        %3519 = vmatprep.subr.bf16.mxu0 0
        %3520 = vmatpush1.bf16.msra.mxu0 0
        %3521 = vmatprep.subr.bf16.mxu0 0
        %3522 = vmatpush1.bf16.msra.mxu0 0
        %3523 = vmatprep.subr.bf16.mxu0 0
        %3524 = vmatpush1.bf16.msra.mxu0 0
        %3525 = vmatprep.subr.bf16.mxu0 0
        %3526 = vmatpush1.bf16.msra.mxu0 0
        %3527 = vmatprep.subr.bf16.mxu0 0
        %3528 = vmatpush1.bf16.msra.mxu0 0
        %3529 = vmatprep.subr.bf16.mxu0 0
        %3530 = vmatpush1.bf16.msra.mxu0 0
        %3531 = vmatprep.subr.bf16.mxu0 0
        %3532 = vmatpush1.bf16.msra.mxu0 0
        %3533 = vmatprep.subr.bf16.mxu0 0
        %3534 = vmatpush1.bf16.msra.mxu0 0
        %3535 = vmatprep.subr.bf16.mxu0 0
        %3536 = vmatpush1.bf16.msra.mxu0 0
        %3537 = vmatprep.subr.bf16.mxu0 0
        %3538 = vmatpush1.bf16.msra.mxu0 0
        %3539 = vmatprep.subr.bf16.mxu0 0
        %3540 = vmatpush1.bf16.msra.mxu0 0
        %3541 = vmatprep.mubr.bf16.mxu0 0
        %3542 = vmatmul.mubr.bf16.gmra.mrb[0].mxu0 %v3507
        %v3543 = vpop.f32.mrb[0].mxu0
        %v3544 = vadd.f32 0.0, %v3543
        %v3545 = vpop.f32.mrb[0].mxu0
        %v3546 = vadd.f32 0.0, %v3545
        %v3547 = vpop.f32.mrb[0].mxu0
        %v3548 = vpop.f32.mrb[0].mxu0
        %3549 = vdwg.mxu0
        %3550 = vmatprep.subr.bf16.mxu0 %v3477
        %3551 = vmatpush1.bf16.msra.mxu0 %v3476
        %3552 = vmatprep.subr.bf16.mxu0 %v3481
        %3553 = vmatpush1.bf16.msra.mxu0 %v3480
        %3554 = vmatprep.subr.bf16.mxu0 %v3485
        %3555 = vmatpush1.bf16.msra.mxu0 %v3484
        %3556 = vmatprep.subr.bf16.mxu0 %v3489
        %3557 = vmatpush1.bf16.msra.mxu0 %v3488
        %3558 = vmatprep.subr.bf16.mxu0 0
        %3559 = vmatpush1.bf16.msra.mxu0 0
        %3560 = vmatprep.subr.bf16.mxu0 0
        %3561 = vmatpush1.bf16.msra.mxu0 0
        %3562 = vmatprep.subr.bf16.mxu0 0
        %3563 = vmatpush1.bf16.msra.mxu0 0
        %3564 = vmatprep.subr.bf16.mxu0 0
        %3565 = vmatpush1.bf16.msra.mxu0 0
        %3566 = vmatprep.subr.bf16.mxu0 0
        %3567 = vmatpush1.bf16.msra.mxu0 0
        %3568 = vmatprep.subr.bf16.mxu0 0
        %3569 = vmatpush1.bf16.msra.mxu0 0
        %3570 = vmatprep.subr.bf16.mxu0 0
        %3571 = vmatpush1.bf16.msra.mxu0 0
        %3572 = vmatprep.subr.bf16.mxu0 0
        %3573 = vmatpush1.bf16.msra.mxu0 0
        %3574 = vmatprep.subr.bf16.mxu0 0
        %3575 = vmatpush1.bf16.msra.mxu0 0
        %3576 = vmatprep.subr.bf16.mxu0 0
        %3577 = vmatpush1.bf16.msra.mxu0 0
        %3578 = vmatprep.subr.bf16.mxu0 0
        %3579 = vmatpush1.bf16.msra.mxu0 0
        %3580 = vmatprep.subr.bf16.mxu0 0
        %3581 = vmatpush1.bf16.msra.mxu0 0
        %3582 = vmatprep.mubr.bf16.mxu0 0
        %3583 = vmatmul.mubr.bf16.gmra.mrb[0].mxu0 %v3507
        %v3584 = vpop.f32.mrb[0].mxu0
        %v3585 = vadd.f32 0.0, %v3584
        %v3586 = vpop.f32.mrb[0].mxu0
        %v3587 = vadd.f32 0.0, %v3586
        %v3588 = vpop.f32.mrb[0].mxu0
        %v3589 = vpop.f32.mrb[0].mxu0
        %3590 = vdwg.mxu0
        %v3607 = vunpack.c.l.b16 %v2739
        %v3608 = vunpack.c.h.b16 %v2739
        %v3609 = vunpack.c.l.b16 %v2740
        %v3610 = vunpack.c.h.b16 %v2740
        %v3611 = vunpack.c.l.b16 %v2741
        %v3612 = vunpack.c.h.b16 %v2741
        %v3613 = vunpack.c.l.b16 %v2742
        %v3614 = vunpack.c.h.b16 %v2742
        %v3615 = vunpack.c.l.b16 %v2743
        %v3616 = vunpack.c.h.b16 %v2743
        %v3617 = vunpack.c.l.b16 %v2744
        %v3618 = vunpack.c.h.b16 %v2744
        %v3619 = vunpack.c.l.b16 %v2745
        %v3620 = vunpack.c.h.b16 %v2745
        %v3621 = vunpack.c.l.b16 %v2746
        %v3622 = vunpack.c.h.b16 %v2746
        %v3623 = vunpack.c.l.b16 %v2747
        %v3624 = vunpack.c.h.b16 %v2747
        %v3625 = vunpack.c.l.b16 %v2748
        %v3626 = vunpack.c.h.b16 %v2748
        %v3627 = vunpack.c.l.b16 %v2749
        %v3628 = vunpack.c.h.b16 %v2749
        %v3629 = vunpack.c.l.b16 %v2750
        %v3630 = vunpack.c.h.b16 %v2750
        %v3631 = vunpack.c.l.b16 %v2751
        %v3632 = vunpack.c.h.b16 %v2751
        %v3633 = vunpack.c.l.b16 %v2752
        %v3634 = vunpack.c.h.b16 %v2752
        %v3635 = vunpack.c.l.b16 %v2753
        %v3636 = vunpack.c.h.b16 %v2753
        %v3637 = vunpack.c.l.b16 %v2754
        %v3638 = vunpack.c.h.b16 %v2754
        %v3639 = vpack.c.b16 %v3611, %v3607
        %v3640 = vpack.c.b16 %v3612, %v3608
        %v3641 = vpack.c.b16 %v3613, %v3609
        %v3642 = vpack.c.b16 %v3614, %v3610
        %v3643 = vpack.c.b16 %v3619, %v3615
        %v3644 = vpack.c.b16 %v3620, %v3616
        %v3645 = vpack.c.b16 %v3621, %v3617
        %v3646 = vpack.c.b16 %v3622, %v3618
        %v3647 = vpack.c.b16 %v3627, %v3623
        %v3648 = vpack.c.b16 %v3628, %v3624
        %v3649 = vpack.c.b16 %v3629, %v3625
        %v3650 = vpack.c.b16 %v3630, %v3626
        %v3651 = vpack.c.b16 %v3635, %v3631
        %v3652 = vpack.c.b16 %v3636, %v3632
        %v3653 = vpack.c.b16 %v3637, %v3633
        %v3654 = vpack.c.b16 %v3638, %v3634
        %v3672 = vsel %vm900, %v2663, 0
        %3674 = vmatprep.subr.bf16.mxu0 %v3640
        %3675 = vmatpush1.bf16.msra.mxu0 %v3639
        %3676 = vmatprep.subr.bf16.mxu0 %v3644
        %3677 = vmatpush1.bf16.msra.mxu0 %v3643
        %3678 = vmatprep.subr.bf16.mxu0 %v3648
        %3679 = vmatpush1.bf16.msra.mxu0 %v3647
        %3680 = vmatprep.subr.bf16.mxu0 %v3652
        %3681 = vmatpush1.bf16.msra.mxu0 %v3651
        %3682 = vmatprep.subr.bf16.mxu0 0
        %3683 = vmatpush1.bf16.msra.mxu0 0
        %3684 = vmatprep.subr.bf16.mxu0 0
        %3685 = vmatpush1.bf16.msra.mxu0 0
        %3686 = vmatprep.subr.bf16.mxu0 0
        %3687 = vmatpush1.bf16.msra.mxu0 0
        %3688 = vmatprep.subr.bf16.mxu0 0
        %3689 = vmatpush1.bf16.msra.mxu0 0
        %3690 = vmatprep.subr.bf16.mxu0 0
        %3691 = vmatpush1.bf16.msra.mxu0 0
        %3692 = vmatprep.subr.bf16.mxu0 0
        %3693 = vmatpush1.bf16.msra.mxu0 0
        %3694 = vmatprep.subr.bf16.mxu0 0
        %3695 = vmatpush1.bf16.msra.mxu0 0
        %3696 = vmatprep.subr.bf16.mxu0 0
        %3697 = vmatpush1.bf16.msra.mxu0 0
        %3698 = vmatprep.subr.bf16.mxu0 0
        %3699 = vmatpush1.bf16.msra.mxu0 0
        %3700 = vmatprep.subr.bf16.mxu0 0
        %3701 = vmatpush1.bf16.msra.mxu0 0
        %3702 = vmatprep.subr.bf16.mxu0 0
        %3703 = vmatpush1.bf16.msra.mxu0 0
        %3704 = vmatprep.subr.bf16.mxu0 0
        %3705 = vmatpush1.bf16.msra.mxu0 0
        %3706 = vmatprep.mubr.bf16.mxu0 0
        %3707 = vmatmul.mubr.bf16.gmra.mrb[0].mxu0 %v3672
        %v3708 = vpop.f32.mrb[0].mxu0
        %v3709 = vadd.f32 0.0, %v3708
        %v3710 = vpop.f32.mrb[0].mxu0
        %v3711 = vadd.f32 0.0, %v3710
        %v3712 = vpop.f32.mrb[0].mxu0
        %v3713 = vpop.f32.mrb[0].mxu0
        %3714 = vdwg.mxu0
        %3715 = vmatprep.subr.bf16.mxu0 %v3642
        %3716 = vmatpush1.bf16.msra.mxu0 %v3641
        %3717 = vmatprep.subr.bf16.mxu0 %v3646
        %3718 = vmatpush1.bf16.msra.mxu0 %v3645
        %3719 = vmatprep.subr.bf16.mxu0 %v3650
        %3720 = vmatpush1.bf16.msra.mxu0 %v3649
        %3721 = vmatprep.subr.bf16.mxu0 %v3654
        %3722 = vmatpush1.bf16.msra.mxu0 %v3653
        %3723 = vmatprep.subr.bf16.mxu0 0
        %3724 = vmatpush1.bf16.msra.mxu0 0
        %3725 = vmatprep.subr.bf16.mxu0 0
        %3726 = vmatpush1.bf16.msra.mxu0 0
        %3727 = vmatprep.subr.bf16.mxu0 0
        %3728 = vmatpush1.bf16.msra.mxu0 0
        %3729 = vmatprep.subr.bf16.mxu0 0
        %3730 = vmatpush1.bf16.msra.mxu0 0
        %3731 = vmatprep.subr.bf16.mxu0 0
        %3732 = vmatpush1.bf16.msra.mxu0 0
        %3733 = vmatprep.subr.bf16.mxu0 0
        %3734 = vmatpush1.bf16.msra.mxu0 0
        %3735 = vmatprep.subr.bf16.mxu0 0
        %3736 = vmatpush1.bf16.msra.mxu0 0
        %3737 = vmatprep.subr.bf16.mxu0 0
        %3738 = vmatpush1.bf16.msra.mxu0 0
        %3739 = vmatprep.subr.bf16.mxu0 0
        %3740 = vmatpush1.bf16.msra.mxu0 0
        %3741 = vmatprep.subr.bf16.mxu0 0
        %3742 = vmatpush1.bf16.msra.mxu0 0
        %3743 = vmatprep.subr.bf16.mxu0 0
        %3744 = vmatpush1.bf16.msra.mxu0 0
        %3745 = vmatprep.subr.bf16.mxu0 0
        %3746 = vmatpush1.bf16.msra.mxu0 0
        %3747 = vmatprep.mubr.bf16.mxu0 0
        %3748 = vmatmul.mubr.bf16.gmra.mrb[0].mxu0 %v3672
        %v3749 = vpop.f32.mrb[0].mxu0
        %v3750 = vadd.f32 0.0, %v3749
        %v3751 = vpop.f32.mrb[0].mxu0
        %v3752 = vadd.f32 0.0, %v3751
        %v3753 = vpop.f32.mrb[0].mxu0
        %v3754 = vpop.f32.mrb[0].mxu0
        %3755 = vdwg.mxu0
        %v3772 = vunpack.c.l.b16 %v2755
        %v3773 = vunpack.c.h.b16 %v2755
        %v3774 = vunpack.c.l.b16 %v2756
        %v3775 = vunpack.c.h.b16 %v2756
        %v3776 = vunpack.c.l.b16 %v2757
        %v3777 = vunpack.c.h.b16 %v2757
        %v3778 = vunpack.c.l.b16 %v2758
        %v3779 = vunpack.c.h.b16 %v2758
        %v3780 = vunpack.c.l.b16 %v2759
        %v3781 = vunpack.c.h.b16 %v2759
        %v3782 = vunpack.c.l.b16 %v2760
        %v3783 = vunpack.c.h.b16 %v2760
        %v3784 = vunpack.c.l.b16 %v2761
        %v3785 = vunpack.c.h.b16 %v2761
        %v3786 = vunpack.c.l.b16 %v2762
        %v3787 = vunpack.c.h.b16 %v2762
        %v3788 = vunpack.c.l.b16 %v2763
        %v3789 = vunpack.c.h.b16 %v2763
        %v3790 = vunpack.c.l.b16 %v2764
        %v3791 = vunpack.c.h.b16 %v2764
        %v3792 = vunpack.c.l.b16 %v2765
        %v3793 = vunpack.c.h.b16 %v2765
        %v3794 = vunpack.c.l.b16 %v2766
        %v3795 = vunpack.c.h.b16 %v2766
        %v3796 = vunpack.c.l.b16 %v2767
        %v3797 = vunpack.c.h.b16 %v2767
        %v3798 = vunpack.c.l.b16 %v2768
        %v3799 = vunpack.c.h.b16 %v2768
        %v3800 = vunpack.c.l.b16 %v2769
        %v3801 = vunpack.c.h.b16 %v2769
        %v3802 = vunpack.c.l.b16 %v2770
        %v3803 = vunpack.c.h.b16 %v2770
        %v3804 = vpack.c.b16 %v3776, %v3772
        %v3805 = vpack.c.b16 %v3777, %v3773
        %v3806 = vpack.c.b16 %v3778, %v3774
        %v3807 = vpack.c.b16 %v3779, %v3775
        %v3808 = vpack.c.b16 %v3784, %v3780
        %v3809 = vpack.c.b16 %v3785, %v3781
        %v3810 = vpack.c.b16 %v3786, %v3782
        %v3811 = vpack.c.b16 %v3787, %v3783
        %v3812 = vpack.c.b16 %v3792, %v3788
        %v3813 = vpack.c.b16 %v3793, %v3789
        %v3814 = vpack.c.b16 %v3794, %v3790
        %v3815 = vpack.c.b16 %v3795, %v3791
        %v3816 = vpack.c.b16 %v3800, %v3796
        %v3817 = vpack.c.b16 %v3801, %v3797
        %v3818 = vpack.c.b16 %v3802, %v3798
        %v3819 = vpack.c.b16 %v3803, %v3799
        %v3837 = vsel %vm900, %v2664, 0
        %3839 = vmatprep.subr.bf16.mxu0 %v3805
        %3840 = vmatpush1.bf16.msra.mxu0 %v3804
        %3841 = vmatprep.subr.bf16.mxu0 %v3809
        %3842 = vmatpush1.bf16.msra.mxu0 %v3808
        %3843 = vmatprep.subr.bf16.mxu0 %v3813
        %3844 = vmatpush1.bf16.msra.mxu0 %v3812
        %3845 = vmatprep.subr.bf16.mxu0 %v3817
        %3846 = vmatpush1.bf16.msra.mxu0 %v3816
        %3847 = vmatprep.subr.bf16.mxu0 0
        %3848 = vmatpush1.bf16.msra.mxu0 0
        %3849 = vmatprep.subr.bf16.mxu0 0
        %3850 = vmatpush1.bf16.msra.mxu0 0
        %3851 = vmatprep.subr.bf16.mxu0 0
        %3852 = vmatpush1.bf16.msra.mxu0 0
        %3853 = vmatprep.subr.bf16.mxu0 0
        %3854 = vmatpush1.bf16.msra.mxu0 0
        %3855 = vmatprep.subr.bf16.mxu0 0
        %3856 = vmatpush1.bf16.msra.mxu0 0
        %3857 = vmatprep.subr.bf16.mxu0 0
        %3858 = vmatpush1.bf16.msra.mxu0 0
        %3859 = vmatprep.subr.bf16.mxu0 0
        %3860 = vmatpush1.bf16.msra.mxu0 0
        %3861 = vmatprep.subr.bf16.mxu0 0
        %3862 = vmatpush1.bf16.msra.mxu0 0
        %3863 = vmatprep.subr.bf16.mxu0 0
        %3864 = vmatpush1.bf16.msra.mxu0 0
        %3865 = vmatprep.subr.bf16.mxu0 0
        %3866 = vmatpush1.bf16.msra.mxu0 0
        %3867 = vmatprep.subr.bf16.mxu0 0
        %3868 = vmatpush1.bf16.msra.mxu0 0
        %3869 = vmatprep.subr.bf16.mxu0 0
        %3870 = vmatpush1.bf16.msra.mxu0 0
        %3871 = vmatprep.mubr.bf16.mxu0 0
        %3872 = vmatmul.mubr.bf16.gmra.mrb[0].mxu0 %v3837
        %v3873 = vpop.f32.mrb[0].mxu0
        %v3874 = vadd.f32 0.0, %v3873
        %v3875 = vpop.f32.mrb[0].mxu0
        %v3876 = vadd.f32 0.0, %v3875
        %v3877 = vpop.f32.mrb[0].mxu0
        %v3878 = vpop.f32.mrb[0].mxu0
        %3879 = vdwg.mxu0
        %3880 = vmatprep.subr.bf16.mxu0 %v3807
        %3881 = vmatpush1.bf16.msra.mxu0 %v3806
        %3882 = vmatprep.subr.bf16.mxu0 %v3811
        %3883 = vmatpush1.bf16.msra.mxu0 %v3810
        %3884 = vmatprep.subr.bf16.mxu0 %v3815
        %3885 = vmatpush1.bf16.msra.mxu0 %v3814
        %3886 = vmatprep.subr.bf16.mxu0 %v3819
        %3887 = vmatpush1.bf16.msra.mxu0 %v3818
        %3888 = vmatprep.subr.bf16.mxu0 0
        %3889 = vmatpush1.bf16.msra.mxu0 0
        %3890 = vmatprep.subr.bf16.mxu0 0
        %3891 = vmatpush1.bf16.msra.mxu0 0
        %3892 = vmatprep.subr.bf16.mxu0 0
        %3893 = vmatpush1.bf16.msra.mxu0 0
        %3894 = vmatprep.subr.bf16.mxu0 0
        %3895 = vmatpush1.bf16.msra.mxu0 0
        %3896 = vmatprep.subr.bf16.mxu0 0
        %3897 = vmatpush1.bf16.msra.mxu0 0
        %3898 = vmatprep.subr.bf16.mxu0 0
        %3899 = vmatpush1.bf16.msra.mxu0 0
        %3900 = vmatprep.subr.bf16.mxu0 0
        %3901 = vmatpush1.bf16.msra.mxu0 0
        %3902 = vmatprep.subr.bf16.mxu0 0
        %3903 = vmatpush1.bf16.msra.mxu0 0
        %3904 = vmatprep.subr.bf16.mxu0 0
        %3905 = vmatpush1.bf16.msra.mxu0 0
        %3906 = vmatprep.subr.bf16.mxu0 0
        %3907 = vmatpush1.bf16.msra.mxu0 0
        %3908 = vmatprep.subr.bf16.mxu0 0
        %3909 = vmatpush1.bf16.msra.mxu0 0
        %3910 = vmatprep.subr.bf16.mxu0 0
        %3911 = vmatpush1.bf16.msra.mxu0 0
        %3912 = vmatprep.mubr.bf16.mxu0 0
        %3913 = vmatmul.mubr.bf16.gmra.mrb[0].mxu0 %v3837
        %v3914 = vpop.f32.mrb[0].mxu0
        %v3915 = vadd.f32 0.0, %v3914
        %v3916 = vpop.f32.mrb[0].mxu0
        %v3917 = vadd.f32 0.0, %v3916
        %v3918 = vpop.f32.mrb[0].mxu0
        %v3919 = vpop.f32.mrb[0].mxu0
        %3920 = vdwg.mxu0
        %v3937 = vunpack.c.l.b16 %v2771
        %v3938 = vunpack.c.h.b16 %v2771
        %v3939 = vunpack.c.l.b16 %v2772
        %v3940 = vunpack.c.h.b16 %v2772
        %v3941 = vunpack.c.l.b16 %v2773
        %v3942 = vunpack.c.h.b16 %v2773
        %v3943 = vunpack.c.l.b16 %v2774
        %v3944 = vunpack.c.h.b16 %v2774
        %v3945 = vunpack.c.l.b16 %v2775
        %v3946 = vunpack.c.h.b16 %v2775
        %v3947 = vunpack.c.l.b16 %v2776
        %v3948 = vunpack.c.h.b16 %v2776
        %v3949 = vunpack.c.l.b16 %v2777
        %v3950 = vunpack.c.h.b16 %v2777
        %v3951 = vunpack.c.l.b16 %v2778
        %v3952 = vunpack.c.h.b16 %v2778
        %v3953 = vunpack.c.l.b16 %v2779
        %v3954 = vunpack.c.h.b16 %v2779
        %v3955 = vunpack.c.l.b16 %v2780
        %v3956 = vunpack.c.h.b16 %v2780
        %v3957 = vunpack.c.l.b16 %v2781
        %v3958 = vunpack.c.h.b16 %v2781
        %v3959 = vunpack.c.l.b16 %v2782
        %v3960 = vunpack.c.h.b16 %v2782
        %v3961 = vunpack.c.l.b16 %v2783
        %v3962 = vunpack.c.h.b16 %v2783
        %v3963 = vunpack.c.l.b16 %v2784
        %v3964 = vunpack.c.h.b16 %v2784
        %v3965 = vunpack.c.l.b16 %v2785
        %v3966 = vunpack.c.h.b16 %v2785
        %v3967 = vunpack.c.l.b16 %v2786
        %v3968 = vunpack.c.h.b16 %v2786
        %v3969 = vpack.c.b16 %v3941, %v3937
        %v3970 = vpack.c.b16 %v3942, %v3938
        %v3971 = vpack.c.b16 %v3943, %v3939
        %v3972 = vpack.c.b16 %v3944, %v3940
        %v3973 = vpack.c.b16 %v3949, %v3945
        %v3974 = vpack.c.b16 %v3950, %v3946
        %v3975 = vpack.c.b16 %v3951, %v3947
        %v3976 = vpack.c.b16 %v3952, %v3948
        %v3977 = vpack.c.b16 %v3957, %v3953
        %v3978 = vpack.c.b16 %v3958, %v3954
        %v3979 = vpack.c.b16 %v3959, %v3955
        %v3980 = vpack.c.b16 %v3960, %v3956
        %v3981 = vpack.c.b16 %v3965, %v3961
        %v3982 = vpack.c.b16 %v3966, %v3962
        %v3983 = vpack.c.b16 %v3967, %v3963
        %v3984 = vpack.c.b16 %v3968, %v3964
        %v4002 = vsel %vm900, %v2665, 0
        %4004 = vmatprep.subr.bf16.mxu0 %v3970
        %4005 = vmatpush1.bf16.msra.mxu0 %v3969
        %4006 = vmatprep.subr.bf16.mxu0 %v3974
        %4007 = vmatpush1.bf16.msra.mxu0 %v3973
        %4008 = vmatprep.subr.bf16.mxu0 %v3978
        %4009 = vmatpush1.bf16.msra.mxu0 %v3977
        %4010 = vmatprep.subr.bf16.mxu0 %v3982
        %4011 = vmatpush1.bf16.msra.mxu0 %v3981
        %4012 = vmatprep.subr.bf16.mxu0 0
        %4013 = vmatpush1.bf16.msra.mxu0 0
        %4014 = vmatprep.subr.bf16.mxu0 0
        %4015 = vmatpush1.bf16.msra.mxu0 0
        %4016 = vmatprep.subr.bf16.mxu0 0
        %4017 = vmatpush1.bf16.msra.mxu0 0
        %4018 = vmatprep.subr.bf16.mxu0 0
        %4019 = vmatpush1.bf16.msra.mxu0 0
        %4020 = vmatprep.subr.bf16.mxu0 0
        %4021 = vmatpush1.bf16.msra.mxu0 0
        %4022 = vmatprep.subr.bf16.mxu0 0
        %4023 = vmatpush1.bf16.msra.mxu0 0
        %4024 = vmatprep.subr.bf16.mxu0 0
        %4025 = vmatpush1.bf16.msra.mxu0 0
        %4026 = vmatprep.subr.bf16.mxu0 0
        %4027 = vmatpush1.bf16.msra.mxu0 0
        %4028 = vmatprep.subr.bf16.mxu0 0
        %4029 = vmatpush1.bf16.msra.mxu0 0
        %4030 = vmatprep.subr.bf16.mxu0 0
        %4031 = vmatpush1.bf16.msra.mxu0 0
        %4032 = vmatprep.subr.bf16.mxu0 0
        %4033 = vmatpush1.bf16.msra.mxu0 0
        %4034 = vmatprep.subr.bf16.mxu0 0
        %4035 = vmatpush1.bf16.msra.mxu0 0
        %4036 = vmatprep.mubr.bf16.mxu0 0
        %4037 = vmatmul.mubr.bf16.gmra.mrb[0].mxu0 %v4002
        %v4038 = vpop.f32.mrb[0].mxu0
        %v4039 = vadd.f32 0.0, %v4038
        %v4040 = vpop.f32.mrb[0].mxu0
        %v4041 = vadd.f32 0.0, %v4040
        %v4042 = vpop.f32.mrb[0].mxu0
        %v4043 = vpop.f32.mrb[0].mxu0
        %4044 = vdwg.mxu0
        %4045 = vmatprep.subr.bf16.mxu0 %v3972
        %4046 = vmatpush1.bf16.msra.mxu0 %v3971
        %4047 = vmatprep.subr.bf16.mxu0 %v3976
        %4048 = vmatpush1.bf16.msra.mxu0 %v3975
        %4049 = vmatprep.subr.bf16.mxu0 %v3980
        %4050 = vmatpush1.bf16.msra.mxu0 %v3979
        %4051 = vmatprep.subr.bf16.mxu0 %v3984
        %4052 = vmatpush1.bf16.msra.mxu0 %v3983
        %4053 = vmatprep.subr.bf16.mxu0 0
        %4054 = vmatpush1.bf16.msra.mxu0 0
        %4055 = vmatprep.subr.bf16.mxu0 0
        %4056 = vmatpush1.bf16.msra.mxu0 0
        %4057 = vmatprep.subr.bf16.mxu0 0
        %4058 = vmatpush1.bf16.msra.mxu0 0
        %4059 = vmatprep.subr.bf16.mxu0 0
        %4060 = vmatpush1.bf16.msra.mxu0 0
        %4061 = vmatprep.subr.bf16.mxu0 0
        %4062 = vmatpush1.bf16.msra.mxu0 0
        %4063 = vmatprep.subr.bf16.mxu0 0
        %4064 = vmatpush1.bf16.msra.mxu0 0
        %4065 = vmatprep.subr.bf16.mxu0 0
        %4066 = vmatpush1.bf16.msra.mxu0 0
        %4067 = vmatprep.subr.bf16.mxu0 0
        %4068 = vmatpush1.bf16.msra.mxu0 0
        %4069 = vmatprep.subr.bf16.mxu0 0
        %4070 = vmatpush1.bf16.msra.mxu0 0
        %4071 = vmatprep.subr.bf16.mxu0 0
        %4072 = vmatpush1.bf16.msra.mxu0 0
        %4073 = vmatprep.subr.bf16.mxu0 0
        %4074 = vmatpush1.bf16.msra.mxu0 0
        %4075 = vmatprep.subr.bf16.mxu0 0
        %4076 = vmatpush1.bf16.msra.mxu0 0
        %4077 = vmatprep.mubr.bf16.mxu0 0
        %4078 = vmatmul.mubr.bf16.gmra.mrb[0].mxu0 %v4002
        %v4079 = vpop.f32.mrb[0].mxu0
        %v4080 = vadd.f32 0.0, %v4079
        %v4081 = vpop.f32.mrb[0].mxu0
        %v4082 = vadd.f32 0.0, %v4081
        %v4083 = vpop.f32.mrb[0].mxu0
        %v4084 = vpop.f32.mrb[0].mxu0
        %4085 = vdwg.mxu0
        %v4102 = vunpack.c.l.b16 %v2787
        %v4103 = vunpack.c.h.b16 %v2787
        %v4104 = vunpack.c.l.b16 %v2788
        %v4105 = vunpack.c.h.b16 %v2788
        %v4106 = vunpack.c.l.b16 %v2789
        %v4107 = vunpack.c.h.b16 %v2789
        %v4108 = vunpack.c.l.b16 %v2790
        %v4109 = vunpack.c.h.b16 %v2790
        %v4110 = vunpack.c.l.b16 %v2791
        %v4111 = vunpack.c.h.b16 %v2791
        %v4112 = vunpack.c.l.b16 %v2792
        %v4113 = vunpack.c.h.b16 %v2792
        %v4114 = vunpack.c.l.b16 %v2793
        %v4115 = vunpack.c.h.b16 %v2793
        %v4116 = vunpack.c.l.b16 %v2794
        %v4117 = vunpack.c.h.b16 %v2794
        %v4118 = vunpack.c.l.b16 %v2795
        %v4119 = vunpack.c.h.b16 %v2795
        %v4120 = vunpack.c.l.b16 %v2796
        %v4121 = vunpack.c.h.b16 %v2796
        %v4122 = vunpack.c.l.b16 %v2797
        %v4123 = vunpack.c.h.b16 %v2797
        %v4124 = vunpack.c.l.b16 %v2798
        %v4125 = vunpack.c.h.b16 %v2798
        %v4126 = vunpack.c.l.b16 %v2799
        %v4127 = vunpack.c.h.b16 %v2799
        %v4128 = vunpack.c.l.b16 %v2800
        %v4129 = vunpack.c.h.b16 %v2800
        %v4130 = vunpack.c.l.b16 %v2801
        %v4131 = vunpack.c.h.b16 %v2801
        %v4132 = vunpack.c.l.b16 %v2802
        %v4133 = vunpack.c.h.b16 %v2802
        %v4134 = vpack.c.b16 %v4106, %v4102
        %v4135 = vpack.c.b16 %v4107, %v4103
        %v4136 = vpack.c.b16 %v4108, %v4104
        %v4137 = vpack.c.b16 %v4109, %v4105
        %v4138 = vpack.c.b16 %v4114, %v4110
        %v4139 = vpack.c.b16 %v4115, %v4111
        %v4140 = vpack.c.b16 %v4116, %v4112
        %v4141 = vpack.c.b16 %v4117, %v4113
        %v4142 = vpack.c.b16 %v4122, %v4118
        %v4143 = vpack.c.b16 %v4123, %v4119
        %v4144 = vpack.c.b16 %v4124, %v4120
        %v4145 = vpack.c.b16 %v4125, %v4121
        %v4146 = vpack.c.b16 %v4130, %v4126
        %v4147 = vpack.c.b16 %v4131, %v4127
        %v4148 = vpack.c.b16 %v4132, %v4128
        %v4149 = vpack.c.b16 %v4133, %v4129
        %v4167 = vsel %vm900, %v2666, 0
        %4169 = vmatprep.subr.bf16.mxu0 %v4135
        %4170 = vmatpush1.bf16.msra.mxu0 %v4134
        %4171 = vmatprep.subr.bf16.mxu0 %v4139
        %4172 = vmatpush1.bf16.msra.mxu0 %v4138
        %4173 = vmatprep.subr.bf16.mxu0 %v4143
        %4174 = vmatpush1.bf16.msra.mxu0 %v4142
        %4175 = vmatprep.subr.bf16.mxu0 %v4147
        %4176 = vmatpush1.bf16.msra.mxu0 %v4146
        %4177 = vmatprep.subr.bf16.mxu0 0
        %4178 = vmatpush1.bf16.msra.mxu0 0
        %4179 = vmatprep.subr.bf16.mxu0 0
        %4180 = vmatpush1.bf16.msra.mxu0 0
        %4181 = vmatprep.subr.bf16.mxu0 0
        %4182 = vmatpush1.bf16.msra.mxu0 0
        %4183 = vmatprep.subr.bf16.mxu0 0
        %4184 = vmatpush1.bf16.msra.mxu0 0
        %4185 = vmatprep.subr.bf16.mxu0 0
        %4186 = vmatpush1.bf16.msra.mxu0 0
        %4187 = vmatprep.subr.bf16.mxu0 0
        %4188 = vmatpush1.bf16.msra.mxu0 0
        %4189 = vmatprep.subr.bf16.mxu0 0
        %4190 = vmatpush1.bf16.msra.mxu0 0
        %4191 = vmatprep.subr.bf16.mxu0 0
        %4192 = vmatpush1.bf16.msra.mxu0 0
        %4193 = vmatprep.subr.bf16.mxu0 0
        %4194 = vmatpush1.bf16.msra.mxu0 0
        %4195 = vmatprep.subr.bf16.mxu0 0
        %4196 = vmatpush1.bf16.msra.mxu0 0
        %4197 = vmatprep.subr.bf16.mxu0 0
        %4198 = vmatpush1.bf16.msra.mxu0 0
        %4199 = vmatprep.subr.bf16.mxu0 0
        %4200 = vmatpush1.bf16.msra.mxu0 0
        %4201 = vmatprep.mubr.bf16.mxu0 0
        %4202 = vmatmul.mubr.bf16.gmra.mrb[0].mxu0 %v4167
        %v4203 = vpop.f32.mrb[0].mxu0
        %v4204 = vadd.f32 0.0, %v4203
        %v4205 = vpop.f32.mrb[0].mxu0
        %v4206 = vadd.f32 0.0, %v4205
        %v4207 = vpop.f32.mrb[0].mxu0
        %v4208 = vpop.f32.mrb[0].mxu0
        %4209 = vdwg.mxu0
        %4210 = vmatprep.subr.bf16.mxu0 %v4137
        %4211 = vmatpush1.bf16.msra.mxu0 %v4136
        %4212 = vmatprep.subr.bf16.mxu0 %v4141
        %4213 = vmatpush1.bf16.msra.mxu0 %v4140
        %4214 = vmatprep.subr.bf16.mxu0 %v4145
        %4215 = vmatpush1.bf16.msra.mxu0 %v4144
        %4216 = vmatprep.subr.bf16.mxu0 %v4149
        %4217 = vmatpush1.bf16.msra.mxu0 %v4148
        %4218 = vmatprep.subr.bf16.mxu0 0
        %4219 = vmatpush1.bf16.msra.mxu0 0
        %4220 = vmatprep.subr.bf16.mxu0 0
        %4221 = vmatpush1.bf16.msra.mxu0 0
        %4222 = vmatprep.subr.bf16.mxu0 0
        %4223 = vmatpush1.bf16.msra.mxu0 0
        %4224 = vmatprep.subr.bf16.mxu0 0
        %4225 = vmatpush1.bf16.msra.mxu0 0
        %4226 = vmatprep.subr.bf16.mxu0 0
        %4227 = vmatpush1.bf16.msra.mxu0 0
        %4228 = vmatprep.subr.bf16.mxu0 0
        %4229 = vmatpush1.bf16.msra.mxu0 0
        %4230 = vmatprep.subr.bf16.mxu0 0
        %4231 = vmatpush1.bf16.msra.mxu0 0
        %4232 = vmatprep.subr.bf16.mxu0 0
        %4233 = vmatpush1.bf16.msra.mxu0 0
        %4234 = vmatprep.subr.bf16.mxu0 0
        %4235 = vmatpush1.bf16.msra.mxu0 0
        %4236 = vmatprep.subr.bf16.mxu0 0
        %4237 = vmatpush1.bf16.msra.mxu0 0
        %4238 = vmatprep.subr.bf16.mxu0 0
        %4239 = vmatpush1.bf16.msra.mxu0 0
        %4240 = vmatprep.subr.bf16.mxu0 0
        %4241 = vmatpush1.bf16.msra.mxu0 0
        %4242 = vmatprep.mubr.bf16.mxu0 0
        %4243 = vmatmul.mubr.bf16.gmra.mrb[0].mxu0 %v4167
        %v4244 = vpop.f32.mrb[0].mxu0
        %v4245 = vadd.f32 0.0, %v4244
        %v4246 = vpop.f32.mrb[0].mxu0
        %v4247 = vadd.f32 0.0, %v4246
        %v4248 = vpop.f32.mrb[0].mxu0
        %v4249 = vpop.f32.mrb[0].mxu0
        %4250 = vdwg.mxu0
        %v4267 = vunpack.c.l.b16 %v2803
        %v4268 = vunpack.c.h.b16 %v2803
        %v4269 = vunpack.c.l.b16 %v2804
        %v4270 = vunpack.c.h.b16 %v2804
        %v4271 = vunpack.c.l.b16 %v2805
        %v4272 = vunpack.c.h.b16 %v2805
        %v4273 = vunpack.c.l.b16 %v2806
        %v4274 = vunpack.c.h.b16 %v2806
        %v4275 = vunpack.c.l.b16 %v2807
        %v4276 = vunpack.c.h.b16 %v2807
        %v4277 = vunpack.c.l.b16 %v2808
        %v4278 = vunpack.c.h.b16 %v2808
        %v4279 = vunpack.c.l.b16 %v2809
        %v4280 = vunpack.c.h.b16 %v2809
        %v4281 = vunpack.c.l.b16 %v2810
        %v4282 = vunpack.c.h.b16 %v2810
        %v4283 = vunpack.c.l.b16 %v2811
        %v4284 = vunpack.c.h.b16 %v2811
        %v4285 = vunpack.c.l.b16 %v2812
        %v4286 = vunpack.c.h.b16 %v2812
        %v4287 = vunpack.c.l.b16 %v2813
        %v4288 = vunpack.c.h.b16 %v2813
        %v4289 = vunpack.c.l.b16 %v2814
        %v4290 = vunpack.c.h.b16 %v2814
        %v4291 = vunpack.c.l.b16 %v2815
        %v4292 = vunpack.c.h.b16 %v2815
        %v4293 = vunpack.c.l.b16 %v2816
        %v4294 = vunpack.c.h.b16 %v2816
        %v4295 = vunpack.c.l.b16 %v2817
        %v4296 = vunpack.c.h.b16 %v2817
        %v4297 = vunpack.c.l.b16 %v2818
        %v4298 = vunpack.c.h.b16 %v2818
        %v4299 = vpack.c.b16 %v4271, %v4267
        %v4300 = vpack.c.b16 %v4272, %v4268
        %v4301 = vpack.c.b16 %v4273, %v4269
        %v4302 = vpack.c.b16 %v4274, %v4270
        %v4303 = vpack.c.b16 %v4279, %v4275
        %v4304 = vpack.c.b16 %v4280, %v4276
        %v4305 = vpack.c.b16 %v4281, %v4277
        %v4306 = vpack.c.b16 %v4282, %v4278
        %v4307 = vpack.c.b16 %v4287, %v4283
        %v4308 = vpack.c.b16 %v4288, %v4284
        %v4309 = vpack.c.b16 %v4289, %v4285
        %v4310 = vpack.c.b16 %v4290, %v4286
        %v4311 = vpack.c.b16 %v4295, %v4291
        %v4312 = vpack.c.b16 %v4296, %v4292
        %v4313 = vpack.c.b16 %v4297, %v4293
        %v4314 = vpack.c.b16 %v4298, %v4294
        %v4332 = vsel %vm900, %v2667, 0
        %4334 = vmatprep.subr.bf16.mxu0 %v4300
        %4335 = vmatpush1.bf16.msra.mxu0 %v4299
        %4336 = vmatprep.subr.bf16.mxu0 %v4304
        %4337 = vmatpush1.bf16.msra.mxu0 %v4303
        %4338 = vmatprep.subr.bf16.mxu0 %v4308
        %4339 = vmatpush1.bf16.msra.mxu0 %v4307
        %4340 = vmatprep.subr.bf16.mxu0 %v4312
        %4341 = vmatpush1.bf16.msra.mxu0 %v4311
        %4342 = vmatprep.subr.bf16.mxu0 0
        %4343 = vmatpush1.bf16.msra.mxu0 0
        %4344 = vmatprep.subr.bf16.mxu0 0
        %4345 = vmatpush1.bf16.msra.mxu0 0
        %4346 = vmatprep.subr.bf16.mxu0 0
        %4347 = vmatpush1.bf16.msra.mxu0 0
        %4348 = vmatprep.subr.bf16.mxu0 0
        %4349 = vmatpush1.bf16.msra.mxu0 0
        %4350 = vmatprep.subr.bf16.mxu0 0
        %4351 = vmatpush1.bf16.msra.mxu0 0
        %4352 = vmatprep.subr.bf16.mxu0 0
        %4353 = vmatpush1.bf16.msra.mxu0 0
        %4354 = vmatprep.subr.bf16.mxu0 0
        %4355 = vmatpush1.bf16.msra.mxu0 0
        %4356 = vmatprep.subr.bf16.mxu0 0
        %4357 = vmatpush1.bf16.msra.mxu0 0
        %4358 = vmatprep.subr.bf16.mxu0 0
        %4359 = vmatpush1.bf16.msra.mxu0 0
        %4360 = vmatprep.subr.bf16.mxu0 0
        %4361 = vmatpush1.bf16.msra.mxu0 0
        %4362 = vmatprep.subr.bf16.mxu0 0
        %4363 = vmatpush1.bf16.msra.mxu0 0
        %4364 = vmatprep.subr.bf16.mxu0 0
        %4365 = vmatpush1.bf16.msra.mxu0 0
        %4366 = vmatprep.mubr.bf16.mxu0 0
        %4367 = vmatmul.mubr.bf16.gmra.mrb[0].mxu0 %v4332
        %v4368 = vpop.f32.mrb[0].mxu0
        %v4369 = vadd.f32 0.0, %v4368
        %v4370 = vpop.f32.mrb[0].mxu0
        %v4371 = vadd.f32 0.0, %v4370
        %v4372 = vpop.f32.mrb[0].mxu0
        %v4373 = vpop.f32.mrb[0].mxu0
        %4374 = vdwg.mxu0
        %4375 = vmatprep.subr.bf16.mxu0 %v4302
        %4376 = vmatpush1.bf16.msra.mxu0 %v4301
        %4377 = vmatprep.subr.bf16.mxu0 %v4306
        %4378 = vmatpush1.bf16.msra.mxu0 %v4305
        %4379 = vmatprep.subr.bf16.mxu0 %v4310
        %4380 = vmatpush1.bf16.msra.mxu0 %v4309
        %4381 = vmatprep.subr.bf16.mxu0 %v4314
        %4382 = vmatpush1.bf16.msra.mxu0 %v4313
        %4383 = vmatprep.subr.bf16.mxu0 0
        %4384 = vmatpush1.bf16.msra.mxu0 0
        %4385 = vmatprep.subr.bf16.mxu0 0
        %4386 = vmatpush1.bf16.msra.mxu0 0
        %4387 = vmatprep.subr.bf16.mxu0 0
        %4388 = vmatpush1.bf16.msra.mxu0 0
        %4389 = vmatprep.subr.bf16.mxu0 0
        %4390 = vmatpush1.bf16.msra.mxu0 0
        %4391 = vmatprep.subr.bf16.mxu0 0
        %4392 = vmatpush1.bf16.msra.mxu0 0
        %4393 = vmatprep.subr.bf16.mxu0 0
        %4394 = vmatpush1.bf16.msra.mxu0 0
        %4395 = vmatprep.subr.bf16.mxu0 0
        %4396 = vmatpush1.bf16.msra.mxu0 0
        %4397 = vmatprep.subr.bf16.mxu0 0
        %4398 = vmatpush1.bf16.msra.mxu0 0
        %4399 = vmatprep.subr.bf16.mxu0 0
        %4400 = vmatpush1.bf16.msra.mxu0 0
        %4401 = vmatprep.subr.bf16.mxu0 0
        %4402 = vmatpush1.bf16.msra.mxu0 0
        %4403 = vmatprep.subr.bf16.mxu0 0
        %4404 = vmatpush1.bf16.msra.mxu0 0
        %4405 = vmatprep.subr.bf16.mxu0 0
        %4406 = vmatpush1.bf16.msra.mxu0 0
        %4407 = vmatprep.mubr.bf16.mxu0 0
        %4408 = vmatmul.mubr.bf16.gmra.mrb[0].mxu0 %v4332
        %v4409 = vpop.f32.mrb[0].mxu0
        %v4410 = vadd.f32 0.0, %v4409
        %v4411 = vpop.f32.mrb[0].mxu0
        %v4412 = vadd.f32 0.0, %v4411
        %v4413 = vpop.f32.mrb[0].mxu0
        %v4414 = vpop.f32.mrb[0].mxu0
        %4415 = vdwg.mxu0
        %v4432 = vunpack.c.l.b16 %v2819
        %v4433 = vunpack.c.h.b16 %v2819
        %v4434 = vunpack.c.l.b16 %v2820
        %v4435 = vunpack.c.h.b16 %v2820
        %v4436 = vunpack.c.l.b16 %v2821
        %v4437 = vunpack.c.h.b16 %v2821
        %v4438 = vunpack.c.l.b16 %v2822
        %v4439 = vunpack.c.h.b16 %v2822
        %v4440 = vunpack.c.l.b16 %v2823
        %v4441 = vunpack.c.h.b16 %v2823
        %v4442 = vunpack.c.l.b16 %v2824
        %v4443 = vunpack.c.h.b16 %v2824
        %v4444 = vunpack.c.l.b16 %v2825
        %v4445 = vunpack.c.h.b16 %v2825
        %v4446 = vunpack.c.l.b16 %v2826
        %v4447 = vunpack.c.h.b16 %v2826
        %v4448 = vunpack.c.l.b16 %v2827
        %v4449 = vunpack.c.h.b16 %v2827
        %v4450 = vunpack.c.l.b16 %v2828
        %v4451 = vunpack.c.h.b16 %v2828
        %v4452 = vunpack.c.l.b16 %v2829
        %v4453 = vunpack.c.h.b16 %v2829
        %v4454 = vunpack.c.l.b16 %v2830
        %v4455 = vunpack.c.h.b16 %v2830
        %v4456 = vunpack.c.l.b16 %v2831
        %v4457 = vunpack.c.h.b16 %v2831
        %v4458 = vunpack.c.l.b16 %v2832
        %v4459 = vunpack.c.h.b16 %v2832
        %v4460 = vunpack.c.l.b16 %v2833
        %v4461 = vunpack.c.h.b16 %v2833
        %v4462 = vunpack.c.l.b16 %v2834
        %v4463 = vunpack.c.h.b16 %v2834
        %v4464 = vpack.c.b16 %v4436, %v4432
        %v4465 = vpack.c.b16 %v4437, %v4433
        %v4466 = vpack.c.b16 %v4438, %v4434
        %v4467 = vpack.c.b16 %v4439, %v4435
        %v4468 = vpack.c.b16 %v4444, %v4440
        %v4469 = vpack.c.b16 %v4445, %v4441
        %v4470 = vpack.c.b16 %v4446, %v4442
        %v4471 = vpack.c.b16 %v4447, %v4443
        %v4472 = vpack.c.b16 %v4452, %v4448
        %v4473 = vpack.c.b16 %v4453, %v4449
        %v4474 = vpack.c.b16 %v4454, %v4450
        %v4475 = vpack.c.b16 %v4455, %v4451
        %v4476 = vpack.c.b16 %v4460, %v4456
        %v4477 = vpack.c.b16 %v4461, %v4457
        %v4478 = vpack.c.b16 %v4462, %v4458
        %v4479 = vpack.c.b16 %v4463, %v4459
        %v4497 = vsel %vm900, %v2668, 0
        %4499 = vmatprep.subr.bf16.mxu0 %v4465
        %4500 = vmatpush1.bf16.msra.mxu0 %v4464
        %4501 = vmatprep.subr.bf16.mxu0 %v4469
        %4502 = vmatpush1.bf16.msra.mxu0 %v4468
        %4503 = vmatprep.subr.bf16.mxu0 %v4473
        %4504 = vmatpush1.bf16.msra.mxu0 %v4472
        %4505 = vmatprep.subr.bf16.mxu0 %v4477
        %4506 = vmatpush1.bf16.msra.mxu0 %v4476
        %4507 = vmatprep.subr.bf16.mxu0 0
        %4508 = vmatpush1.bf16.msra.mxu0 0
        %4509 = vmatprep.subr.bf16.mxu0 0
        %4510 = vmatpush1.bf16.msra.mxu0 0
        %4511 = vmatprep.subr.bf16.mxu0 0
        %4512 = vmatpush1.bf16.msra.mxu0 0
        %4513 = vmatprep.subr.bf16.mxu0 0
        %4514 = vmatpush1.bf16.msra.mxu0 0
        %4515 = vmatprep.subr.bf16.mxu0 0
        %4516 = vmatpush1.bf16.msra.mxu0 0
        %4517 = vmatprep.subr.bf16.mxu0 0
        %4518 = vmatpush1.bf16.msra.mxu0 0
        %4519 = vmatprep.subr.bf16.mxu0 0
        %4520 = vmatpush1.bf16.msra.mxu0 0
        %4521 = vmatprep.subr.bf16.mxu0 0
        %4522 = vmatpush1.bf16.msra.mxu0 0
        %4523 = vmatprep.subr.bf16.mxu0 0
        %4524 = vmatpush1.bf16.msra.mxu0 0
        %4525 = vmatprep.subr.bf16.mxu0 0
        %4526 = vmatpush1.bf16.msra.mxu0 0
        %4527 = vmatprep.subr.bf16.mxu0 0
        %4528 = vmatpush1.bf16.msra.mxu0 0
        %4529 = vmatprep.subr.bf16.mxu0 0
        %4530 = vmatpush1.bf16.msra.mxu0 0
        %4531 = vmatprep.mubr.bf16.mxu0 0
        %4532 = vmatmul.mubr.bf16.gmra.mrb[0].mxu0 %v4497
        %v4533 = vpop.f32.mrb[0].mxu0
        %v4534 = vadd.f32 0.0, %v4533
        %v4535 = vpop.f32.mrb[0].mxu0
        %v4536 = vadd.f32 0.0, %v4535
        %v4537 = vpop.f32.mrb[0].mxu0
        %v4538 = vpop.f32.mrb[0].mxu0
        %4539 = vdwg.mxu0
        %4540 = vmatprep.subr.bf16.mxu0 %v4467
        %4541 = vmatpush1.bf16.msra.mxu0 %v4466
        %4542 = vmatprep.subr.bf16.mxu0 %v4471
        %4543 = vmatpush1.bf16.msra.mxu0 %v4470
        %4544 = vmatprep.subr.bf16.mxu0 %v4475
        %4545 = vmatpush1.bf16.msra.mxu0 %v4474
        %4546 = vmatprep.subr.bf16.mxu0 %v4479
        %4547 = vmatpush1.bf16.msra.mxu0 %v4478
        %4548 = vmatprep.subr.bf16.mxu0 0
        %4549 = vmatpush1.bf16.msra.mxu0 0
        %4550 = vmatprep.subr.bf16.mxu0 0
        %4551 = vmatpush1.bf16.msra.mxu0 0
        %4552 = vmatprep.subr.bf16.mxu0 0
        %4553 = vmatpush1.bf16.msra.mxu0 0
        %4554 = vmatprep.subr.bf16.mxu0 0
        %4555 = vmatpush1.bf16.msra.mxu0 0
        %4556 = vmatprep.subr.bf16.mxu0 0
        %4557 = vmatpush1.bf16.msra.mxu0 0
        %4558 = vmatprep.subr.bf16.mxu0 0
        %4559 = vmatpush1.bf16.msra.mxu0 0
        %4560 = vmatprep.subr.bf16.mxu0 0
        %4561 = vmatpush1.bf16.msra.mxu0 0
        %4562 = vmatprep.subr.bf16.mxu0 0
        %4563 = vmatpush1.bf16.msra.mxu0 0
        %4564 = vmatprep.subr.bf16.mxu0 0
        %4565 = vmatpush1.bf16.msra.mxu0 0
        %4566 = vmatprep.subr.bf16.mxu0 0
        %4567 = vmatpush1.bf16.msra.mxu0 0
        %4568 = vmatprep.subr.bf16.mxu0 0
        %4569 = vmatpush1.bf16.msra.mxu0 0
        %4570 = vmatprep.subr.bf16.mxu0 0
        %4571 = vmatpush1.bf16.msra.mxu0 0
        %4572 = vmatprep.mubr.bf16.mxu0 0
        %4573 = vmatmul.mubr.bf16.gmra.mrb[0].mxu0 %v4497
        %v4574 = vpop.f32.mrb[0].mxu0
        %v4575 = vadd.f32 0.0, %v4574
        %v4576 = vpop.f32.mrb[0].mxu0
        %v4577 = vadd.f32 0.0, %v4576
        %v4578 = vpop.f32.mrb[0].mxu0
        %v4579 = vpop.f32.mrb[0].mxu0
        %4580 = vdwg.mxu0
        %v4597 = vunpack.c.l.b16 %v2835
        %v4598 = vunpack.c.h.b16 %v2835
        %v4599 = vunpack.c.l.b16 %v2836
        %v4600 = vunpack.c.h.b16 %v2836
        %v4601 = vunpack.c.l.b16 %v2837
        %v4602 = vunpack.c.h.b16 %v2837
        %v4603 = vunpack.c.l.b16 %v2838
        %v4604 = vunpack.c.h.b16 %v2838
        %v4605 = vunpack.c.l.b16 %v2839
        %v4606 = vunpack.c.h.b16 %v2839
        %v4607 = vunpack.c.l.b16 %v2840
        %v4608 = vunpack.c.h.b16 %v2840
        %v4609 = vunpack.c.l.b16 %v2841
        %v4610 = vunpack.c.h.b16 %v2841
        %v4611 = vunpack.c.l.b16 %v2842
        %v4612 = vunpack.c.h.b16 %v2842
        %v4613 = vunpack.c.l.b16 %v2843
        %v4614 = vunpack.c.h.b16 %v2843
        %v4615 = vunpack.c.l.b16 %v2844
        %v4616 = vunpack.c.h.b16 %v2844
        %v4617 = vunpack.c.l.b16 %v2845
        %v4618 = vunpack.c.h.b16 %v2845
        %v4619 = vunpack.c.l.b16 %v2846
        %v4620 = vunpack.c.h.b16 %v2846
        %v4621 = vunpack.c.l.b16 %v2847
        %v4622 = vunpack.c.h.b16 %v2847
        %v4623 = vunpack.c.l.b16 %v2848
        %v4624 = vunpack.c.h.b16 %v2848
        %v4625 = vunpack.c.l.b16 %v2849
        %v4626 = vunpack.c.h.b16 %v2849
        %v4627 = vunpack.c.l.b16 %v2850
        %v4628 = vunpack.c.h.b16 %v2850
        %v4629 = vpack.c.b16 %v4601, %v4597
        %v4630 = vpack.c.b16 %v4602, %v4598
        %v4631 = vpack.c.b16 %v4603, %v4599
        %v4632 = vpack.c.b16 %v4604, %v4600
        %v4633 = vpack.c.b16 %v4609, %v4605
        %v4634 = vpack.c.b16 %v4610, %v4606
        %v4635 = vpack.c.b16 %v4611, %v4607
        %v4636 = vpack.c.b16 %v4612, %v4608
        %v4637 = vpack.c.b16 %v4617, %v4613
        %v4638 = vpack.c.b16 %v4618, %v4614
        %v4639 = vpack.c.b16 %v4619, %v4615
        %v4640 = vpack.c.b16 %v4620, %v4616
        %v4641 = vpack.c.b16 %v4625, %v4621
        %v4642 = vpack.c.b16 %v4626, %v4622
        %v4643 = vpack.c.b16 %v4627, %v4623
        %v4644 = vpack.c.b16 %v4628, %v4624
        %v4662 = vsel %vm900, %v2669, 0
        %4664 = vmatprep.subr.bf16.mxu0 %v4630
        %4665 = vmatpush1.bf16.msra.mxu0 %v4629
        %4666 = vmatprep.subr.bf16.mxu0 %v4634
        %4667 = vmatpush1.bf16.msra.mxu0 %v4633
        %4668 = vmatprep.subr.bf16.mxu0 %v4638
        %4669 = vmatpush1.bf16.msra.mxu0 %v4637
        %4670 = vmatprep.subr.bf16.mxu0 %v4642
        %4671 = vmatpush1.bf16.msra.mxu0 %v4641
        %4672 = vmatprep.subr.bf16.mxu0 0
        %4673 = vmatpush1.bf16.msra.mxu0 0
        %4674 = vmatprep.subr.bf16.mxu0 0
        %4675 = vmatpush1.bf16.msra.mxu0 0
        %4676 = vmatprep.subr.bf16.mxu0 0
        %4677 = vmatpush1.bf16.msra.mxu0 0
        %4678 = vmatprep.subr.bf16.mxu0 0
        %4679 = vmatpush1.bf16.msra.mxu0 0
        %4680 = vmatprep.subr.bf16.mxu0 0
        %4681 = vmatpush1.bf16.msra.mxu0 0
        %4682 = vmatprep.subr.bf16.mxu0 0
        %4683 = vmatpush1.bf16.msra.mxu0 0
        %4684 = vmatprep.subr.bf16.mxu0 0
        %4685 = vmatpush1.bf16.msra.mxu0 0
        %4686 = vmatprep.subr.bf16.mxu0 0
        %4687 = vmatpush1.bf16.msra.mxu0 0
        %4688 = vmatprep.subr.bf16.mxu0 0
        %4689 = vmatpush1.bf16.msra.mxu0 0
        %4690 = vmatprep.subr.bf16.mxu0 0
        %4691 = vmatpush1.bf16.msra.mxu0 0
        %4692 = vmatprep.subr.bf16.mxu0 0
        %4693 = vmatpush1.bf16.msra.mxu0 0
        %4694 = vmatprep.subr.bf16.mxu0 0
        %4695 = vmatpush1.bf16.msra.mxu0 0
        %4696 = vmatprep.mubr.bf16.mxu0 0
        %4697 = vmatmul.mubr.bf16.gmra.mrb[0].mxu0 %v4662
        %v4698 = vpop.f32.mrb[0].mxu0
        %v4699 = vadd.f32 0.0, %v4698
        %v4700 = vpop.f32.mrb[0].mxu0
        %v4701 = vadd.f32 0.0, %v4700
        %v4702 = vpop.f32.mrb[0].mxu0
        %v4703 = vpop.f32.mrb[0].mxu0
        %4704 = vdwg.mxu0
        %4705 = vmatprep.subr.bf16.mxu0 %v4632
        %4706 = vmatpush1.bf16.msra.mxu0 %v4631
        %4707 = vmatprep.subr.bf16.mxu0 %v4636
        %4708 = vmatpush1.bf16.msra.mxu0 %v4635
        %4709 = vmatprep.subr.bf16.mxu0 %v4640
        %4710 = vmatpush1.bf16.msra.mxu0 %v4639
        %4711 = vmatprep.subr.bf16.mxu0 %v4644
        %4712 = vmatpush1.bf16.msra.mxu0 %v4643
        %4713 = vmatprep.subr.bf16.mxu0 0
        %4714 = vmatpush1.bf16.msra.mxu0 0
        %4715 = vmatprep.subr.bf16.mxu0 0
        %4716 = vmatpush1.bf16.msra.mxu0 0
        %4717 = vmatprep.subr.bf16.mxu0 0
        %4718 = vmatpush1.bf16.msra.mxu0 0
        %4719 = vmatprep.subr.bf16.mxu0 0
        %4720 = vmatpush1.bf16.msra.mxu0 0
        %4721 = vmatprep.subr.bf16.mxu0 0
        %4722 = vmatpush1.bf16.msra.mxu0 0
        %4723 = vmatprep.subr.bf16.mxu0 0
        %4724 = vmatpush1.bf16.msra.mxu0 0
        %4725 = vmatprep.subr.bf16.mxu0 0
        %4726 = vmatpush1.bf16.msra.mxu0 0
        %4727 = vmatprep.subr.bf16.mxu0 0
        %4728 = vmatpush1.bf16.msra.mxu0 0
        %4729 = vmatprep.subr.bf16.mxu0 0
        %4730 = vmatpush1.bf16.msra.mxu0 0
        %4731 = vmatprep.subr.bf16.mxu0 0
        %4732 = vmatpush1.bf16.msra.mxu0 0
        %4733 = vmatprep.subr.bf16.mxu0 0
        %4734 = vmatpush1.bf16.msra.mxu0 0
        %4735 = vmatprep.subr.bf16.mxu0 0
        %4736 = vmatpush1.bf16.msra.mxu0 0
        %4737 = vmatprep.mubr.bf16.mxu0 0
        %4738 = vmatmul.mubr.bf16.gmra.mrb[0].mxu0 %v4662
        %v4739 = vpop.f32.mrb[0].mxu0
        %v4740 = vadd.f32 0.0, %v4739
        %v4741 = vpop.f32.mrb[0].mxu0
        %v4742 = vadd.f32 0.0, %v4741
        %v4743 = vpop.f32.mrb[0].mxu0
        %v4744 = vpop.f32.mrb[0].mxu0
        %4745 = vdwg.mxu0
        %v4762 = vunpack.c.l.b16 %v2851
        %v4763 = vunpack.c.h.b16 %v2851
        %v4764 = vunpack.c.l.b16 %v2852
        %v4765 = vunpack.c.h.b16 %v2852
        %v4766 = vunpack.c.l.b16 %v2853
        %v4767 = vunpack.c.h.b16 %v2853
        %v4768 = vunpack.c.l.b16 %v2854
        %v4769 = vunpack.c.h.b16 %v2854
        %v4770 = vunpack.c.l.b16 %v2855
        %v4771 = vunpack.c.h.b16 %v2855
        %v4772 = vunpack.c.l.b16 %v2856
        %v4773 = vunpack.c.h.b16 %v2856
        %v4774 = vunpack.c.l.b16 %v2857
        %v4775 = vunpack.c.h.b16 %v2857
        %v4776 = vunpack.c.l.b16 %v2858
        %v4777 = vunpack.c.h.b16 %v2858
        %v4778 = vunpack.c.l.b16 %v2859
        %v4779 = vunpack.c.h.b16 %v2859
        %v4780 = vunpack.c.l.b16 %v2860
        %v4781 = vunpack.c.h.b16 %v2860
        %v4782 = vunpack.c.l.b16 %v2861
        %v4783 = vunpack.c.h.b16 %v2861
        %v4784 = vunpack.c.l.b16 %v2862
        %v4785 = vunpack.c.h.b16 %v2862
        %v4786 = vunpack.c.l.b16 %v2863
        %v4787 = vunpack.c.h.b16 %v2863
        %v4788 = vunpack.c.l.b16 %v2864
        %v4789 = vunpack.c.h.b16 %v2864
        %v4790 = vunpack.c.l.b16 %v2865
        %v4791 = vunpack.c.h.b16 %v2865
        %v4792 = vunpack.c.l.b16 %v2866
        %v4793 = vunpack.c.h.b16 %v2866
        %v4794 = vpack.c.b16 %v4766, %v4762
        %v4795 = vpack.c.b16 %v4767, %v4763
        %v4796 = vpack.c.b16 %v4768, %v4764
        %v4797 = vpack.c.b16 %v4769, %v4765
        %v4798 = vpack.c.b16 %v4774, %v4770
        %v4799 = vpack.c.b16 %v4775, %v4771
        %v4800 = vpack.c.b16 %v4776, %v4772
        %v4801 = vpack.c.b16 %v4777, %v4773
        %v4802 = vpack.c.b16 %v4782, %v4778
        %v4803 = vpack.c.b16 %v4783, %v4779
        %v4804 = vpack.c.b16 %v4784, %v4780
        %v4805 = vpack.c.b16 %v4785, %v4781
        %v4806 = vpack.c.b16 %v4790, %v4786
        %v4807 = vpack.c.b16 %v4791, %v4787
        %v4808 = vpack.c.b16 %v4792, %v4788
        %v4809 = vpack.c.b16 %v4793, %v4789
        %v4827 = vsel %vm900, %v2670, 0
        %4829 = vmatprep.subr.bf16.mxu0 %v4795
        %4830 = vmatpush1.bf16.msra.mxu0 %v4794
        %4831 = vmatprep.subr.bf16.mxu0 %v4799
        %4832 = vmatpush1.bf16.msra.mxu0 %v4798
        %4833 = vmatprep.subr.bf16.mxu0 %v4803
        %4834 = vmatpush1.bf16.msra.mxu0 %v4802
        %4835 = vmatprep.subr.bf16.mxu0 %v4807
        %4836 = vmatpush1.bf16.msra.mxu0 %v4806
        %4837 = vmatprep.subr.bf16.mxu0 0
        %4838 = vmatpush1.bf16.msra.mxu0 0
        %4839 = vmatprep.subr.bf16.mxu0 0
        %4840 = vmatpush1.bf16.msra.mxu0 0
        %4841 = vmatprep.subr.bf16.mxu0 0
        %4842 = vmatpush1.bf16.msra.mxu0 0
        %4843 = vmatprep.subr.bf16.mxu0 0
        %4844 = vmatpush1.bf16.msra.mxu0 0
        %4845 = vmatprep.subr.bf16.mxu0 0
        %4846 = vmatpush1.bf16.msra.mxu0 0
        %4847 = vmatprep.subr.bf16.mxu0 0
        %4848 = vmatpush1.bf16.msra.mxu0 0
        %4849 = vmatprep.subr.bf16.mxu0 0
        %4850 = vmatpush1.bf16.msra.mxu0 0
        %4851 = vmatprep.subr.bf16.mxu0 0
        %4852 = vmatpush1.bf16.msra.mxu0 0
        %4853 = vmatprep.subr.bf16.mxu0 0
        %4854 = vmatpush1.bf16.msra.mxu0 0
        %4855 = vmatprep.subr.bf16.mxu0 0
        %4856 = vmatpush1.bf16.msra.mxu0 0
        %4857 = vmatprep.subr.bf16.mxu0 0
        %4858 = vmatpush1.bf16.msra.mxu0 0
        %4859 = vmatprep.subr.bf16.mxu0 0
        %4860 = vmatpush1.bf16.msra.mxu0 0
        %4861 = vmatprep.mubr.bf16.mxu0 0
        %4862 = vmatmul.mubr.bf16.gmra.mrb[0].mxu0 %v4827
        %v4863 = vpop.f32.mrb[0].mxu0
        %v4864 = vadd.f32 0.0, %v4863
        %v4865 = vpop.f32.mrb[0].mxu0
        %v4866 = vadd.f32 0.0, %v4865
        %v4867 = vpop.f32.mrb[0].mxu0
        %v4868 = vpop.f32.mrb[0].mxu0
        %4869 = vdwg.mxu0
        %4870 = vmatprep.subr.bf16.mxu0 %v4797
        %4871 = vmatpush1.bf16.msra.mxu0 %v4796
        %4872 = vmatprep.subr.bf16.mxu0 %v4801
        %4873 = vmatpush1.bf16.msra.mxu0 %v4800
        %4874 = vmatprep.subr.bf16.mxu0 %v4805
        %4875 = vmatpush1.bf16.msra.mxu0 %v4804
        %4876 = vmatprep.subr.bf16.mxu0 %v4809
        %4877 = vmatpush1.bf16.msra.mxu0 %v4808
        %4878 = vmatprep.subr.bf16.mxu0 0
        %4879 = vmatpush1.bf16.msra.mxu0 0
        %4880 = vmatprep.subr.bf16.mxu0 0
        %4881 = vmatpush1.bf16.msra.mxu0 0
        %4882 = vmatprep.subr.bf16.mxu0 0
        %4883 = vmatpush1.bf16.msra.mxu0 0
        %4884 = vmatprep.subr.bf16.mxu0 0
        %4885 = vmatpush1.bf16.msra.mxu0 0
        %4886 = vmatprep.subr.bf16.mxu0 0
        %4887 = vmatpush1.bf16.msra.mxu0 0
        %4888 = vmatprep.subr.bf16.mxu0 0
        %4889 = vmatpush1.bf16.msra.mxu0 0
        %4890 = vmatprep.subr.bf16.mxu0 0
        %4891 = vmatpush1.bf16.msra.mxu0 0
        %4892 = vmatprep.subr.bf16.mxu0 0
        %4893 = vmatpush1.bf16.msra.mxu0 0
        %4894 = vmatprep.subr.bf16.mxu0 0
        %4895 = vmatpush1.bf16.msra.mxu0 0
        %4896 = vmatprep.subr.bf16.mxu0 0
        %4897 = vmatpush1.bf16.msra.mxu0 0
        %4898 = vmatprep.subr.bf16.mxu0 0
        %4899 = vmatpush1.bf16.msra.mxu0 0
        %4900 = vmatprep.subr.bf16.mxu0 0
        %4901 = vmatpush1.bf16.msra.mxu0 0
        %4902 = vmatprep.mubr.bf16.mxu0 0
        %4903 = vmatmul.mubr.bf16.gmra.mrb[0].mxu0 %v4827
        %v4904 = vpop.f32.mrb[0].mxu0
        %v4905 = vadd.f32 0.0, %v4904
        %v4906 = vpop.f32.mrb[0].mxu0
        %v4907 = vadd.f32 0.0, %v4906
        %v4908 = vpop.f32.mrb[0].mxu0
        %v4909 = vpop.f32.mrb[0].mxu0
        %4910 = vdwg.mxu0
        %v4927 = vunpack.c.l.b16 %v2867
        %v4928 = vunpack.c.h.b16 %v2867
        %v4929 = vunpack.c.l.b16 %v2868
        %v4930 = vunpack.c.h.b16 %v2868
        %v4931 = vunpack.c.l.b16 %v2869
        %v4932 = vunpack.c.h.b16 %v2869
        %v4933 = vunpack.c.l.b16 %v2870
        %v4934 = vunpack.c.h.b16 %v2870
        %v4935 = vunpack.c.l.b16 %v2871
        %v4936 = vunpack.c.h.b16 %v2871
        %v4937 = vunpack.c.l.b16 %v2872
        %v4938 = vunpack.c.h.b16 %v2872
        %v4939 = vunpack.c.l.b16 %v2873
        %v4940 = vunpack.c.h.b16 %v2873
        %v4941 = vunpack.c.l.b16 %v2874
        %v4942 = vunpack.c.h.b16 %v2874
        %v4943 = vunpack.c.l.b16 %v2875
        %v4944 = vunpack.c.h.b16 %v2875
        %v4945 = vunpack.c.l.b16 %v2876
        %v4946 = vunpack.c.h.b16 %v2876
        %v4947 = vunpack.c.l.b16 %v2877
        %v4948 = vunpack.c.h.b16 %v2877
        %v4949 = vunpack.c.l.b16 %v2878
        %v4950 = vunpack.c.h.b16 %v2878
        %v4951 = vunpack.c.l.b16 %v2879
        %v4952 = vunpack.c.h.b16 %v2879
        %v4953 = vunpack.c.l.b16 %v2880
        %v4954 = vunpack.c.h.b16 %v2880
        %v4955 = vunpack.c.l.b16 %v2881
        %v4956 = vunpack.c.h.b16 %v2881
        %v4957 = vunpack.c.l.b16 %v2882
        %v4958 = vunpack.c.h.b16 %v2882
        %v4959 = vpack.c.b16 %v4931, %v4927
        %v4960 = vpack.c.b16 %v4932, %v4928
        %v4961 = vpack.c.b16 %v4933, %v4929
        %v4962 = vpack.c.b16 %v4934, %v4930
        %v4963 = vpack.c.b16 %v4939, %v4935
        %v4964 = vpack.c.b16 %v4940, %v4936
        %v4965 = vpack.c.b16 %v4941, %v4937
        %v4966 = vpack.c.b16 %v4942, %v4938
        %v4967 = vpack.c.b16 %v4947, %v4943
        %v4968 = vpack.c.b16 %v4948, %v4944
        %v4969 = vpack.c.b16 %v4949, %v4945
        %v4970 = vpack.c.b16 %v4950, %v4946
        %v4971 = vpack.c.b16 %v4955, %v4951
        %v4972 = vpack.c.b16 %v4956, %v4952
        %v4973 = vpack.c.b16 %v4957, %v4953
        %v4974 = vpack.c.b16 %v4958, %v4954
        %v4992 = vsel %vm900, %v2671, 0
        %4994 = vmatprep.subr.bf16.mxu0 %v4960
        %4995 = vmatpush1.bf16.msra.mxu0 %v4959
        %4996 = vmatprep.subr.bf16.mxu0 %v4964
        %4997 = vmatpush1.bf16.msra.mxu0 %v4963
        %4998 = vmatprep.subr.bf16.mxu0 %v4968
        %4999 = vmatpush1.bf16.msra.mxu0 %v4967
        %5000 = vmatprep.subr.bf16.mxu0 %v4972
        %5001 = vmatpush1.bf16.msra.mxu0 %v4971
        %5002 = vmatprep.subr.bf16.mxu0 0
        %5003 = vmatpush1.bf16.msra.mxu0 0
        %5004 = vmatprep.subr.bf16.mxu0 0
        %5005 = vmatpush1.bf16.msra.mxu0 0
        %5006 = vmatprep.subr.bf16.mxu0 0
        %5007 = vmatpush1.bf16.msra.mxu0 0
        %5008 = vmatprep.subr.bf16.mxu0 0
        %5009 = vmatpush1.bf16.msra.mxu0 0
        %5010 = vmatprep.subr.bf16.mxu0 0
        %5011 = vmatpush1.bf16.msra.mxu0 0
        %5012 = vmatprep.subr.bf16.mxu0 0
        %5013 = vmatpush1.bf16.msra.mxu0 0
        %5014 = vmatprep.subr.bf16.mxu0 0
        %5015 = vmatpush1.bf16.msra.mxu0 0
        %5016 = vmatprep.subr.bf16.mxu0 0
        %5017 = vmatpush1.bf16.msra.mxu0 0
        %5018 = vmatprep.subr.bf16.mxu0 0
        %5019 = vmatpush1.bf16.msra.mxu0 0
        %5020 = vmatprep.subr.bf16.mxu0 0
        %5021 = vmatpush1.bf16.msra.mxu0 0
        %5022 = vmatprep.subr.bf16.mxu0 0
        %5023 = vmatpush1.bf16.msra.mxu0 0
        %5024 = vmatprep.subr.bf16.mxu0 0
        %5025 = vmatpush1.bf16.msra.mxu0 0
        %5026 = vmatprep.mubr.bf16.mxu0 0
        %5027 = vmatmul.mubr.bf16.gmra.mrb[0].mxu0 %v4992
        %v5028 = vpop.f32.mrb[0].mxu0
        %v5029 = vadd.f32 0.0, %v5028
        %v5030 = vpop.f32.mrb[0].mxu0
        %v5031 = vadd.f32 0.0, %v5030
        %v5032 = vpop.f32.mrb[0].mxu0
        %v5033 = vpop.f32.mrb[0].mxu0
        %5034 = vdwg.mxu0
        %5035 = vmatprep.subr.bf16.mxu0 %v4962
        %5036 = vmatpush1.bf16.msra.mxu0 %v4961
        %5037 = vmatprep.subr.bf16.mxu0 %v4966
        %5038 = vmatpush1.bf16.msra.mxu0 %v4965
        %5039 = vmatprep.subr.bf16.mxu0 %v4970
        %5040 = vmatpush1.bf16.msra.mxu0 %v4969
        %5041 = vmatprep.subr.bf16.mxu0 %v4974
        %5042 = vmatpush1.bf16.msra.mxu0 %v4973
        %5043 = vmatprep.subr.bf16.mxu0 0
        %5044 = vmatpush1.bf16.msra.mxu0 0
        %5045 = vmatprep.subr.bf16.mxu0 0
        %5046 = vmatpush1.bf16.msra.mxu0 0
        %5047 = vmatprep.subr.bf16.mxu0 0
        %5048 = vmatpush1.bf16.msra.mxu0 0
        %5049 = vmatprep.subr.bf16.mxu0 0
        %5050 = vmatpush1.bf16.msra.mxu0 0
        %5051 = vmatprep.subr.bf16.mxu0 0
        %5052 = vmatpush1.bf16.msra.mxu0 0
        %5053 = vmatprep.subr.bf16.mxu0 0
        %5054 = vmatpush1.bf16.msra.mxu0 0
        %5055 = vmatprep.subr.bf16.mxu0 0
        %5056 = vmatpush1.bf16.msra.mxu0 0
        %5057 = vmatprep.subr.bf16.mxu0 0
        %5058 = vmatpush1.bf16.msra.mxu0 0
        %5059 = vmatprep.subr.bf16.mxu0 0
        %5060 = vmatpush1.bf16.msra.mxu0 0
        %5061 = vmatprep.subr.bf16.mxu0 0
        %5062 = vmatpush1.bf16.msra.mxu0 0
        %5063 = vmatprep.subr.bf16.mxu0 0
        %5064 = vmatpush1.bf16.msra.mxu0 0
        %5065 = vmatprep.subr.bf16.mxu0 0
        %5066 = vmatpush1.bf16.msra.mxu0 0
        %5067 = vmatprep.mubr.bf16.mxu0 0
        %5068 = vmatmul.mubr.bf16.gmra.mrb[0].mxu0 %v4992
        %v5069 = vpop.f32.mrb[0].mxu0
        %v5070 = vadd.f32 0.0, %v5069
        %v5071 = vpop.f32.mrb[0].mxu0
        %v5072 = vadd.f32 0.0, %v5071
        %v5073 = vpop.f32.mrb[0].mxu0
        %v5074 = vpop.f32.mrb[0].mxu0
        %5075 = vdwg.mxu0
        %v5092 = vunpack.c.l.b16 %v2883
        %v5093 = vunpack.c.h.b16 %v2883
        %v5094 = vunpack.c.l.b16 %v2884
        %v5095 = vunpack.c.h.b16 %v2884
        %v5096 = vunpack.c.l.b16 %v2885
        %v5097 = vunpack.c.h.b16 %v2885
        %v5098 = vunpack.c.l.b16 %v2886
        %v5099 = vunpack.c.h.b16 %v2886
        %v5100 = vunpack.c.l.b16 %v2887
        %v5101 = vunpack.c.h.b16 %v2887
        %v5102 = vunpack.c.l.b16 %v2888
        %v5103 = vunpack.c.h.b16 %v2888
        %v5104 = vunpack.c.l.b16 %v2889
        %v5105 = vunpack.c.h.b16 %v2889
        %v5106 = vunpack.c.l.b16 %v2890
        %v5107 = vunpack.c.h.b16 %v2890
        %v5108 = vunpack.c.l.b16 %v2891
        %v5109 = vunpack.c.h.b16 %v2891
        %v5110 = vunpack.c.l.b16 %v2892
        %v5111 = vunpack.c.h.b16 %v2892
        %v5112 = vunpack.c.l.b16 %v2893
        %v5113 = vunpack.c.h.b16 %v2893
        %v5114 = vunpack.c.l.b16 %v2894
        %v5115 = vunpack.c.h.b16 %v2894
        %v5116 = vunpack.c.l.b16 %v2895
        %v5117 = vunpack.c.h.b16 %v2895
        %v5118 = vunpack.c.l.b16 %v2896
        %v5119 = vunpack.c.h.b16 %v2896
        %v5120 = vunpack.c.l.b16 %v2897
        %v5121 = vunpack.c.h.b16 %v2897
        %v5122 = vunpack.c.l.b16 %v2898
        %v5123 = vunpack.c.h.b16 %v2898
        %v5124 = vpack.c.b16 %v5096, %v5092
        %v5125 = vpack.c.b16 %v5097, %v5093
        %v5126 = vpack.c.b16 %v5098, %v5094
        %v5127 = vpack.c.b16 %v5099, %v5095
        %v5128 = vpack.c.b16 %v5104, %v5100
        %v5129 = vpack.c.b16 %v5105, %v5101
        %v5130 = vpack.c.b16 %v5106, %v5102
        %v5131 = vpack.c.b16 %v5107, %v5103
        %v5132 = vpack.c.b16 %v5112, %v5108
        %v5133 = vpack.c.b16 %v5113, %v5109
        %v5134 = vpack.c.b16 %v5114, %v5110
        %v5135 = vpack.c.b16 %v5115, %v5111
        %v5136 = vpack.c.b16 %v5120, %v5116
        %v5137 = vpack.c.b16 %v5121, %v5117
        %v5138 = vpack.c.b16 %v5122, %v5118
        %v5139 = vpack.c.b16 %v5123, %v5119
        %v5157 = vsel %vm900, %v2672, 0
        %5159 = vmatprep.subr.bf16.mxu0 %v5125
        %5160 = vmatpush1.bf16.msra.mxu0 %v5124
        %5161 = vmatprep.subr.bf16.mxu0 %v5129
        %5162 = vmatpush1.bf16.msra.mxu0 %v5128
        %5163 = vmatprep.subr.bf16.mxu0 %v5133
        %5164 = vmatpush1.bf16.msra.mxu0 %v5132
        %5165 = vmatprep.subr.bf16.mxu0 %v5137
        %5166 = vmatpush1.bf16.msra.mxu0 %v5136
        %5167 = vmatprep.subr.bf16.mxu0 0
        %5168 = vmatpush1.bf16.msra.mxu0 0
        %5169 = vmatprep.subr.bf16.mxu0 0
        %5170 = vmatpush1.bf16.msra.mxu0 0
        %5171 = vmatprep.subr.bf16.mxu0 0
        %5172 = vmatpush1.bf16.msra.mxu0 0
        %5173 = vmatprep.subr.bf16.mxu0 0
        %5174 = vmatpush1.bf16.msra.mxu0 0
        %5175 = vmatprep.subr.bf16.mxu0 0
        %5176 = vmatpush1.bf16.msra.mxu0 0
        %5177 = vmatprep.subr.bf16.mxu0 0
        %5178 = vmatpush1.bf16.msra.mxu0 0
        %5179 = vmatprep.subr.bf16.mxu0 0
        %5180 = vmatpush1.bf16.msra.mxu0 0
        %5181 = vmatprep.subr.bf16.mxu0 0
        %5182 = vmatpush1.bf16.msra.mxu0 0
        %5183 = vmatprep.subr.bf16.mxu0 0
        %5184 = vmatpush1.bf16.msra.mxu0 0
        %5185 = vmatprep.subr.bf16.mxu0 0
        %5186 = vmatpush1.bf16.msra.mxu0 0
        %5187 = vmatprep.subr.bf16.mxu0 0
        %5188 = vmatpush1.bf16.msra.mxu0 0
        %5189 = vmatprep.subr.bf16.mxu0 0
        %5190 = vmatpush1.bf16.msra.mxu0 0
        %5191 = vmatprep.mubr.bf16.mxu0 0
        %5192 = vmatmul.mubr.bf16.gmra.mrb[0].mxu0 %v5157
        %v5193 = vpop.f32.mrb[0].mxu0
        %v5194 = vadd.f32 0.0, %v5193
        %v5195 = vpop.f32.mrb[0].mxu0
        %v5196 = vadd.f32 0.0, %v5195
        %v5197 = vpop.f32.mrb[0].mxu0
        %v5198 = vpop.f32.mrb[0].mxu0
        %5199 = vdwg.mxu0
        %5200 = vmatprep.subr.bf16.mxu0 %v5127
        %5201 = vmatpush1.bf16.msra.mxu0 %v5126
        %5202 = vmatprep.subr.bf16.mxu0 %v5131
        %5203 = vmatpush1.bf16.msra.mxu0 %v5130
        %5204 = vmatprep.subr.bf16.mxu0 %v5135
        %5205 = vmatpush1.bf16.msra.mxu0 %v5134
        %5206 = vmatprep.subr.bf16.mxu0 %v5139
        %5207 = vmatpush1.bf16.msra.mxu0 %v5138
        %5208 = vmatprep.subr.bf16.mxu0 0
        %5209 = vmatpush1.bf16.msra.mxu0 0
        %5210 = vmatprep.subr.bf16.mxu0 0
        %5211 = vmatpush1.bf16.msra.mxu0 0
        %5212 = vmatprep.subr.bf16.mxu0 0
        %5213 = vmatpush1.bf16.msra.mxu0 0
        %5214 = vmatprep.subr.bf16.mxu0 0
        %5215 = vmatpush1.bf16.msra.mxu0 0
        %5216 = vmatprep.subr.bf16.mxu0 0
        %5217 = vmatpush1.bf16.msra.mxu0 0
        %5218 = vmatprep.subr.bf16.mxu0 0
        %5219 = vmatpush1.bf16.msra.mxu0 0
        %5220 = vmatprep.subr.bf16.mxu0 0
        %5221 = vmatpush1.bf16.msra.mxu0 0
        %5222 = vmatprep.subr.bf16.mxu0 0
        %5223 = vmatpush1.bf16.msra.mxu0 0
        %5224 = vmatprep.subr.bf16.mxu0 0
        %5225 = vmatpush1.bf16.msra.mxu0 0
        %5226 = vmatprep.subr.bf16.mxu0 0
        %5227 = vmatpush1.bf16.msra.mxu0 0
        %5228 = vmatprep.subr.bf16.mxu0 0
        %5229 = vmatpush1.bf16.msra.mxu0 0
        %5230 = vmatprep.subr.bf16.mxu0 0
        %5231 = vmatpush1.bf16.msra.mxu0 0
        %5232 = vmatprep.mubr.bf16.mxu0 0
        %5233 = vmatmul.mubr.bf16.gmra.mrb[0].mxu0 %v5157
        %v5234 = vpop.f32.mrb[0].mxu0
        %v5235 = vadd.f32 0.0, %v5234
        %v5236 = vpop.f32.mrb[0].mxu0
        %v5237 = vadd.f32 0.0, %v5236
        %v5238 = vpop.f32.mrb[0].mxu0
        %v5239 = vpop.f32.mrb[0].mxu0
        %5240 = vdwg.mxu0
        %v5257 = vunpack.c.l.b16 %v2899
        %v5258 = vunpack.c.h.b16 %v2899
        %v5259 = vunpack.c.l.b16 %v2900
        %v5260 = vunpack.c.h.b16 %v2900
        %v5261 = vunpack.c.l.b16 %v2901
        %v5262 = vunpack.c.h.b16 %v2901
        %v5263 = vunpack.c.l.b16 %v2902
        %v5264 = vunpack.c.h.b16 %v2902
        %v5265 = vunpack.c.l.b16 %v2903
        %v5266 = vunpack.c.h.b16 %v2903
        %v5267 = vunpack.c.l.b16 %v2904
        %v5268 = vunpack.c.h.b16 %v2904
        %v5269 = vunpack.c.l.b16 %v2905
        %v5270 = vunpack.c.h.b16 %v2905
        %v5271 = vunpack.c.l.b16 %v2906
        %v5272 = vunpack.c.h.b16 %v2906
        %v5273 = vunpack.c.l.b16 %v2907
        %v5274 = vunpack.c.h.b16 %v2907
        %v5275 = vunpack.c.l.b16 %v2908
        %v5276 = vunpack.c.h.b16 %v2908
        %v5277 = vunpack.c.l.b16 %v2909
        %v5278 = vunpack.c.h.b16 %v2909
        %v5279 = vunpack.c.l.b16 %v2910
        %v5280 = vunpack.c.h.b16 %v2910
        %v5281 = vunpack.c.l.b16 %v2911
        %v5282 = vunpack.c.h.b16 %v2911
        %v5283 = vunpack.c.l.b16 %v2912
        %v5284 = vunpack.c.h.b16 %v2912
        %v5285 = vunpack.c.l.b16 %v2913
        %v5286 = vunpack.c.h.b16 %v2913
        %v5287 = vunpack.c.l.b16 %v2914
        %v5288 = vunpack.c.h.b16 %v2914
        %v5289 = vpack.c.b16 %v5261, %v5257
        %v5290 = vpack.c.b16 %v5262, %v5258
        %v5291 = vpack.c.b16 %v5263, %v5259
        %v5292 = vpack.c.b16 %v5264, %v5260
        %v5293 = vpack.c.b16 %v5269, %v5265
        %v5294 = vpack.c.b16 %v5270, %v5266
        %v5295 = vpack.c.b16 %v5271, %v5267
        %v5296 = vpack.c.b16 %v5272, %v5268
        %v5297 = vpack.c.b16 %v5277, %v5273
        %v5298 = vpack.c.b16 %v5278, %v5274
        %v5299 = vpack.c.b16 %v5279, %v5275
        %v5300 = vpack.c.b16 %v5280, %v5276
        %v5301 = vpack.c.b16 %v5285, %v5281
        %v5302 = vpack.c.b16 %v5286, %v5282
        %v5303 = vpack.c.b16 %v5287, %v5283
        %v5304 = vpack.c.b16 %v5288, %v5284
        %v5322 = vsel %vm900, %v2673, 0
        %5324 = vmatprep.subr.bf16.mxu0 %v5290
        %5325 = vmatpush1.bf16.msra.mxu0 %v5289
        %5326 = vmatprep.subr.bf16.mxu0 %v5294
        %5327 = vmatpush1.bf16.msra.mxu0 %v5293
        %5328 = vmatprep.subr.bf16.mxu0 %v5298
        %5329 = vmatpush1.bf16.msra.mxu0 %v5297
        %5330 = vmatprep.subr.bf16.mxu0 %v5302
        %5331 = vmatpush1.bf16.msra.mxu0 %v5301
        %5332 = vmatprep.subr.bf16.mxu0 0
        %5333 = vmatpush1.bf16.msra.mxu0 0
        %5334 = vmatprep.subr.bf16.mxu0 0
        %5335 = vmatpush1.bf16.msra.mxu0 0
        %5336 = vmatprep.subr.bf16.mxu0 0
        %5337 = vmatpush1.bf16.msra.mxu0 0
        %5338 = vmatprep.subr.bf16.mxu0 0
        %5339 = vmatpush1.bf16.msra.mxu0 0
        %5340 = vmatprep.subr.bf16.mxu0 0
        %5341 = vmatpush1.bf16.msra.mxu0 0
        %5342 = vmatprep.subr.bf16.mxu0 0
        %5343 = vmatpush1.bf16.msra.mxu0 0
        %5344 = vmatprep.subr.bf16.mxu0 0
        %5345 = vmatpush1.bf16.msra.mxu0 0
        %5346 = vmatprep.subr.bf16.mxu0 0
        %5347 = vmatpush1.bf16.msra.mxu0 0
        %5348 = vmatprep.subr.bf16.mxu0 0
        %5349 = vmatpush1.bf16.msra.mxu0 0
        %5350 = vmatprep.subr.bf16.mxu0 0
        %5351 = vmatpush1.bf16.msra.mxu0 0
        %5352 = vmatprep.subr.bf16.mxu0 0
        %5353 = vmatpush1.bf16.msra.mxu0 0
        %5354 = vmatprep.subr.bf16.mxu0 0
        %5355 = vmatpush1.bf16.msra.mxu0 0
        %5356 = vmatprep.mubr.bf16.mxu0 0
        %5357 = vmatmul.mubr.bf16.gmra.mrb[0].mxu0 %v5322
        %v5358 = vpop.f32.mrb[0].mxu0
        %v5359 = vadd.f32 0.0, %v5358
        %v5360 = vpop.f32.mrb[0].mxu0
        %v5361 = vadd.f32 0.0, %v5360
        %v5362 = vpop.f32.mrb[0].mxu0
        %v5363 = vpop.f32.mrb[0].mxu0
        %5364 = vdwg.mxu0
        %5365 = vmatprep.subr.bf16.mxu0 %v5292
        %5366 = vmatpush1.bf16.msra.mxu0 %v5291
        %5367 = vmatprep.subr.bf16.mxu0 %v5296
        %5368 = vmatpush1.bf16.msra.mxu0 %v5295
        %5369 = vmatprep.subr.bf16.mxu0 %v5300
        %5370 = vmatpush1.bf16.msra.mxu0 %v5299
        %5371 = vmatprep.subr.bf16.mxu0 %v5304
        %5372 = vmatpush1.bf16.msra.mxu0 %v5303
        %5373 = vmatprep.subr.bf16.mxu0 0
        %5374 = vmatpush1.bf16.msra.mxu0 0
        %5375 = vmatprep.subr.bf16.mxu0 0
        %5376 = vmatpush1.bf16.msra.mxu0 0
        %5377 = vmatprep.subr.bf16.mxu0 0
        %5378 = vmatpush1.bf16.msra.mxu0 0
        %5379 = vmatprep.subr.bf16.mxu0 0
        %5380 = vmatpush1.bf16.msra.mxu0 0
        %5381 = vmatprep.subr.bf16.mxu0 0
        %5382 = vmatpush1.bf16.msra.mxu0 0
        %5383 = vmatprep.subr.bf16.mxu0 0
        %5384 = vmatpush1.bf16.msra.mxu0 0
        %5385 = vmatprep.subr.bf16.mxu0 0
        %5386 = vmatpush1.bf16.msra.mxu0 0
        %5387 = vmatprep.subr.bf16.mxu0 0
        %5388 = vmatpush1.bf16.msra.mxu0 0
        %5389 = vmatprep.subr.bf16.mxu0 0
        %5390 = vmatpush1.bf16.msra.mxu0 0
        %5391 = vmatprep.subr.bf16.mxu0 0
        %5392 = vmatpush1.bf16.msra.mxu0 0
        %5393 = vmatprep.subr.bf16.mxu0 0
        %5394 = vmatpush1.bf16.msra.mxu0 0
        %5395 = vmatprep.subr.bf16.mxu0 0
        %5396 = vmatpush1.bf16.msra.mxu0 0
        %5397 = vmatprep.mubr.bf16.mxu0 0
        %5398 = vmatmul.mubr.bf16.gmra.mrb[0].mxu0 %v5322
        %v5399 = vpop.f32.mrb[0].mxu0
        %v5400 = vadd.f32 0.0, %v5399
        %v5401 = vpop.f32.mrb[0].mxu0
        %v5402 = vadd.f32 0.0, %v5401
        %v5403 = vpop.f32.mrb[0].mxu0
        %v5404 = vpop.f32.mrb[0].mxu0
        %5405 = vdwg.mxu0
        %v5422 = vunpack.c.l.b16 %v2915
        %v5423 = vunpack.c.h.b16 %v2915
        %v5424 = vunpack.c.l.b16 %v2916
        %v5425 = vunpack.c.h.b16 %v2916
        %v5426 = vunpack.c.l.b16 %v2917
        %v5427 = vunpack.c.h.b16 %v2917
        %v5428 = vunpack.c.l.b16 %v2918
        %v5429 = vunpack.c.h.b16 %v2918
        %v5430 = vunpack.c.l.b16 %v2919
        %v5431 = vunpack.c.h.b16 %v2919
        %v5432 = vunpack.c.l.b16 %v2920
        %v5433 = vunpack.c.h.b16 %v2920
        %v5434 = vunpack.c.l.b16 %v2921
        %v5435 = vunpack.c.h.b16 %v2921
        %v5436 = vunpack.c.l.b16 %v2922
        %v5437 = vunpack.c.h.b16 %v2922
        %v5438 = vunpack.c.l.b16 %v2923
        %v5439 = vunpack.c.h.b16 %v2923
        %v5440 = vunpack.c.l.b16 %v2924
        %v5441 = vunpack.c.h.b16 %v2924
        %v5442 = vunpack.c.l.b16 %v2925
        %v5443 = vunpack.c.h.b16 %v2925
        %v5444 = vunpack.c.l.b16 %v2926
        %v5445 = vunpack.c.h.b16 %v2926
        %v5446 = vunpack.c.l.b16 %v2927
        %v5447 = vunpack.c.h.b16 %v2927
        %v5448 = vunpack.c.l.b16 %v2928
        %v5449 = vunpack.c.h.b16 %v2928
        %v5450 = vunpack.c.l.b16 %v2929
        %v5451 = vunpack.c.h.b16 %v2929
        %v5452 = vunpack.c.l.b16 %v2930
        %v5453 = vunpack.c.h.b16 %v2930
        %v5454 = vpack.c.b16 %v5426, %v5422
        %v5455 = vpack.c.b16 %v5427, %v5423
        %v5456 = vpack.c.b16 %v5428, %v5424
        %v5457 = vpack.c.b16 %v5429, %v5425
        %v5458 = vpack.c.b16 %v5434, %v5430
        %v5459 = vpack.c.b16 %v5435, %v5431
        %v5460 = vpack.c.b16 %v5436, %v5432
        %v5461 = vpack.c.b16 %v5437, %v5433
        %v5462 = vpack.c.b16 %v5442, %v5438
        %v5463 = vpack.c.b16 %v5443, %v5439
        %v5464 = vpack.c.b16 %v5444, %v5440
        %v5465 = vpack.c.b16 %v5445, %v5441
        %v5466 = vpack.c.b16 %v5450, %v5446
        %v5467 = vpack.c.b16 %v5451, %v5447
        %v5468 = vpack.c.b16 %v5452, %v5448
        %v5469 = vpack.c.b16 %v5453, %v5449
        %v5487 = vsel %vm900, %v2674, 0
        %5489 = vmatprep.subr.bf16.mxu0 %v5455
        %5490 = vmatpush1.bf16.msra.mxu0 %v5454
        %5491 = vmatprep.subr.bf16.mxu0 %v5459
        %5492 = vmatpush1.bf16.msra.mxu0 %v5458
        %5493 = vmatprep.subr.bf16.mxu0 %v5463
        %5494 = vmatpush1.bf16.msra.mxu0 %v5462
        %5495 = vmatprep.subr.bf16.mxu0 %v5467
        %5496 = vmatpush1.bf16.msra.mxu0 %v5466
        %5497 = vmatprep.subr.bf16.mxu0 0
        %5498 = vmatpush1.bf16.msra.mxu0 0
        %5499 = vmatprep.subr.bf16.mxu0 0
        %5500 = vmatpush1.bf16.msra.mxu0 0
        %5501 = vmatprep.subr.bf16.mxu0 0
        %5502 = vmatpush1.bf16.msra.mxu0 0
        %5503 = vmatprep.subr.bf16.mxu0 0
        %5504 = vmatpush1.bf16.msra.mxu0 0
        %5505 = vmatprep.subr.bf16.mxu0 0
        %5506 = vmatpush1.bf16.msra.mxu0 0
        %5507 = vmatprep.subr.bf16.mxu0 0
        %5508 = vmatpush1.bf16.msra.mxu0 0
        %5509 = vmatprep.subr.bf16.mxu0 0
        %5510 = vmatpush1.bf16.msra.mxu0 0
        %5511 = vmatprep.subr.bf16.mxu0 0
        %5512 = vmatpush1.bf16.msra.mxu0 0
        %5513 = vmatprep.subr.bf16.mxu0 0
        %5514 = vmatpush1.bf16.msra.mxu0 0
        %5515 = vmatprep.subr.bf16.mxu0 0
        %5516 = vmatpush1.bf16.msra.mxu0 0
        %5517 = vmatprep.subr.bf16.mxu0 0
        %5518 = vmatpush1.bf16.msra.mxu0 0
        %5519 = vmatprep.subr.bf16.mxu0 0
        %5520 = vmatpush1.bf16.msra.mxu0 0
        %5521 = vmatprep.mubr.bf16.mxu0 0
        %5522 = vmatmul.mubr.bf16.gmra.mrb[0].mxu0 %v5487
        %v5523 = vpop.f32.mrb[0].mxu0
        %v5524 = vadd.f32 0.0, %v5523
        %v5525 = vpop.f32.mrb[0].mxu0
        %v5526 = vadd.f32 0.0, %v5525
        %v5527 = vpop.f32.mrb[0].mxu0
        %v5528 = vpop.f32.mrb[0].mxu0
        %5529 = vdwg.mxu0
        %5530 = vmatprep.subr.bf16.mxu0 %v5457
        %5531 = vmatpush1.bf16.msra.mxu0 %v5456
        %5532 = vmatprep.subr.bf16.mxu0 %v5461
        %5533 = vmatpush1.bf16.msra.mxu0 %v5460
        %5534 = vmatprep.subr.bf16.mxu0 %v5465
        %5535 = vmatpush1.bf16.msra.mxu0 %v5464
        %5536 = vmatprep.subr.bf16.mxu0 %v5469
        %5537 = vmatpush1.bf16.msra.mxu0 %v5468
        %5538 = vmatprep.subr.bf16.mxu0 0
        %5539 = vmatpush1.bf16.msra.mxu0 0
        %5540 = vmatprep.subr.bf16.mxu0 0
        %5541 = vmatpush1.bf16.msra.mxu0 0
        %5542 = vmatprep.subr.bf16.mxu0 0
        %5543 = vmatpush1.bf16.msra.mxu0 0
        %5544 = vmatprep.subr.bf16.mxu0 0
        %5545 = vmatpush1.bf16.msra.mxu0 0
        %5546 = vmatprep.subr.bf16.mxu0 0
        %5547 = vmatpush1.bf16.msra.mxu0 0
        %5548 = vmatprep.subr.bf16.mxu0 0
        %5549 = vmatpush1.bf16.msra.mxu0 0
        %5550 = vmatprep.subr.bf16.mxu0 0
        %5551 = vmatpush1.bf16.msra.mxu0 0
        %5552 = vmatprep.subr.bf16.mxu0 0
        %5553 = vmatpush1.bf16.msra.mxu0 0
        %5554 = vmatprep.subr.bf16.mxu0 0
        %5555 = vmatpush1.bf16.msra.mxu0 0
        %5556 = vmatprep.subr.bf16.mxu0 0
        %5557 = vmatpush1.bf16.msra.mxu0 0
        %5558 = vmatprep.subr.bf16.mxu0 0
        %5559 = vmatpush1.bf16.msra.mxu0 0
        %5560 = vmatprep.subr.bf16.mxu0 0
        %5561 = vmatpush1.bf16.msra.mxu0 0
        %5562 = vmatprep.mubr.bf16.mxu0 0
        %5563 = vmatmul.mubr.bf16.gmra.mrb[0].mxu0 %v5487
        %v5564 = vpop.f32.mrb[0].mxu0
        %v5565 = vadd.f32 0.0, %v5564
        %v5566 = vpop.f32.mrb[0].mxu0
        %v5567 = vadd.f32 0.0, %v5566
        %v5568 = vpop.f32.mrb[0].mxu0
        %v5569 = vpop.f32.mrb[0].mxu0
        %5570 = vdwg.mxu0
        %v5571 = vadd.f32 %v3049, %v3214
        %v5572 = vadd.f32 %v5571, %v3379
        %v5573 = vadd.f32 %v5572, %v3544
        %v5574 = vadd.f32 %v5573, %v3709
        %v5575 = vadd.f32 %v5574, %v3874
        %v5576 = vadd.f32 %v5575, %v4039
        %v5577 = vadd.f32 %v5576, %v4204
        %v5578 = vadd.f32 %v5577, %v4369
        %v5579 = vadd.f32 %v5578, %v4534
        %v5580 = vadd.f32 %v5579, %v4699
        %v5581 = vadd.f32 %v5580, %v4864
        %v5582 = vadd.f32 %v5581, %v5029
        %v5583 = vadd.f32 %v5582, %v5194
        %v5584 = vadd.f32 %v5583, %v5359
        %v5585 = vadd.f32 %v5584, %v5524
        %v5586 = vadd.f32 %v3051, %v3216
        %v5587 = vadd.f32 %v5586, %v3381
        %v5588 = vadd.f32 %v5587, %v3546
        %v5589 = vadd.f32 %v5588, %v3711
        %v5590 = vadd.f32 %v5589, %v3876
        %v5591 = vadd.f32 %v5590, %v4041
        %v5592 = vadd.f32 %v5591, %v4206
        %v5593 = vadd.f32 %v5592, %v4371
        %v5594 = vadd.f32 %v5593, %v4536
        %v5595 = vadd.f32 %v5594, %v4701
        %v5596 = vadd.f32 %v5595, %v4866
        %v5597 = vadd.f32 %v5596, %v5031
        %v5598 = vadd.f32 %v5597, %v5196
        %v5599 = vadd.f32 %v5598, %v5361
        %v5600 = vadd.f32 %v5599, %v5526
        %v5601 = vadd.f32 %v3090, %v3255
        %v5602 = vadd.f32 %v5601, %v3420
        %v5603 = vadd.f32 %v5602, %v3585
        %v5604 = vadd.f32 %v5603, %v3750
        %v5605 = vadd.f32 %v5604, %v3915
        %v5606 = vadd.f32 %v5605, %v4080
        %v5607 = vadd.f32 %v5606, %v4245
        %v5608 = vadd.f32 %v5607, %v4410
        %v5609 = vadd.f32 %v5608, %v4575
        %v5610 = vadd.f32 %v5609, %v4740
        %v5611 = vadd.f32 %v5610, %v4905
        %v5612 = vadd.f32 %v5611, %v5070
        %v5613 = vadd.f32 %v5612, %v5235
        %v5614 = vadd.f32 %v5613, %v5400
        %v5615 = vadd.f32 %v5614, %v5565
        %v5616 = vadd.f32 %v3092, %v3257
        %v5617 = vadd.f32 %v5616, %v3422
        %v5618 = vadd.f32 %v5617, %v3587
        %v5619 = vadd.f32 %v5618, %v3752
        %v5620 = vadd.f32 %v5619, %v3917
        %v5621 = vadd.f32 %v5620, %v4082
        %v5622 = vadd.f32 %v5621, %v4247
        %v5623 = vadd.f32 %v5622, %v4412
        %v5624 = vadd.f32 %v5623, %v4577
        %v5625 = vadd.f32 %v5624, %v4742
        %v5626 = vadd.f32 %v5625, %v4907
        %v5627 = vadd.f32 %v5626, %v5072
        %v5628 = vadd.f32 %v5627, %v5237
        %v5629 = vadd.f32 %v5628, %v5402
        %v5630 = vadd.f32 %v5629, %v5567
        %v5631 = vld [vmem:[%s7] sm:$0xf]
        %v5633 = vlaneseq
        %v5634 = vshrl.u32 %v5633, 7
        %v5635 = vsub.s32 0, %v5634
        %v5636 = vrot.slane %v5631, %v5635
        %v5637 = vlaneseq
        %v5638 = vshrl.u32 %v5637, 7
        %v5639 = vsub.s32 1, %v5638
        %v5640 = vrot.slane %v5631, %v5639
        %v5641 = vlaneseq
        %v5642 = vshrl.u32 %v5641, 7
        %v5643 = vsub.s32 2, %v5642
        %v5644 = vrot.slane %v5631, %v5643
        %v5645 = vlaneseq
        %v5646 = vshrl.u32 %v5645, 7
        %v5647 = vsub.s32 3, %v5646
        %v5648 = vrot.slane %v5631, %v5647
        %v5653 = vadd.f32 %v5585, %v5636
        %v5654 = vadd.f32 %v5600, %v5640
        %v5655 = vadd.f32 %v5615, %v5644
        %v5656 = vadd.f32 %v5630, %v5648
        %v5657 = vmax.f32 %v5653, 0.0
        %v5658 = vmax.f32 %v5654, 0.0
        %v5659 = vmax.f32 %v5655, 0.0
        %v5660 = vmax.f32 %v5656, 0.0
        %v5661 = vld [vmem:[%s8] sm:$0xf]
        %v5663 = vlaneseq
        %v5664 = vshrl.u32 %v5663, 7
        %v5665 = vsub.s32 0, %v5664
        %v5666 = vrot.slane %v5661, %v5665
        %v5667 = vlaneseq
        %v5668 = vshrl.u32 %v5667, 7
        %v5669 = vsub.s32 1, %v5668
        %v5670 = vrot.slane %v5661, %v5669
        %v5671 = vlaneseq
        %v5672 = vshrl.u32 %v5671, 7
        %v5673 = vsub.s32 2, %v5672
        %v5674 = vrot.slane %v5661, %v5673
        %v5675 = vlaneseq
        %v5676 = vshrl.u32 %v5675, 7
        %v5677 = vsub.s32 3, %v5676
        %v5678 = vrot.slane %v5661, %v5677
        %v5683 = vmul.f32 %v5657, %v5666
        %v5684 = vmul.f32 %v5658, %v5670
        %v5685 = vmul.f32 %v5659, %v5674
        %v5686 = vmul.f32 %v5660, %v5678
        %v5687 = vadd.f32 %v5683, %v5684
        %v5688 = vadd.f32 %v5687, %v5685
        %v5689 = vadd.f32 %v5688, %v5686
        %5690 = vadd.xlane.f32.xlu0 %v5689
        %v5691 = vpop.xlane.xlu0 %5690
        %v5692 = vld [vmem:[#allocation2] sm:$0x1]
        %v5694 = vlaneseq
        %v5695 = vshrl.u32 %v5694, 7
        %v5696 = vsub.s32 0, %v5695
        %v5697 = vrot.slane %v5692, %v5696
        %v5699 = vadd.f32 %v5691, %v5697
        %vm5700 = vcmask 7168
        %5701 = vst.msk [vmem:[%s475] sm:$0xff] %vm5700, %v5699
        %p5702 = scmp.lt.s32.totalorder %s24, 1
        %s5703 = scalar_select %p5702, %s24, 1
        %s5704 = smul.addr %s5703, 8
        %s5705 = scalar_lea.vmem %s10, %s5704
        // Predicated region
        $region106: #{tpu_custom_call.1} parent=96 // pred_check
          %p5706 = pneg %p257
        $region107: #{tpu_custom_call.1} parent=96 // pred_check_branch
          %5708 = sbr.rel (%p5706) target = $region109
        $region108: #{tpu_custom_call.1} parent=96 // pred_region
          _
        $region109: #{tpu_custom_call.1} parent=96 // pred_fallthru
          _
      $region97: #{tpu_custom_call.1} parent=5 // pred_fallthru
        _
      %p5709 = scmp.le.s32.totalorder 2, %s19
      // Predicated region
      $region110: #{tpu_custom_call.1} parent=5 // pred_check
        %p5710 = pneg %p5709
      $region111: #{tpu_custom_call.1} parent=5 // pred_check_branch
        %5712 = sbr.rel (%p5710) target = $region113
      $region112: #{tpu_custom_call.1} parent=5 // pred_region
        %s5713 = ssub.s32 %s19, 2
        // Predicated region
        $region114: #{tpu_custom_call.1} parent=112 // pred_check
          %p5714 = pneg %p263
        $region115: #{tpu_custom_call.1} parent=112 // pred_check_branch
          %5716 = sbr.rel (%p5714) target = $region117
        $region116: #{tpu_custom_call.1} parent=112 // pred_region
          %p5717 = scmp.lt.s32.totalorder %s25, 1
          %s5718 = scalar_select %p5717, %s25, 1
          %s5719 = smul.addr %s5718, 8
          %s5720 = scalar_lea.vmem %s10, %s5719
        $region117: #{tpu_custom_call.1} parent=112 // pred_fallthru
          _
      $region113: #{tpu_custom_call.1} parent=5 // pred_fallthru
        _
    $region6: #{tpu_custom_call.1} parent=1 // loop_footer
      %s23 = sadd.s32 1, %s19
    $region7: #{tpu_custom_call.1} parent=1 // loop_footer_branch
      %18 = sbr.rel target = $region3
    $region8: #{tpu_custom_call.1} parent=1 // loop_exit
      _
    %5721 = vsyncpa [#allocation5], 1
    %s5722 = scalar_lea.sflag [#allocation5], 1
    %5723 = vsyncpa %s5722, 1

</llo_original>
